<compile_context>
chip_gen: v7x
topology: tpu7x:2x2x1
jax: 0.10.0
libtpu: 0.0.40
codegen_flags: <defaults>
</compile_context>

<pallas_src>
import functools

import jax
import jax.numpy as jnp
from jax.experimental import pallas as pl
from jax.experimental.pallas import tpu as pltpu


def _round_up(x, m):
    return (x + m - 1) // m * m


def _qkv_matmul_kernel(x_ref, w_ref, o_ref, acc_ref):
    """Grid = (N-tiles, M-tiles, K-tiles).  Accumulate over the K (last) axis."""
    @pl.when(pl.program_id(2) == 0)
    def _():
        acc_ref[...] = jnp.zeros_like(acc_ref)

    acc_ref[...] += jnp.dot(
        x_ref[...], w_ref[...], preferred_element_type=jnp.float32
    )

    @pl.when(pl.program_id(2) == pl.num_programs(2) - 1)
    def _():
        o_ref[...] = acc_ref[...].astype(o_ref.dtype)


def pack_qkv_weights(wq, wk, wv, *, dtype=jnp.bfloat16):
    """One-time weight packing (call at init, NOT per forward).

    wq/wk/wv: [H_out, H_in] (PyTorch Linear layout).  Returns [H_in, 3*H_out]
    such that  x @ W_packed == concat([x @ wq.T, x @ wk.T, x @ wv.T], axis=-1).
    """
    return jnp.concatenate([wq.T, wk.T, wv.T], axis=1).astype(dtype)


@functools.partial(
    jax.jit, static_argnames=("num_heads", "head_dim", "tn", "tk", "tm_max")
)
def qkv_proj(activation, w_packed, *, num_heads=32, head_dim=128,
             tn=1024, tk=2048, tm_max=1024):
    """activation: [B, S, H_in]; w_packed: [H_in, 3*H_out] from pack_qkv_weights.

    Returns (query, key, value), each [B, num_heads, S, head_dim].
    """
    B, S, H_in = activation.shape
    K_dim, N3 = w_packed.shape
    H_out = num_heads * head_dim
    assert K_dim == H_in, (K_dim, H_in)
    assert N3 == 3 * H_out, (N3, H_out)
    assert H_in % tk == 0, "H_in must be divisible by tk"
    assert N3 % tn == 0, "3*H_out must be divisible by tn"

    compute_dtype = w_packed.dtype
    out_dtype = activation.dtype

    # Sublane (second-to-last dim) granularity for the M axis.
    min_bytes = min(jnp.dtype(compute_dtype).itemsize, jnp.dtype(out_dtype).itemsize)
    sub = {4: 8, 2: 16, 1: 32}.get(min_bytes, 8)

    M = B * S
    if M <= 256:
        # Decode-sized: single (padded) M tile -> weights stream from HBM once.
        tm_eff = _round_up(M, sub)
        M_pad = tm_eff
    else:
        # Prefill-sized: pick the largest M tile (up to tm_max) dividing the
        # padded M, to minimize weight re-streaming across M tiles.
        M_pad = _round_up(M, 256)
        tm_eff = 256
        for cand in (1024, 512):
            if cand <= tm_max and M_pad % cand == 0:
                tm_eff = cand
                break
        tm_eff = min(tm_eff, tm_max)

    x2d = activation.reshape(M, H_in).astype(compute_dtype)
    if M_pad != M:
        x2d = jnp.pad(x2d, ((0, M_pad - M), (0, 0)))

    num_n = N3 // tn
    num_m = M_pad // tm_eff
    num_k = H_in // tk
    grid = (num_n, num_m, num_k)

    out = pl.pallas_call(
        _qkv_matmul_kernel,
        out_shape=jax.ShapeDtypeStruct((M_pad, N3), out_dtype),
        grid_spec=pltpu.PrefetchScalarGridSpec(
            num_scalar_prefetch=0,
            grid=grid,
            in_specs=[
                # activations: [tm, tk] tile, indexed by (M-tile, K-tile)
                pl.BlockSpec((tm_eff, tk), lambda nj, mi, kk: (mi, kk)),
                # packed weights: [tk, tn] tile, indexed by (K-tile, N-tile)
                pl.BlockSpec((tk, tn), lambda nj, mi, kk: (kk, nj)),
            ],
            out_specs=pl.BlockSpec((tm_eff, tn), lambda nj, mi, kk: (mi, nj)),
            scratch_shapes=[pltpu.VMEM((tm_eff, tn), jnp.float32)],
        ),
        compiler_params=pltpu.CompilerParams(
            dimension_semantics=("parallel", "parallel", "arbitrary"),
            vmem_limit_bytes=48 * 1024 * 1024,
        ),
    )(x2d, w_packed)

    # [M, 3*H_out] -> [B, S, 3, nh, hd] -> [3, B, nh, S, hd]
    # TODO(synk): for prefill, fuse this transpose into the downstream consumer
    # (attention) to avoid an extra HBM round trip on the QKV output.
    out = out[:M].reshape(B, S, 3, num_heads, head_dim).transpose(2, 0, 3, 1, 4)
    return out[0], out[1], out[2]


def _reference(activation, wq, wk, wv, num_heads, head_dim):
    B, S, _ = activation.shape
    x = activation.astype(jnp.float32)

    def proj(w):
        y = jnp.einsum("bsk,nk->bsn", x, w.astype(jnp.float32))
        return y.reshape(B, S, num_heads, head_dim).transpose(0, 2, 1, 3)

    return proj(wq), proj(wk), proj(wv)


if __name__ == "__main__":
    # Module hardcodes hidden=4096, 32 heads x 128; small batch/seq for the demo.
    B, S, H = 2, 8, 4096
    NUM_HEADS, HEAD_DIM = 32, 128

    key = jax.random.PRNGKey(0)
    k_x, k_q, k_k, k_v = jax.random.split(key, 4)
    scale = 1.0 / (H ** 0.5)
    activation = jax.random.normal(k_x, (B, S, H), dtype=jnp.float32).astype(jnp.bfloat16)
    wq = (jax.random.normal(k_q, (H, H), dtype=jnp.float32) * scale).astype(jnp.bfloat16)
    wk = (jax.random.normal(k_k, (H, H), dtype=jnp.float32) * scale).astype(jnp.bfloat16)
    wv = (jax.random.normal(k_v, (H, H), dtype=jnp.float32) * scale).astype(jnp.bfloat16)

    # One-time packing (init-time in a real model) — NOT in the per-call hot path.
    w_packed = pack_qkv_weights(wq, wk, wv, dtype=jnp.bfloat16)
    jax.block_until_ready(w_packed)

    q, k, v = qkv_proj(activation, w_packed, num_heads=NUM_HEADS, head_dim=HEAD_DIM)
    jax.block_until_ready((q, k, v))

    assert q.shape == (B, NUM_HEADS, S, HEAD_DIM), q.shape
    assert k.shape == (B, NUM_HEADS, S, HEAD_DIM), k.shape
    assert v.shape == (B, NUM_HEADS, S, HEAD_DIM), v.shape

    q_ref, k_ref, v_ref = _reference(activation, wq, wk, wv, NUM_HEADS, HEAD_DIM)
    for got, ref in ((q, q_ref), (k, k_ref), (v, v_ref)):
        got = got.astype(jnp.float32)
        rel = jnp.max(jnp.abs(got - ref)) / jnp.max(jnp.abs(ref))
        assert rel < 2e-2, f"relative err {rel}"

    print("KERNEL_OK")
</pallas_src>

<mosaic_0001>
module attributes {stable_mosaic.version = 11 : i64} {
  func.func @_qkv_matmul_kernel(%arg0: i32, %arg1: i32, %arg2: i32, %arg3: memref<16x2048xbf16, #tpu.memory_space<vmem>>, %arg4: memref<2048x1024xbf16, #tpu.memory_space<vmem>>, %arg5: memref<16x1024xbf16, #tpu.memory_space<vmem>>, %arg6: memref<16x1024xf32, #tpu.memory_space<vmem>>) attributes {dimension_semantics = [#tpu.dimension_semantics<parallel>, #tpu.dimension_semantics<parallel>, #tpu.dimension_semantics<arbitrary>], iteration_bounds = array<i64: 12, 1, 2>, scalar_prefetch = 0 : i64, scratch_operands = 1 : i64, tpu.core_type = #tpu.core_type<tc>, window_params = [{transform_indices = @transform_0, window_bounds = array<i64: 16, 2048>}, {transform_indices = @transform_1, window_bounds = array<i64: 2048, 1024>}, {transform_indices = @transform_2, window_bounds = array<i64: 16, 1024>}]} {
    %c0_i32 = arith.constant 0 : i32
    %0 = arith.cmpi eq, %arg2, %c0_i32 : i32
    %1 = arith.extui %0 : i1 to i32
    %c0_i32_0 = arith.constant 0 : i32
    %2 = arith.cmpi ne, %1, %c0_i32_0 : i32
    scf.if %2 {
      %cst_9 = arith.constant 0.000000e+00 : f32
      %12 = vector.broadcast %cst_9 : f32 to vector<16x1024xf32>
      %c0_10 = arith.constant 0 : index
      %c0_11 = arith.constant 0 : index
      %13 = vector.load %arg6[%c0_10, %c0_11] : memref<16x1024xf32, #tpu.memory_space<vmem>>, vector<16x1024xf32>
      tpu.vector_store %arg6[%c0_10, %c0_11], %12 {strides = array<i32>} : memref<16x1024xf32, #tpu.memory_space<vmem>>, vector<16x1024xf32>,
    } else {
    }
    %c0 = arith.constant 0 : index
    %c0_1 = arith.constant 0 : index
    %3 = vector.load %arg6[%c0, %c0_1] : memref<16x1024xf32, #tpu.memory_space<vmem>>, vector<16x1024xf32>
    %c0_2 = arith.constant 0 : index
    %c0_3 = arith.constant 0 : index
    %4 = vector.load %arg3[%c0_2, %c0_3] : memref<16x2048xbf16, #tpu.memory_space<vmem>>, vector<16x2048xbf16>
    %c0_4 = arith.constant 0 : index
    %c0_5 = arith.constant 0 : index
    %5 = vector.load %arg4[%c0_4, %c0_5] : memref<2048x1024xbf16, #tpu.memory_space<vmem>>, vector<2048x1024xbf16>
    %cst = arith.constant dense<0.000000e+00> : vector<16x1024xf32>
    %6 = tpu.matmul %4, %5, %cst {dimension_numbers = #tpu.dot_dimension_numbers<[1], [0], [0], [1], [0, 0, 1, 1], [], []>} : vector<16x2048xbf16>, vector<2048x1024xbf16>, vector<16x1024xf32> -> vector<16x1024xf32>
    %7 = arith.addf %3, %6 : vector<16x1024xf32>
    %c0_6 = arith.constant 0 : index
    %c0_7 = arith.constant 0 : index
    %8 = vector.load %arg6[%c0_6, %c0_7] : memref<16x1024xf32, #tpu.memory_space<vmem>>, vector<16x1024xf32>
    tpu.vector_store %arg6[%c0_6, %c0_7], %7 {strides = array<i32>} : memref<16x1024xf32, #tpu.memory_space<vmem>>, vector<16x1024xf32>,
    %c1_i32 = arith.constant 1 : i32
    %9 = arith.cmpi eq, %arg2, %c1_i32 : i32
    %10 = arith.extui %9 : i1 to i32
    %c0_i32_8 = arith.constant 0 : i32
    %11 = arith.cmpi ne, %10, %c0_i32_8 : i32
    scf.if %11 {
      %c0_9 = arith.constant 0 : index
      %c0_10 = arith.constant 0 : index
      %12 = vector.load %arg6[%c0_9, %c0_10] : memref<16x1024xf32, #tpu.memory_space<vmem>>, vector<16x1024xf32>
      %13 = arith.truncf %12 : vector<16x1024xf32> to vector<16x1024xbf16>
      %c0_11 = arith.constant 0 : index
      %c0_12 = arith.constant 0 : index
      %14 = vector.load %arg5[%c0_11, %c0_12] : memref<16x1024xbf16, #tpu.memory_space<vmem>>, vector<16x1024xbf16>
      tpu.vector_store %arg5[%c0_11, %c0_12], %13 {strides = array<i32>} : memref<16x1024xbf16, #tpu.memory_space<vmem>>, vector<16x1024xbf16>,
    } else {
    }
    return
  }
  func.func @transform_0(%arg0: i32, %arg1: i32, %arg2: i32) -> (i32, i32) {
    %c0_i32 = arith.constant 0 : i32
    return %arg1, %arg2 : i32, i32
  }
  func.func @transform_1(%arg0: i32, %arg1: i32, %arg2: i32) -> (i32, i32) {
    %c0_i32 = arith.constant 0 : i32
    return %arg2, %arg0 : i32, i32
  }
  func.func @transform_2(%arg0: i32, %arg1: i32, %arg2: i32) -> (i32, i32) {
    %c0_i32 = arith.constant 0 : i32
    return %arg1, %arg0 : i32, i32
  }
}

</mosaic_0001>

<llo_original>
// kernel: qkv_proj.1
$region0: #{qkv_proj.1}
  #allocation0 [shape = 'u32[]', space=smem, size = 0x4, offset = 0x4, fixed_abs, tag = 'smem constant byte address 0x4 - core index']
  #allocation1 [shape = 'u32[144,128]{1,0:T(1,128)}', space=vmem, size = 0x12000, scoped, tag = 'internal scratch']
  #allocation2 [shape = 'f32[16,1024]{1,0:T(8,128)}', space=vmem, size = 0x10000, scoped, tag = 'scratch operand']
  %s0 = inlined_call_operand.hbm [shape: bf16[16,4096], index: 0, kind: input, shape index: {}]
  %s1 = inlined_call_operand.hbm [shape: bf16[4096,12288], index: 1, kind: input, shape index: {}]
  %s2 = inlined_call_operand.vmem [shape: bf16[16,12288], index: 2, kind: output, shape index: {}]
  %s3 = sld [smem:[#allocation0]]
  $region76: #{qkv_proj.1} parent=0
    _
  %s5 = ssub.s32 1, %s3
  %s6 = scalar_select 0, %s5, %s3
  $region1: #{qkv_proj.1} parent=0
    #allocation3 [shape = 'u8[131072]{0}', space=vmem, size = 0x20000, scoped, tag = 'input window, operand 0']
    #allocation4 [shape = 's32[2]{0}', space=sflag, size = 0x8, scoped, tag = 'scoped memory for qkv_proj.1']
    #allocation5 [shape = 'u8[8388608]{0}', space=vmem, size = 0x800000, scoped, tag = 'input window, operand 1']
    #allocation6 [shape = 's32[2]{0}', space=sflag, size = 0x8, scoped, tag = 'scoped memory for qkv_proj.1']
    #allocation7 [shape = 'u8[65536]{0}', space=vmem, size = 0x10000, scoped, tag = 'output window, operand 0']
    %7 = vsyncpa [#allocation4], 0
    %s8 = scalar_lea.sflag [#allocation4], 1
    %9 = vsyncpa %s8, 0
    %10 = vsyncpa [#allocation6], 0
    %s11 = scalar_lea.sflag [#allocation6], 1
    %12 = vsyncpa %s11, 0
    loop: start=0, step=1, limit=26
    $region2: #{qkv_proj.1} parent=1 // loop_pre_header
      _
    $region3: #{qkv_proj.1} parent=1 // loop_header
      %s14 = sphi 0, %s18
      %p15 = scmp.ge.s32.totalorder %s14, 26
      %s21 = sphi 0, %s40
      %s22 = sphi 0, %s36
      %s23 = sphi 0, %s32
      %s24 = sphi 0, %s21
      %s25 = sphi 0, %s22
      %s26 = sphi 0, %s23
      %s27 = sphi 0, %s24
      %s28 = sphi 0, %s25
      %s29 = sphi 0, %s26
      %s45 = sphi 0, %s47
      %s48 = sphi 0, %s45
      %s49 = sphi 0, %s48
      %s65 = sphi 0, %s49
      %s73 = sphi 0, %s75
      %s76 = sphi 0, %s73
      %s77 = sphi 0, %s76
      %s93 = sphi 0, %s77
      %s101 = sphi 0, %s103
      %s104 = sphi 0, %s101
      %s105 = sphi 0, %s104
      %s121 = sphi 0, %s105
    $region4: #{qkv_proj.1} parent=1 // loop_header_branch
      %17 = sbr.rel (%p15) target = $region8
    $region5: #{qkv_proj.1} parent=1 // loop_body
      %s19 = ssub.s32 %s14, 1
      %s20 = ssub.s32 %s14, 2
      %s30 = sadd.s32 1, %s23
      %p31 = scmp.ge.s32.totalorder %s30, 2
      %s32 = scalar_select %p31, 0, %s30
      %s33 = sadd.s32 1, %s22
      %s34 = scalar_select %p31, %s33, %s22
      %p35 = scmp.ge.s32.totalorder %s34, 1
      %s36 = scalar_select %p35, 0, %s34
      %s37 = sadd.s32 1, %s21
      %s38 = scalar_select %p35, %s37, %s21
      %p39 = scmp.ge.s32.totalorder %s38, 12
      %s40 = scalar_select %p39, 0, %s38
      %s41 = ssub.s32 %s22, %s36
      %s42 = ssub.s32 %s23, %s32
      %s43 = sor.u32 %s41, %s42
      %p44 = scmp.eq.s32.totalorder %s43, 0
      %s46 = sadd.s32 %s45, 1
      %s47 = scalar_select %p44, %s45, %s46
      %p50 = pneg %p44
      %p51 = scmp.eq.s32.totalorder %s14, 23
      %p52 = por %p50, %p51
      %p53 = scmp.ne.s32.totalorder %s45, %s48
      %p54 = scmp.eq.s32.totalorder %s14, 0
      %p55 = por %p53, %p54
      %p56 = scmp.ne.s32.totalorder %s45, %s48
      %p57 = scmp.eq.s32.totalorder %s19, 23
      %p58 = por %p56, %p57
      %p59 = scmp.ne.s32.totalorder %s48, %s49
      %p60 = scmp.eq.s32.totalorder %s19, 0
      %p61 = por %p59, %p60
      %p62 = scmp.ne.s32.totalorder %s48, %s49
      %p63 = scmp.eq.s32.totalorder %s20, 23
      %p64 = por %p62, %p63
      %p66 = scmp.ne.s32.totalorder %s49, %s65
      %p67 = scmp.eq.s32.totalorder %s20, 0
      %p68 = por %p66, %p67
      %s69 = ssub.s32 %s23, %s32
      %s70 = ssub.s32 %s21, %s40
      %s71 = sor.u32 %s69, %s70
      %p72 = scmp.eq.s32.totalorder %s71, 0
      %s74 = sadd.s32 %s73, 1
      %s75 = scalar_select %p72, %s73, %s74
      %p78 = pneg %p72
      %p79 = scmp.eq.s32.totalorder %s14, 23
      %p80 = por %p78, %p79
      %p81 = scmp.ne.s32.totalorder %s73, %s76
      %p82 = scmp.eq.s32.totalorder %s14, 0
      %p83 = por %p81, %p82
      %p84 = scmp.ne.s32.totalorder %s73, %s76
      %p85 = scmp.eq.s32.totalorder %s19, 23
      %p86 = por %p84, %p85
      %p87 = scmp.ne.s32.totalorder %s76, %s77
      %p88 = scmp.eq.s32.totalorder %s19, 0
      %p89 = por %p87, %p88
      %p90 = scmp.ne.s32.totalorder %s76, %s77
      %p91 = scmp.eq.s32.totalorder %s20, 23
      %p92 = por %p90, %p91
      %p94 = scmp.ne.s32.totalorder %s77, %s93
      %p95 = scmp.eq.s32.totalorder %s20, 0
      %p96 = por %p94, %p95
      %s97 = ssub.s32 %s22, %s36
      %s98 = ssub.s32 %s21, %s40
      %s99 = sor.u32 %s97, %s98
      %p100 = scmp.eq.s32.totalorder %s99, 0
      %s102 = sadd.s32 %s101, 1
      %s103 = scalar_select %p100, %s101, %s102
      %p106 = pneg %p100
      %p107 = scmp.eq.s32.totalorder %s14, 23
      %p108 = por %p106, %p107
      %p109 = scmp.ne.s32.totalorder %s101, %s104
      %p110 = scmp.eq.s32.totalorder %s14, 0
      %p111 = por %p109, %p110
      %p112 = scmp.ne.s32.totalorder %s101, %s104
      %p113 = scmp.eq.s32.totalorder %s19, 23
      %p114 = por %p112, %p113
      %p115 = scmp.ne.s32.totalorder %s104, %s105
      %p116 = scmp.eq.s32.totalorder %s19, 0
      %p117 = por %p115, %p116
      %p118 = scmp.ne.s32.totalorder %s104, %s105
      %p119 = scmp.eq.s32.totalorder %s20, 23
      %p120 = por %p118, %p119
      %p122 = scmp.ne.s32.totalorder %s105, %s121
      %p123 = scmp.eq.s32.totalorder %s20, 0
      %p124 = por %p122, %p123
      %p125 = scmp.le.s32.totalorder 1, %s14
      %p126 = scmp.lt.s32.totalorder %s14, 25
      %p127 = pnand %p125, %p126
      %p128 = pneg %p127
      // Predicated region
      $region9: #{qkv_proj.1} parent=5 // pred_check
        _
      $region10: #{qkv_proj.1} parent=5 // pred_check_branch
        %130 = sbr.rel (%p127) target = $region12
      $region11: #{qkv_proj.1} parent=5 // pred_region
        %s131 = ssub.s32 %s14, 1
      $region12: #{qkv_proj.1} parent=5 // pred_fallthru
        _
      %p132 = scmp.lt.s32.totalorder %s14, 24
      // Predicated region
      $region13: #{qkv_proj.1} parent=5 // pred_check
        %p133 = pneg %p132
      $region14: #{qkv_proj.1} parent=5 // pred_check_branch
        %135 = sbr.rel (%p133) target = $region16
      $region15: #{qkv_proj.1} parent=5 // pred_region
        // Predicated region
        $region17: #{qkv_proj.1} parent=15 // pred_check
          %p136 = pneg %p55
        $region18: #{qkv_proj.1} parent=15 // pred_check_branch
          %138 = sbr.rel (%p136) target = $region20
        $region19: #{qkv_proj.1} parent=15 // pred_region
          %s139 = sand.u32 %s45, 1
          %s140 = scalar_lea.sflag [#allocation4], %s139
          %s141 = sand.u32 %s45, 1
          %s142 = smul.addr %s141, 128
          %s143 = scalar_lea.vmem [#allocation3], %s142
          %s144 = smul.u32 2, %s22
          %s145 = smul.u32 16, %s23
          %s147 = ssub.s32 2048, 2048
          %148 = vsyncadd %s140, %s147
          %s149 = smul.addr %s144, 32
          %s150 = sadd.s32 %s145, %s149
          %s151 = smul.addr %s150, 64
          %s152 = scalar_lea.hbm %s0, %s151
          %s153 = sshll.u32 %s143, 4
          %s154 = int_to_ptr.vmem [resolvable:$true] %s153
          %159 = dma.hbm_to_vmem [thread:$0]  %s152, 2048, %s154, %s140, 2048, 1024, 64
        $region20: #{qkv_proj.1} parent=15 // pred_fallthru
          _
        // Predicated region
        $region21: #{qkv_proj.1} parent=15 // pred_check
          %p160 = pneg %p83
        $region22: #{qkv_proj.1} parent=15 // pred_check_branch
          %162 = sbr.rel (%p160) target = $region24
        $region23: #{qkv_proj.1} parent=15 // pred_region
          %s163 = sand.u32 %s73, 1
          %s164 = scalar_lea.sflag [#allocation6], %s163
          %s165 = sand.u32 %s73, 1
          %s166 = smul.addr %s165, 8192
          %s167 = scalar_lea.vmem [#allocation5], %s166
          %s168 = smul.u32 256, %s23
          %s169 = smul.u32 8, %s21
          %s171 = ssub.s32 131072, 131072
          %172 = vsyncadd %s164, %s171
          %s173 = smul.addr %s168, 96
          %s174 = sadd.s32 %s169, %s173
          %s175 = smul.addr %s174, 64
          %s176 = scalar_lea.hbm %s1, %s175
          %s177 = sshll.u32 %s167, 4
          %s178 = int_to_ptr.vmem [resolvable:$true] %s177
          %183 = dma.hbm_to_vmem [thread:$0]  %s176, 131072, %s178, %s164, 6144, 512, 32
        $region24: #{qkv_proj.1} parent=15 // pred_fallthru
          _
      $region16: #{qkv_proj.1} parent=5 // pred_fallthru
        _
      %p184 = scmp.le.s32.totalorder 1, %s14
      %p185 = scmp.lt.s32.totalorder %s14, 25
      %p186 = pnand %p184, %p185
      %p187 = pneg %p186
      // Predicated region
      $region25: #{qkv_proj.1} parent=5 // pred_check
        _
      $region26: #{qkv_proj.1} parent=5 // pred_check_branch
        %189 = sbr.rel (%p186) target = $region28
      $region27: #{qkv_proj.1} parent=5 // pred_region
        %s190 = ssub.s32 %s14, 1
        %s191 = sand.u32 %s48, 1
        %s192 = scalar_lea.sflag [#allocation4], %s191
        %s193 = sand.u32 %s48, 1
        %s194 = smul.addr %s193, 128
        %s195 = scalar_lea.vmem [#allocation3], %s194
        // Predicated region
        $region29: #{qkv_proj.1} parent=27 // pred_check
          %p196 = pneg %p61
        $region30: #{qkv_proj.1} parent=27 // pred_check_branch
          %198 = sbr.rel (%p196) target = $region32
        $region31: #{qkv_proj.1} parent=27 // pred_region
          %199 = dma.done %s192, 2048
        $region32: #{qkv_proj.1} parent=27 // pred_fallthru
          _
        %s200 = sand.u32 %s76, 1
        %s201 = scalar_lea.sflag [#allocation6], %s200
        %s202 = sand.u32 %s76, 1
        %s203 = smul.addr %s202, 8192
        %s204 = scalar_lea.vmem [#allocation5], %s203
        // Predicated region
        $region33: #{qkv_proj.1} parent=27 // pred_check
          %p205 = pneg %p89
        $region34: #{qkv_proj.1} parent=27 // pred_check_branch
          %207 = sbr.rel (%p205) target = $region36
        $region35: #{qkv_proj.1} parent=27 // pred_region
          %208 = dma.done %s201, 131072
        $region36: #{qkv_proj.1} parent=27 // pred_fallthru
          _
        %s209 = sand.u32 %s48, 1
        %s210 = scalar_lea.sflag [#allocation4], %s209
        %s211 = sand.u32 %s48, 1
        %s212 = smul.addr %s211, 128
        %s213 = scalar_lea.vmem [#allocation3], %s212
        %p214 = pneg %p61
        %p215 = pneg %p58
        %s216 = sand.u32 %s76, 1
        %s217 = scalar_lea.sflag [#allocation6], %s216
        %s218 = sand.u32 %s76, 1
        %s219 = smul.addr %s218, 8192
        %s220 = scalar_lea.vmem [#allocation5], %s219
        %p221 = pneg %p89
        %p222 = pneg %p86
        %p223 = pneg %p117
        %p224 = pneg %p114
        %s225 = sand.u32 %s104, 1
        %s226 = sand.u32 %s104, 1
        %s227 = smul.addr %s226, 64
        %s228 = scalar_lea.vmem [#allocation7], %s227
        %s229 = smul.u32 2, %s25
        %s230 = smul.u32 16, %s26
        %s231 = smul.u32 256, %s26
        %s232 = smul.u32 8, %s24
        %s233 = smul.u32 2, %s25
        %s234 = smul.u32 8, %s24
        %p235 = scmp.eq.s32.totalorder %s26, 0
        // Predicated region
        $region37: #{qkv_proj.1} parent=27 // pred_check
          %p236 = pneg %p235
        $region38: #{qkv_proj.1} parent=27 // pred_check_branch
          %238 = sbr.rel (%p236) target = $region40
        $region39: #{qkv_proj.1} parent=27 // pred_region
          %239 = vst [vmem:[#allocation2] sm:$0xff] 0.0
          %240 = vst [vmem:[#allocation2 + $0x8] sm:$0xff] 0.0
          %241 = vst [vmem:[#allocation2 + $0x10] sm:$0xff] 0.0
          %242 = vst [vmem:[#allocation2 + $0x18] sm:$0xff] 0.0
          %243 = vst [vmem:[#allocation2 + $0x20] sm:$0xff] 0.0
          %244 = vst [vmem:[#allocation2 + $0x28] sm:$0xff] 0.0
          %245 = vst [vmem:[#allocation2 + $0x30] sm:$0xff] 0.0
          %246 = vst [vmem:[#allocation2 + $0x38] sm:$0xff] 0.0
          %247 = vst [vmem:[#allocation2 + $0x40] sm:$0xff] 0.0
          %248 = vst [vmem:[#allocation2 + $0x48] sm:$0xff] 0.0
          %249 = vst [vmem:[#allocation2 + $0x50] sm:$0xff] 0.0
          %250 = vst [vmem:[#allocation2 + $0x58] sm:$0xff] 0.0
          %251 = vst [vmem:[#allocation2 + $0x60] sm:$0xff] 0.0
          %252 = vst [vmem:[#allocation2 + $0x68] sm:$0xff] 0.0
          %253 = vst [vmem:[#allocation2 + $0x70] sm:$0xff] 0.0
          %254 = vst [vmem:[#allocation2 + $0x78] sm:$0xff] 0.0
        $region40: #{qkv_proj.1} parent=27 // pred_fallthru
          _
        %v255 = vld [vmem:[#allocation2] sm:$0xff]
        %v256 = vld [vmem:[#allocation2 + $0x8] sm:$0xff]
        %v257 = vld [vmem:[#allocation2 + $0x10] sm:$0xff]
        %v258 = vld [vmem:[#allocation2 + $0x18] sm:$0xff]
        %v259 = vld [vmem:[#allocation2 + $0x20] sm:$0xff]
        %v260 = vld [vmem:[#allocation2 + $0x28] sm:$0xff]
        %v261 = vld [vmem:[#allocation2 + $0x30] sm:$0xff]
        %v262 = vld [vmem:[#allocation2 + $0x38] sm:$0xff]
        %v263 = vld [vmem:[#allocation2 + $0x40] sm:$0xff]
        %v264 = vld [vmem:[#allocation2 + $0x48] sm:$0xff]
        %v265 = vld [vmem:[#allocation2 + $0x50] sm:$0xff]
        %v266 = vld [vmem:[#allocation2 + $0x58] sm:$0xff]
        %v267 = vld [vmem:[#allocation2 + $0x60] sm:$0xff]
        %v268 = vld [vmem:[#allocation2 + $0x68] sm:$0xff]
        %v269 = vld [vmem:[#allocation2 + $0x70] sm:$0xff]
        %v270 = vld [vmem:[#allocation2 + $0x78] sm:$0xff]
        %v271 = vld [vmem:[%s195] sm:$0xff]
        %v272 = vld [vmem:[%s195 + $0x8] sm:$0xff]
        %v273 = vld [vmem:[%s195 + $0x10] sm:$0xff]
        %v274 = vld [vmem:[%s195 + $0x18] sm:$0xff]
        %v275 = vld [vmem:[%s195 + $0x20] sm:$0xff]
        %v276 = vld [vmem:[%s195 + $0x28] sm:$0xff]
        %v277 = vld [vmem:[%s195 + $0x30] sm:$0xff]
        %v278 = vld [vmem:[%s195 + $0x38] sm:$0xff]
        %v279 = vld [vmem:[%s195 + $0x40] sm:$0xff]
        %v280 = vld [vmem:[%s195 + $0x48] sm:$0xff]
        %v281 = vld [vmem:[%s195 + $0x50] sm:$0xff]
        %v282 = vld [vmem:[%s195 + $0x58] sm:$0xff]
        %v283 = vld [vmem:[%s195 + $0x60] sm:$0xff]
        %v284 = vld [vmem:[%s195 + $0x68] sm:$0xff]
        %v285 = vld [vmem:[%s195 + $0x70] sm:$0xff]
        %v286 = vld [vmem:[%s195 + $0x78] sm:$0xff]
        %v287 = vld [vmem:[%s204] sm:$0xff]
        %v288 = vld [vmem:[%s204 + $0x8] sm:$0xff]
        %v289 = vld [vmem:[%s204 + $0x10] sm:$0xff]
        %v290 = vld [vmem:[%s204 + $0x18] sm:$0xff]
        %v291 = vld [vmem:[%s204 + $0x20] sm:$0xff]
        %v292 = vld [vmem:[%s204 + $0x28] sm:$0xff]
        %v293 = vld [vmem:[%s204 + $0x30] sm:$0xff]
        %v294 = vld [vmem:[%s204 + $0x38] sm:$0xff]
        %v295 = vld [vmem:[%s204 + $0x40] sm:$0xff]
        %v296 = vld [vmem:[%s204 + $0x48] sm:$0xff]
        %v297 = vld [vmem:[%s204 + $0x50] sm:$0xff]
        %v298 = vld [vmem:[%s204 + $0x58] sm:$0xff]
        %v299 = vld [vmem:[%s204 + $0x60] sm:$0xff]
        %v300 = vld [vmem:[%s204 + $0x68] sm:$0xff]
        %v301 = vld [vmem:[%s204 + $0x70] sm:$0xff]
        %v302 = vld [vmem:[%s204 + $0x78] sm:$0xff]
        %v303 = vld [vmem:[%s204 + $0x80] sm:$0xff]
        %v304 = vld [vmem:[%s204 + $0x88] sm:$0xff]
        %v305 = vld [vmem:[%s204 + $0x90] sm:$0xff]
        %v306 = vld [vmem:[%s204 + $0x98] sm:$0xff]
        %v307 = vld [vmem:[%s204 + $0xa0] sm:$0xff]
        %v308 = vld [vmem:[%s204 + $0xa8] sm:$0xff]
        %v309 = vld [vmem:[%s204 + $0xb0] sm:$0xff]
        %v310 = vld [vmem:[%s204 + $0xb8] sm:$0xff]
        %v311 = vld [vmem:[%s204 + $0xc0] sm:$0xff]
        %v312 = vld [vmem:[%s204 + $0xc8] sm:$0xff]
        %v313 = vld [vmem:[%s204 + $0xd0] sm:$0xff]
        %v314 = vld [vmem:[%s204 + $0xd8] sm:$0xff]
        %v315 = vld [vmem:[%s204 + $0xe0] sm:$0xff]
        %v316 = vld [vmem:[%s204 + $0xe8] sm:$0xff]
        %v317 = vld [vmem:[%s204 + $0xf0] sm:$0xff]
        %v318 = vld [vmem:[%s204 + $0xf8] sm:$0xff]
        %v319 = vld [vmem:[%s204 + $0x100] sm:$0xff]
        %v320 = vld [vmem:[%s204 + $0x108] sm:$0xff]
        %v321 = vld [vmem:[%s204 + $0x110] sm:$0xff]
        %v322 = vld [vmem:[%s204 + $0x118] sm:$0xff]
        %v323 = vld [vmem:[%s204 + $0x120] sm:$0xff]
        %v324 = vld [vmem:[%s204 + $0x128] sm:$0xff]
        %v325 = vld [vmem:[%s204 + $0x130] sm:$0xff]
        %v326 = vld [vmem:[%s204 + $0x138] sm:$0xff]
        %v327 = vld [vmem:[%s204 + $0x140] sm:$0xff]
        %v328 = vld [vmem:[%s204 + $0x148] sm:$0xff]
        %v329 = vld [vmem:[%s204 + $0x150] sm:$0xff]
        %v330 = vld [vmem:[%s204 + $0x158] sm:$0xff]
        %v331 = vld [vmem:[%s204 + $0x160] sm:$0xff]
        %v332 = vld [vmem:[%s204 + $0x168] sm:$0xff]
        %v333 = vld [vmem:[%s204 + $0x170] sm:$0xff]
        %v334 = vld [vmem:[%s204 + $0x178] sm:$0xff]
        %v335 = vld [vmem:[%s204 + $0x180] sm:$0xff]
        %v336 = vld [vmem:[%s204 + $0x188] sm:$0xff]
        %v337 = vld [vmem:[%s204 + $0x190] sm:$0xff]
        %v338 = vld [vmem:[%s204 + $0x198] sm:$0xff]
        %v339 = vld [vmem:[%s204 + $0x1a0] sm:$0xff]
        %v340 = vld [vmem:[%s204 + $0x1a8] sm:$0xff]
        %v341 = vld [vmem:[%s204 + $0x1b0] sm:$0xff]
        %v342 = vld [vmem:[%s204 + $0x1b8] sm:$0xff]
        %v343 = vld [vmem:[%s204 + $0x1c0] sm:$0xff]
        %v344 = vld [vmem:[%s204 + $0x1c8] sm:$0xff]
        %v345 = vld [vmem:[%s204 + $0x1d0] sm:$0xff]
        %v346 = vld [vmem:[%s204 + $0x1d8] sm:$0xff]
        %v347 = vld [vmem:[%s204 + $0x1e0] sm:$0xff]
        %v348 = vld [vmem:[%s204 + $0x1e8] sm:$0xff]
        %v349 = vld [vmem:[%s204 + $0x1f0] sm:$0xff]
        %v350 = vld [vmem:[%s204 + $0x1f8] sm:$0xff]
        %v351 = vld [vmem:[%s204 + $0x200] sm:$0xff]
        %v352 = vld [vmem:[%s204 + $0x208] sm:$0xff]
        %v353 = vld [vmem:[%s204 + $0x210] sm:$0xff]
        %v354 = vld [vmem:[%s204 + $0x218] sm:$0xff]
        %v355 = vld [vmem:[%s204 + $0x220] sm:$0xff]
        %v356 = vld [vmem:[%s204 + $0x228] sm:$0xff]
        %v357 = vld [vmem:[%s204 + $0x230] sm:$0xff]
        %v358 = vld [vmem:[%s204 + $0x238] sm:$0xff]
        %v359 = vld [vmem:[%s204 + $0x240] sm:$0xff]
        %v360 = vld [vmem:[%s204 + $0x248] sm:$0xff]
        %v361 = vld [vmem:[%s204 + $0x250] sm:$0xff]
        %v362 = vld [vmem:[%s204 + $0x258] sm:$0xff]
        %v363 = vld [vmem:[%s204 + $0x260] sm:$0xff]
        %v364 = vld [vmem:[%s204 + $0x268] sm:$0xff]
        %v365 = vld [vmem:[%s204 + $0x270] sm:$0xff]
        %v366 = vld [vmem:[%s204 + $0x278] sm:$0xff]
        %v367 = vld [vmem:[%s204 + $0x280] sm:$0xff]
        %v368 = vld [vmem:[%s204 + $0x288] sm:$0xff]
        %v369 = vld [vmem:[%s204 + $0x290] sm:$0xff]
        %v370 = vld [vmem:[%s204 + $0x298] sm:$0xff]
        %v371 = vld [vmem:[%s204 + $0x2a0] sm:$0xff]
        %v372 = vld [vmem:[%s204 + $0x2a8] sm:$0xff]
        %v373 = vld [vmem:[%s204 + $0x2b0] sm:$0xff]
        %v374 = vld [vmem:[%s204 + $0x2b8] sm:$0xff]
        %v375 = vld [vmem:[%s204 + $0x2c0] sm:$0xff]
        %v376 = vld [vmem:[%s204 + $0x2c8] sm:$0xff]
        %v377 = vld [vmem:[%s204 + $0x2d0] sm:$0xff]
        %v378 = vld [vmem:[%s204 + $0x2d8] sm:$0xff]
        %v379 = vld [vmem:[%s204 + $0x2e0] sm:$0xff]
        %v380 = vld [vmem:[%s204 + $0x2e8] sm:$0xff]
        %v381 = vld [vmem:[%s204 + $0x2f0] sm:$0xff]
        %v382 = vld [vmem:[%s204 + $0x2f8] sm:$0xff]
        %v383 = vld [vmem:[%s204 + $0x300] sm:$0xff]
        %v384 = vld [vmem:[%s204 + $0x308] sm:$0xff]
        %v385 = vld [vmem:[%s204 + $0x310] sm:$0xff]
        %v386 = vld [vmem:[%s204 + $0x318] sm:$0xff]
        %v387 = vld [vmem:[%s204 + $0x320] sm:$0xff]
        %v388 = vld [vmem:[%s204 + $0x328] sm:$0xff]
        %v389 = vld [vmem:[%s204 + $0x330] sm:$0xff]
        %v390 = vld [vmem:[%s204 + $0x338] sm:$0xff]
        %v391 = vld [vmem:[%s204 + $0x340] sm:$0xff]
        %v392 = vld [vmem:[%s204 + $0x348] sm:$0xff]
        %v393 = vld [vmem:[%s204 + $0x350] sm:$0xff]
        %v394 = vld [vmem:[%s204 + $0x358] sm:$0xff]
        %v395 = vld [vmem:[%s204 + $0x360] sm:$0xff]
        %v396 = vld [vmem:[%s204 + $0x368] sm:$0xff]
        %v397 = vld [vmem:[%s204 + $0x370] sm:$0xff]
        %v398 = vld [vmem:[%s204 + $0x378] sm:$0xff]
        %v399 = vld [vmem:[%s204 + $0x380] sm:$0xff]
        %v400 = vld [vmem:[%s204 + $0x388] sm:$0xff]
        %v401 = vld [vmem:[%s204 + $0x390] sm:$0xff]
        %v402 = vld [vmem:[%s204 + $0x398] sm:$0xff]
        %v403 = vld [vmem:[%s204 + $0x3a0] sm:$0xff]
        %v404 = vld [vmem:[%s204 + $0x3a8] sm:$0xff]
        %v405 = vld [vmem:[%s204 + $0x3b0] sm:$0xff]
        %v406 = vld [vmem:[%s204 + $0x3b8] sm:$0xff]
        %v407 = vld [vmem:[%s204 + $0x3c0] sm:$0xff]
        %v408 = vld [vmem:[%s204 + $0x3c8] sm:$0xff]
        %v409 = vld [vmem:[%s204 + $0x3d0] sm:$0xff]
        %v410 = vld [vmem:[%s204 + $0x3d8] sm:$0xff]
        %v411 = vld [vmem:[%s204 + $0x3e0] sm:$0xff]
        %v412 = vld [vmem:[%s204 + $0x3e8] sm:$0xff]
        %v413 = vld [vmem:[%s204 + $0x3f0] sm:$0xff]
        %v414 = vld [vmem:[%s204 + $0x3f8] sm:$0xff]
        %v415 = vld [vmem:[%s204 + $0x400] sm:$0xff]
        %v416 = vld [vmem:[%s204 + $0x408] sm:$0xff]
        %v417 = vld [vmem:[%s204 + $0x410] sm:$0xff]
        %v418 = vld [vmem:[%s204 + $0x418] sm:$0xff]
        %v419 = vld [vmem:[%s204 + $0x420] sm:$0xff]
        %v420 = vld [vmem:[%s204 + $0x428] sm:$0xff]
        %v421 = vld [vmem:[%s204 + $0x430] sm:$0xff]
        %v422 = vld [vmem:[%s204 + $0x438] sm:$0xff]
        %v423 = vld [vmem:[%s204 + $0x440] sm:$0xff]
        %v424 = vld [vmem:[%s204 + $0x448] sm:$0xff]
        %v425 = vld [vmem:[%s204 + $0x450] sm:$0xff]
        %v426 = vld [vmem:[%s204 + $0x458] sm:$0xff]
        %v427 = vld [vmem:[%s204 + $0x460] sm:$0xff]
        %v428 = vld [vmem:[%s204 + $0x468] sm:$0xff]
        %v429 = vld [vmem:[%s204 + $0x470] sm:$0xff]
        %v430 = vld [vmem:[%s204 + $0x478] sm:$0xff]
        %v431 = vld [vmem:[%s204 + $0x480] sm:$0xff]
        %v432 = vld [vmem:[%s204 + $0x488] sm:$0xff]
        %v433 = vld [vmem:[%s204 + $0x490] sm:$0xff]
        %v434 = vld [vmem:[%s204 + $0x498] sm:$0xff]
        %v435 = vld [vmem:[%s204 + $0x4a0] sm:$0xff]
        %v436 = vld [vmem:[%s204 + $0x4a8] sm:$0xff]
        %v437 = vld [vmem:[%s204 + $0x4b0] sm:$0xff]
        %v438 = vld [vmem:[%s204 + $0x4b8] sm:$0xff]
        %v439 = vld [vmem:[%s204 + $0x4c0] sm:$0xff]
        %v440 = vld [vmem:[%s204 + $0x4c8] sm:$0xff]
        %v441 = vld [vmem:[%s204 + $0x4d0] sm:$0xff]
        %v442 = vld [vmem:[%s204 + $0x4d8] sm:$0xff]
        %v443 = vld [vmem:[%s204 + $0x4e0] sm:$0xff]
        %v444 = vld [vmem:[%s204 + $0x4e8] sm:$0xff]
        %v445 = vld [vmem:[%s204 + $0x4f0] sm:$0xff]
        %v446 = vld [vmem:[%s204 + $0x4f8] sm:$0xff]
        %v447 = vld [vmem:[%s204 + $0x500] sm:$0xff]
        %v448 = vld [vmem:[%s204 + $0x508] sm:$0xff]
        %v449 = vld [vmem:[%s204 + $0x510] sm:$0xff]
        %v450 = vld [vmem:[%s204 + $0x518] sm:$0xff]
        %v451 = vld [vmem:[%s204 + $0x520] sm:$0xff]
        %v452 = vld [vmem:[%s204 + $0x528] sm:$0xff]
        %v453 = vld [vmem:[%s204 + $0x530] sm:$0xff]
        %v454 = vld [vmem:[%s204 + $0x538] sm:$0xff]
        %v455 = vld [vmem:[%s204 + $0x540] sm:$0xff]
        %v456 = vld [vmem:[%s204 + $0x548] sm:$0xff]
        %v457 = vld [vmem:[%s204 + $0x550] sm:$0xff]
        %v458 = vld [vmem:[%s204 + $0x558] sm:$0xff]
        %v459 = vld [vmem:[%s204 + $0x560] sm:$0xff]
        %v460 = vld [vmem:[%s204 + $0x568] sm:$0xff]
        %v461 = vld [vmem:[%s204 + $0x570] sm:$0xff]
        %v462 = vld [vmem:[%s204 + $0x578] sm:$0xff]
        %v463 = vld [vmem:[%s204 + $0x580] sm:$0xff]
        %v464 = vld [vmem:[%s204 + $0x588] sm:$0xff]
        %v465 = vld [vmem:[%s204 + $0x590] sm:$0xff]
        %v466 = vld [vmem:[%s204 + $0x598] sm:$0xff]
        %v467 = vld [vmem:[%s204 + $0x5a0] sm:$0xff]
        %v468 = vld [vmem:[%s204 + $0x5a8] sm:$0xff]
        %v469 = vld [vmem:[%s204 + $0x5b0] sm:$0xff]
        %v470 = vld [vmem:[%s204 + $0x5b8] sm:$0xff]
        %v471 = vld [vmem:[%s204 + $0x5c0] sm:$0xff]
        %v472 = vld [vmem:[%s204 + $0x5c8] sm:$0xff]
        %v473 = vld [vmem:[%s204 + $0x5d0] sm:$0xff]
        %v474 = vld [vmem:[%s204 + $0x5d8] sm:$0xff]
        %v475 = vld [vmem:[%s204 + $0x5e0] sm:$0xff]
        %v476 = vld [vmem:[%s204 + $0x5e8] sm:$0xff]
        %v477 = vld [vmem:[%s204 + $0x5f0] sm:$0xff]
        %v478 = vld [vmem:[%s204 + $0x5f8] sm:$0xff]
        %v479 = vld [vmem:[%s204 + $0x600] sm:$0xff]
        %v480 = vld [vmem:[%s204 + $0x608] sm:$0xff]
        %v481 = vld [vmem:[%s204 + $0x610] sm:$0xff]
        %v482 = vld [vmem:[%s204 + $0x618] sm:$0xff]
        %v483 = vld [vmem:[%s204 + $0x620] sm:$0xff]
        %v484 = vld [vmem:[%s204 + $0x628] sm:$0xff]
        %v485 = vld [vmem:[%s204 + $0x630] sm:$0xff]
        %v486 = vld [vmem:[%s204 + $0x638] sm:$0xff]
        %v487 = vld [vmem:[%s204 + $0x640] sm:$0xff]
        %v488 = vld [vmem:[%s204 + $0x648] sm:$0xff]
        %v489 = vld [vmem:[%s204 + $0x650] sm:$0xff]
        %v490 = vld [vmem:[%s204 + $0x658] sm:$0xff]
        %v491 = vld [vmem:[%s204 + $0x660] sm:$0xff]
        %v492 = vld [vmem:[%s204 + $0x668] sm:$0xff]
        %v493 = vld [vmem:[%s204 + $0x670] sm:$0xff]
        %v494 = vld [vmem:[%s204 + $0x678] sm:$0xff]
        %v495 = vld [vmem:[%s204 + $0x680] sm:$0xff]
        %v496 = vld [vmem:[%s204 + $0x688] sm:$0xff]
        %v497 = vld [vmem:[%s204 + $0x690] sm:$0xff]
        %v498 = vld [vmem:[%s204 + $0x698] sm:$0xff]
        %v499 = vld [vmem:[%s204 + $0x6a0] sm:$0xff]
        %v500 = vld [vmem:[%s204 + $0x6a8] sm:$0xff]
        %v501 = vld [vmem:[%s204 + $0x6b0] sm:$0xff]
        %v502 = vld [vmem:[%s204 + $0x6b8] sm:$0xff]
        %v503 = vld [vmem:[%s204 + $0x6c0] sm:$0xff]
        %v504 = vld [vmem:[%s204 + $0x6c8] sm:$0xff]
        %v505 = vld [vmem:[%s204 + $0x6d0] sm:$0xff]
        %v506 = vld [vmem:[%s204 + $0x6d8] sm:$0xff]
        %v507 = vld [vmem:[%s204 + $0x6e0] sm:$0xff]
        %v508 = vld [vmem:[%s204 + $0x6e8] sm:$0xff]
        %v509 = vld [vmem:[%s204 + $0x6f0] sm:$0xff]
        %v510 = vld [vmem:[%s204 + $0x6f8] sm:$0xff]
        %v511 = vld [vmem:[%s204 + $0x700] sm:$0xff]
        %v512 = vld [vmem:[%s204 + $0x708] sm:$0xff]
        %v513 = vld [vmem:[%s204 + $0x710] sm:$0xff]
        %v514 = vld [vmem:[%s204 + $0x718] sm:$0xff]
        %v515 = vld [vmem:[%s204 + $0x720] sm:$0xff]
        %v516 = vld [vmem:[%s204 + $0x728] sm:$0xff]
        %v517 = vld [vmem:[%s204 + $0x730] sm:$0xff]
        %v518 = vld [vmem:[%s204 + $0x738] sm:$0xff]
        %v519 = vld [vmem:[%s204 + $0x740] sm:$0xff]
        %v520 = vld [vmem:[%s204 + $0x748] sm:$0xff]
        %v521 = vld [vmem:[%s204 + $0x750] sm:$0xff]
        %v522 = vld [vmem:[%s204 + $0x758] sm:$0xff]
        %v523 = vld [vmem:[%s204 + $0x760] sm:$0xff]
        %v524 = vld [vmem:[%s204 + $0x768] sm:$0xff]
        %v525 = vld [vmem:[%s204 + $0x770] sm:$0xff]
        %v526 = vld [vmem:[%s204 + $0x778] sm:$0xff]
        %v527 = vld [vmem:[%s204 + $0x780] sm:$0xff]
        %v528 = vld [vmem:[%s204 + $0x788] sm:$0xff]
        %v529 = vld [vmem:[%s204 + $0x790] sm:$0xff]
        %v530 = vld [vmem:[%s204 + $0x798] sm:$0xff]
        %v531 = vld [vmem:[%s204 + $0x7a0] sm:$0xff]
        %v532 = vld [vmem:[%s204 + $0x7a8] sm:$0xff]
        %v533 = vld [vmem:[%s204 + $0x7b0] sm:$0xff]
        %v534 = vld [vmem:[%s204 + $0x7b8] sm:$0xff]
        %v535 = vld [vmem:[%s204 + $0x7c0] sm:$0xff]
        %v536 = vld [vmem:[%s204 + $0x7c8] sm:$0xff]
        %v537 = vld [vmem:[%s204 + $0x7d0] sm:$0xff]
        %v538 = vld [vmem:[%s204 + $0x7d8] sm:$0xff]
        %v539 = vld [vmem:[%s204 + $0x7e0] sm:$0xff]
        %v540 = vld [vmem:[%s204 + $0x7e8] sm:$0xff]
        %v541 = vld [vmem:[%s204 + $0x7f0] sm:$0xff]
        %v542 = vld [vmem:[%s204 + $0x7f8] sm:$0xff]
        %v543 = vld [vmem:[%s204 + $0x800] sm:$0xff]
        %v544 = vld [vmem:[%s204 + $0x808] sm:$0xff]
        %v545 = vld [vmem:[%s204 + $0x810] sm:$0xff]
        %v546 = vld [vmem:[%s204 + $0x818] sm:$0xff]
        %v547 = vld [vmem:[%s204 + $0x820] sm:$0xff]
        %v548 = vld [vmem:[%s204 + $0x828] sm:$0xff]
        %v549 = vld [vmem:[%s204 + $0x830] sm:$0xff]
        %v550 = vld [vmem:[%s204 + $0x838] sm:$0xff]
        %v551 = vld [vmem:[%s204 + $0x840] sm:$0xff]
        %v552 = vld [vmem:[%s204 + $0x848] sm:$0xff]
        %v553 = vld [vmem:[%s204 + $0x850] sm:$0xff]
        %v554 = vld [vmem:[%s204 + $0x858] sm:$0xff]
        %v555 = vld [vmem:[%s204 + $0x860] sm:$0xff]
        %v556 = vld [vmem:[%s204 + $0x868] sm:$0xff]
        %v557 = vld [vmem:[%s204 + $0x870] sm:$0xff]
        %v558 = vld [vmem:[%s204 + $0x878] sm:$0xff]
        %v559 = vld [vmem:[%s204 + $0x880] sm:$0xff]
        %v560 = vld [vmem:[%s204 + $0x888] sm:$0xff]
        %v561 = vld [vmem:[%s204 + $0x890] sm:$0xff]
        %v562 = vld [vmem:[%s204 + $0x898] sm:$0xff]
        %v563 = vld [vmem:[%s204 + $0x8a0] sm:$0xff]
        %v564 = vld [vmem:[%s204 + $0x8a8] sm:$0xff]
        %v565 = vld [vmem:[%s204 + $0x8b0] sm:$0xff]
        %v566 = vld [vmem:[%s204 + $0x8b8] sm:$0xff]
        %v567 = vld [vmem:[%s204 + $0x8c0] sm:$0xff]
        %v568 = vld [vmem:[%s204 + $0x8c8] sm:$0xff]
        %v569 = vld [vmem:[%s204 + $0x8d0] sm:$0xff]
        %v570 = vld [vmem:[%s204 + $0x8d8] sm:$0xff]
        %v571 = vld [vmem:[%s204 + $0x8e0] sm:$0xff]
        %v572 = vld [vmem:[%s204 + $0x8e8] sm:$0xff]
        %v573 = vld [vmem:[%s204 + $0x8f0] sm:$0xff]
        %v574 = vld [vmem:[%s204 + $0x8f8] sm:$0xff]
        %v575 = vld [vmem:[%s204 + $0x900] sm:$0xff]
        %v576 = vld [vmem:[%s204 + $0x908] sm:$0xff]
        %v577 = vld [vmem:[%s204 + $0x910] sm:$0xff]
        %v578 = vld [vmem:[%s204 + $0x918] sm:$0xff]
        %v579 = vld [vmem:[%s204 + $0x920] sm:$0xff]
        %v580 = vld [vmem:[%s204 + $0x928] sm:$0xff]
        %v581 = vld [vmem:[%s204 + $0x930] sm:$0xff]
        %v582 = vld [vmem:[%s204 + $0x938] sm:$0xff]
        %v583 = vld [vmem:[%s204 + $0x940] sm:$0xff]
        %v584 = vld [vmem:[%s204 + $0x948] sm:$0xff]
        %v585 = vld [vmem:[%s204 + $0x950] sm:$0xff]
        %v586 = vld [vmem:[%s204 + $0x958] sm:$0xff]
        %v587 = vld [vmem:[%s204 + $0x960] sm:$0xff]
        %v588 = vld [vmem:[%s204 + $0x968] sm:$0xff]
        %v589 = vld [vmem:[%s204 + $0x970] sm:$0xff]
        %v590 = vld [vmem:[%s204 + $0x978] sm:$0xff]
        %v591 = vld [vmem:[%s204 + $0x980] sm:$0xff]
        %v592 = vld [vmem:[%s204 + $0x988] sm:$0xff]
        %v593 = vld [vmem:[%s204 + $0x990] sm:$0xff]
        %v594 = vld [vmem:[%s204 + $0x998] sm:$0xff]
        %v595 = vld [vmem:[%s204 + $0x9a0] sm:$0xff]
        %v596 = vld [vmem:[%s204 + $0x9a8] sm:$0xff]
        %v597 = vld [vmem:[%s204 + $0x9b0] sm:$0xff]
        %v598 = vld [vmem:[%s204 + $0x9b8] sm:$0xff]
        %v599 = vld [vmem:[%s204 + $0x9c0] sm:$0xff]
        %v600 = vld [vmem:[%s204 + $0x9c8] sm:$0xff]
        %v601 = vld [vmem:[%s204 + $0x9d0] sm:$0xff]
        %v602 = vld [vmem:[%s204 + $0x9d8] sm:$0xff]
        %v603 = vld [vmem:[%s204 + $0x9e0] sm:$0xff]
        %v604 = vld [vmem:[%s204 + $0x9e8] sm:$0xff]
        %v605 = vld [vmem:[%s204 + $0x9f0] sm:$0xff]
        %v606 = vld [vmem:[%s204 + $0x9f8] sm:$0xff]
        %v607 = vld [vmem:[%s204 + $0xa00] sm:$0xff]
        %v608 = vld [vmem:[%s204 + $0xa08] sm:$0xff]
        %v609 = vld [vmem:[%s204 + $0xa10] sm:$0xff]
        %v610 = vld [vmem:[%s204 + $0xa18] sm:$0xff]
        %v611 = vld [vmem:[%s204 + $0xa20] sm:$0xff]
        %v612 = vld [vmem:[%s204 + $0xa28] sm:$0xff]
        %v613 = vld [vmem:[%s204 + $0xa30] sm:$0xff]
        %v614 = vld [vmem:[%s204 + $0xa38] sm:$0xff]
        %v615 = vld [vmem:[%s204 + $0xa40] sm:$0xff]
        %v616 = vld [vmem:[%s204 + $0xa48] sm:$0xff]
        %v617 = vld [vmem:[%s204 + $0xa50] sm:$0xff]
        %v618 = vld [vmem:[%s204 + $0xa58] sm:$0xff]
        %v619 = vld [vmem:[%s204 + $0xa60] sm:$0xff]
        %v620 = vld [vmem:[%s204 + $0xa68] sm:$0xff]
        %v621 = vld [vmem:[%s204 + $0xa70] sm:$0xff]
        %v622 = vld [vmem:[%s204 + $0xa78] sm:$0xff]
        %v623 = vld [vmem:[%s204 + $0xa80] sm:$0xff]
        %v624 = vld [vmem:[%s204 + $0xa88] sm:$0xff]
        %v625 = vld [vmem:[%s204 + $0xa90] sm:$0xff]
        %v626 = vld [vmem:[%s204 + $0xa98] sm:$0xff]
        %v627 = vld [vmem:[%s204 + $0xaa0] sm:$0xff]
        %v628 = vld [vmem:[%s204 + $0xaa8] sm:$0xff]
        %v629 = vld [vmem:[%s204 + $0xab0] sm:$0xff]
        %v630 = vld [vmem:[%s204 + $0xab8] sm:$0xff]
        %v631 = vld [vmem:[%s204 + $0xac0] sm:$0xff]
        %v632 = vld [vmem:[%s204 + $0xac8] sm:$0xff]
        %v633 = vld [vmem:[%s204 + $0xad0] sm:$0xff]
        %v634 = vld [vmem:[%s204 + $0xad8] sm:$0xff]
        %v635 = vld [vmem:[%s204 + $0xae0] sm:$0xff]
        %v636 = vld [vmem:[%s204 + $0xae8] sm:$0xff]
        %v637 = vld [vmem:[%s204 + $0xaf0] sm:$0xff]
        %v638 = vld [vmem:[%s204 + $0xaf8] sm:$0xff]
        %v639 = vld [vmem:[%s204 + $0xb00] sm:$0xff]
        %v640 = vld [vmem:[%s204 + $0xb08] sm:$0xff]
        %v641 = vld [vmem:[%s204 + $0xb10] sm:$0xff]
        %v642 = vld [vmem:[%s204 + $0xb18] sm:$0xff]
        %v643 = vld [vmem:[%s204 + $0xb20] sm:$0xff]
        %v644 = vld [vmem:[%s204 + $0xb28] sm:$0xff]
        %v645 = vld [vmem:[%s204 + $0xb30] sm:$0xff]
        %v646 = vld [vmem:[%s204 + $0xb38] sm:$0xff]
        %v647 = vld [vmem:[%s204 + $0xb40] sm:$0xff]
        %v648 = vld [vmem:[%s204 + $0xb48] sm:$0xff]
        %v649 = vld [vmem:[%s204 + $0xb50] sm:$0xff]
        %v650 = vld [vmem:[%s204 + $0xb58] sm:$0xff]
        %v651 = vld [vmem:[%s204 + $0xb60] sm:$0xff]
        %v652 = vld [vmem:[%s204 + $0xb68] sm:$0xff]
        %v653 = vld [vmem:[%s204 + $0xb70] sm:$0xff]
        %v654 = vld [vmem:[%s204 + $0xb78] sm:$0xff]
        %v655 = vld [vmem:[%s204 + $0xb80] sm:$0xff]
        %v656 = vld [vmem:[%s204 + $0xb88] sm:$0xff]
        %v657 = vld [vmem:[%s204 + $0xb90] sm:$0xff]
        %v658 = vld [vmem:[%s204 + $0xb98] sm:$0xff]
        %v659 = vld [vmem:[%s204 + $0xba0] sm:$0xff]
        %v660 = vld [vmem:[%s204 + $0xba8] sm:$0xff]
        %v661 = vld [vmem:[%s204 + $0xbb0] sm:$0xff]
        %v662 = vld [vmem:[%s204 + $0xbb8] sm:$0xff]
        %v663 = vld [vmem:[%s204 + $0xbc0] sm:$0xff]
        %v664 = vld [vmem:[%s204 + $0xbc8] sm:$0xff]
        %v665 = vld [vmem:[%s204 + $0xbd0] sm:$0xff]
        %v666 = vld [vmem:[%s204 + $0xbd8] sm:$0xff]
        %v667 = vld [vmem:[%s204 + $0xbe0] sm:$0xff]
        %v668 = vld [vmem:[%s204 + $0xbe8] sm:$0xff]
        %v669 = vld [vmem:[%s204 + $0xbf0] sm:$0xff]
        %v670 = vld [vmem:[%s204 + $0xbf8] sm:$0xff]
        %v671 = vld [vmem:[%s204 + $0xc00] sm:$0xff]
        %v672 = vld [vmem:[%s204 + $0xc08] sm:$0xff]
        %v673 = vld [vmem:[%s204 + $0xc10] sm:$0xff]
        %v674 = vld [vmem:[%s204 + $0xc18] sm:$0xff]
        %v675 = vld [vmem:[%s204 + $0xc20] sm:$0xff]
        %v676 = vld [vmem:[%s204 + $0xc28] sm:$0xff]
        %v677 = vld [vmem:[%s204 + $0xc30] sm:$0xff]
        %v678 = vld [vmem:[%s204 + $0xc38] sm:$0xff]
        %v679 = vld [vmem:[%s204 + $0xc40] sm:$0xff]
        %v680 = vld [vmem:[%s204 + $0xc48] sm:$0xff]
        %v681 = vld [vmem:[%s204 + $0xc50] sm:$0xff]
        %v682 = vld [vmem:[%s204 + $0xc58] sm:$0xff]
        %v683 = vld [vmem:[%s204 + $0xc60] sm:$0xff]
        %v684 = vld [vmem:[%s204 + $0xc68] sm:$0xff]
        %v685 = vld [vmem:[%s204 + $0xc70] sm:$0xff]
        %v686 = vld [vmem:[%s204 + $0xc78] sm:$0xff]
        %v687 = vld [vmem:[%s204 + $0xc80] sm:$0xff]
        %v688 = vld [vmem:[%s204 + $0xc88] sm:$0xff]
        %v689 = vld [vmem:[%s204 + $0xc90] sm:$0xff]
        %v690 = vld [vmem:[%s204 + $0xc98] sm:$0xff]
        %v691 = vld [vmem:[%s204 + $0xca0] sm:$0xff]
        %v692 = vld [vmem:[%s204 + $0xca8] sm:$0xff]
        %v693 = vld [vmem:[%s204 + $0xcb0] sm:$0xff]
        %v694 = vld [vmem:[%s204 + $0xcb8] sm:$0xff]
        %v695 = vld [vmem:[%s204 + $0xcc0] sm:$0xff]
        %v696 = vld [vmem:[%s204 + $0xcc8] sm:$0xff]
        %v697 = vld [vmem:[%s204 + $0xcd0] sm:$0xff]
        %v698 = vld [vmem:[%s204 + $0xcd8] sm:$0xff]
        %v699 = vld [vmem:[%s204 + $0xce0] sm:$0xff]
        %v700 = vld [vmem:[%s204 + $0xce8] sm:$0xff]
        %v701 = vld [vmem:[%s204 + $0xcf0] sm:$0xff]
        %v702 = vld [vmem:[%s204 + $0xcf8] sm:$0xff]
        %v703 = vld [vmem:[%s204 + $0xd00] sm:$0xff]
        %v704 = vld [vmem:[%s204 + $0xd08] sm:$0xff]
        %v705 = vld [vmem:[%s204 + $0xd10] sm:$0xff]
        %v706 = vld [vmem:[%s204 + $0xd18] sm:$0xff]
        %v707 = vld [vmem:[%s204 + $0xd20] sm:$0xff]
        %v708 = vld [vmem:[%s204 + $0xd28] sm:$0xff]
        %v709 = vld [vmem:[%s204 + $0xd30] sm:$0xff]
        %v710 = vld [vmem:[%s204 + $0xd38] sm:$0xff]
        %v711 = vld [vmem:[%s204 + $0xd40] sm:$0xff]
        %v712 = vld [vmem:[%s204 + $0xd48] sm:$0xff]
        %v713 = vld [vmem:[%s204 + $0xd50] sm:$0xff]
        %v714 = vld [vmem:[%s204 + $0xd58] sm:$0xff]
        %v715 = vld [vmem:[%s204 + $0xd60] sm:$0xff]
        %v716 = vld [vmem:[%s204 + $0xd68] sm:$0xff]
        %v717 = vld [vmem:[%s204 + $0xd70] sm:$0xff]
        %v718 = vld [vmem:[%s204 + $0xd78] sm:$0xff]
        %v719 = vld [vmem:[%s204 + $0xd80] sm:$0xff]
        %v720 = vld [vmem:[%s204 + $0xd88] sm:$0xff]
        %v721 = vld [vmem:[%s204 + $0xd90] sm:$0xff]
        %v722 = vld [vmem:[%s204 + $0xd98] sm:$0xff]
        %v723 = vld [vmem:[%s204 + $0xda0] sm:$0xff]
        %v724 = vld [vmem:[%s204 + $0xda8] sm:$0xff]
        %v725 = vld [vmem:[%s204 + $0xdb0] sm:$0xff]
        %v726 = vld [vmem:[%s204 + $0xdb8] sm:$0xff]
        %v727 = vld [vmem:[%s204 + $0xdc0] sm:$0xff]
        %v728 = vld [vmem:[%s204 + $0xdc8] sm:$0xff]
        %v729 = vld [vmem:[%s204 + $0xdd0] sm:$0xff]
        %v730 = vld [vmem:[%s204 + $0xdd8] sm:$0xff]
        %v731 = vld [vmem:[%s204 + $0xde0] sm:$0xff]
        %v732 = vld [vmem:[%s204 + $0xde8] sm:$0xff]
        %v733 = vld [vmem:[%s204 + $0xdf0] sm:$0xff]
        %v734 = vld [vmem:[%s204 + $0xdf8] sm:$0xff]
        %v735 = vld [vmem:[%s204 + $0xe00] sm:$0xff]
        %v736 = vld [vmem:[%s204 + $0xe08] sm:$0xff]
        %v737 = vld [vmem:[%s204 + $0xe10] sm:$0xff]
        %v738 = vld [vmem:[%s204 + $0xe18] sm:$0xff]
        %v739 = vld [vmem:[%s204 + $0xe20] sm:$0xff]
        %v740 = vld [vmem:[%s204 + $0xe28] sm:$0xff]
        %v741 = vld [vmem:[%s204 + $0xe30] sm:$0xff]
        %v742 = vld [vmem:[%s204 + $0xe38] sm:$0xff]
        %v743 = vld [vmem:[%s204 + $0xe40] sm:$0xff]
        %v744 = vld [vmem:[%s204 + $0xe48] sm:$0xff]
        %v745 = vld [vmem:[%s204 + $0xe50] sm:$0xff]
        %v746 = vld [vmem:[%s204 + $0xe58] sm:$0xff]
        %v747 = vld [vmem:[%s204 + $0xe60] sm:$0xff]
        %v748 = vld [vmem:[%s204 + $0xe68] sm:$0xff]
        %v749 = vld [vmem:[%s204 + $0xe70] sm:$0xff]
        %v750 = vld [vmem:[%s204 + $0xe78] sm:$0xff]
        %v751 = vld [vmem:[%s204 + $0xe80] sm:$0xff]
        %v752 = vld [vmem:[%s204 + $0xe88] sm:$0xff]
        %v753 = vld [vmem:[%s204 + $0xe90] sm:$0xff]
        %v754 = vld [vmem:[%s204 + $0xe98] sm:$0xff]
        %v755 = vld [vmem:[%s204 + $0xea0] sm:$0xff]
        %v756 = vld [vmem:[%s204 + $0xea8] sm:$0xff]
        %v757 = vld [vmem:[%s204 + $0xeb0] sm:$0xff]
        %v758 = vld [vmem:[%s204 + $0xeb8] sm:$0xff]
        %v759 = vld [vmem:[%s204 + $0xec0] sm:$0xff]
        %v760 = vld [vmem:[%s204 + $0xec8] sm:$0xff]
        %v761 = vld [vmem:[%s204 + $0xed0] sm:$0xff]
        %v762 = vld [vmem:[%s204 + $0xed8] sm:$0xff]
        %v763 = vld [vmem:[%s204 + $0xee0] sm:$0xff]
        %v764 = vld [vmem:[%s204 + $0xee8] sm:$0xff]
        %v765 = vld [vmem:[%s204 + $0xef0] sm:$0xff]
        %v766 = vld [vmem:[%s204 + $0xef8] sm:$0xff]
        %v767 = vld [vmem:[%s204 + $0xf00] sm:$0xff]
        %v768 = vld [vmem:[%s204 + $0xf08] sm:$0xff]
        %v769 = vld [vmem:[%s204 + $0xf10] sm:$0xff]
        %v770 = vld [vmem:[%s204 + $0xf18] sm:$0xff]
        %v771 = vld [vmem:[%s204 + $0xf20] sm:$0xff]
        %v772 = vld [vmem:[%s204 + $0xf28] sm:$0xff]
        %v773 = vld [vmem:[%s204 + $0xf30] sm:$0xff]
        %v774 = vld [vmem:[%s204 + $0xf38] sm:$0xff]
        %v775 = vld [vmem:[%s204 + $0xf40] sm:$0xff]
        %v776 = vld [vmem:[%s204 + $0xf48] sm:$0xff]
        %v777 = vld [vmem:[%s204 + $0xf50] sm:$0xff]
        %v778 = vld [vmem:[%s204 + $0xf58] sm:$0xff]
        %v779 = vld [vmem:[%s204 + $0xf60] sm:$0xff]
        %v780 = vld [vmem:[%s204 + $0xf68] sm:$0xff]
        %v781 = vld [vmem:[%s204 + $0xf70] sm:$0xff]
        %v782 = vld [vmem:[%s204 + $0xf78] sm:$0xff]
        %v783 = vld [vmem:[%s204 + $0xf80] sm:$0xff]
        %v784 = vld [vmem:[%s204 + $0xf88] sm:$0xff]
        %v785 = vld [vmem:[%s204 + $0xf90] sm:$0xff]
        %v786 = vld [vmem:[%s204 + $0xf98] sm:$0xff]
        %v787 = vld [vmem:[%s204 + $0xfa0] sm:$0xff]
        %v788 = vld [vmem:[%s204 + $0xfa8] sm:$0xff]
        %v789 = vld [vmem:[%s204 + $0xfb0] sm:$0xff]
        %v790 = vld [vmem:[%s204 + $0xfb8] sm:$0xff]
        %v791 = vld [vmem:[%s204 + $0xfc0] sm:$0xff]
        %v792 = vld [vmem:[%s204 + $0xfc8] sm:$0xff]
        %v793 = vld [vmem:[%s204 + $0xfd0] sm:$0xff]
        %v794 = vld [vmem:[%s204 + $0xfd8] sm:$0xff]
        %v795 = vld [vmem:[%s204 + $0xfe0] sm:$0xff]
        %v796 = vld [vmem:[%s204 + $0xfe8] sm:$0xff]
        %v797 = vld [vmem:[%s204 + $0xff0] sm:$0xff]
        %v798 = vld [vmem:[%s204 + $0xff8] sm:$0xff]
        %v799 = vld [vmem:[%s204 + $0x1000] sm:$0xff]
        %v800 = vld [vmem:[%s204 + $0x1008] sm:$0xff]
        %v801 = vld [vmem:[%s204 + $0x1010] sm:$0xff]
        %v802 = vld [vmem:[%s204 + $0x1018] sm:$0xff]
        %v803 = vld [vmem:[%s204 + $0x1020] sm:$0xff]
        %v804 = vld [vmem:[%s204 + $0x1028] sm:$0xff]
        %v805 = vld [vmem:[%s204 + $0x1030] sm:$0xff]
        %v806 = vld [vmem:[%s204 + $0x1038] sm:$0xff]
        %v807 = vld [vmem:[%s204 + $0x1040] sm:$0xff]
        %v808 = vld [vmem:[%s204 + $0x1048] sm:$0xff]
        %v809 = vld [vmem:[%s204 + $0x1050] sm:$0xff]
        %v810 = vld [vmem:[%s204 + $0x1058] sm:$0xff]
        %v811 = vld [vmem:[%s204 + $0x1060] sm:$0xff]
        %v812 = vld [vmem:[%s204 + $0x1068] sm:$0xff]
        %v813 = vld [vmem:[%s204 + $0x1070] sm:$0xff]
        %v814 = vld [vmem:[%s204 + $0x1078] sm:$0xff]
        %v815 = vld [vmem:[%s204 + $0x1080] sm:$0xff]
        %v816 = vld [vmem:[%s204 + $0x1088] sm:$0xff]
        %v817 = vld [vmem:[%s204 + $0x1090] sm:$0xff]
        %v818 = vld [vmem:[%s204 + $0x1098] sm:$0xff]
        %v819 = vld [vmem:[%s204 + $0x10a0] sm:$0xff]
        %v820 = vld [vmem:[%s204 + $0x10a8] sm:$0xff]
        %v821 = vld [vmem:[%s204 + $0x10b0] sm:$0xff]
        %v822 = vld [vmem:[%s204 + $0x10b8] sm:$0xff]
        %v823 = vld [vmem:[%s204 + $0x10c0] sm:$0xff]
        %v824 = vld [vmem:[%s204 + $0x10c8] sm:$0xff]
        %v825 = vld [vmem:[%s204 + $0x10d0] sm:$0xff]
        %v826 = vld [vmem:[%s204 + $0x10d8] sm:$0xff]
        %v827 = vld [vmem:[%s204 + $0x10e0] sm:$0xff]
        %v828 = vld [vmem:[%s204 + $0x10e8] sm:$0xff]
        %v829 = vld [vmem:[%s204 + $0x10f0] sm:$0xff]
        %v830 = vld [vmem:[%s204 + $0x10f8] sm:$0xff]
        %v831 = vld [vmem:[%s204 + $0x1100] sm:$0xff]
        %v832 = vld [vmem:[%s204 + $0x1108] sm:$0xff]
        %v833 = vld [vmem:[%s204 + $0x1110] sm:$0xff]
        %v834 = vld [vmem:[%s204 + $0x1118] sm:$0xff]
        %v835 = vld [vmem:[%s204 + $0x1120] sm:$0xff]
        %v836 = vld [vmem:[%s204 + $0x1128] sm:$0xff]
        %v837 = vld [vmem:[%s204 + $0x1130] sm:$0xff]
        %v838 = vld [vmem:[%s204 + $0x1138] sm:$0xff]
        %v839 = vld [vmem:[%s204 + $0x1140] sm:$0xff]
        %v840 = vld [vmem:[%s204 + $0x1148] sm:$0xff]
        %v841 = vld [vmem:[%s204 + $0x1150] sm:$0xff]
        %v842 = vld [vmem:[%s204 + $0x1158] sm:$0xff]
        %v843 = vld [vmem:[%s204 + $0x1160] sm:$0xff]
        %v844 = vld [vmem:[%s204 + $0x1168] sm:$0xff]
        %v845 = vld [vmem:[%s204 + $0x1170] sm:$0xff]
        %v846 = vld [vmem:[%s204 + $0x1178] sm:$0xff]
        %v847 = vld [vmem:[%s204 + $0x1180] sm:$0xff]
        %v848 = vld [vmem:[%s204 + $0x1188] sm:$0xff]
        %v849 = vld [vmem:[%s204 + $0x1190] sm:$0xff]
        %v850 = vld [vmem:[%s204 + $0x1198] sm:$0xff]
        %v851 = vld [vmem:[%s204 + $0x11a0] sm:$0xff]
        %v852 = vld [vmem:[%s204 + $0x11a8] sm:$0xff]
        %v853 = vld [vmem:[%s204 + $0x11b0] sm:$0xff]
        %v854 = vld [vmem:[%s204 + $0x11b8] sm:$0xff]
        %v855 = vld [vmem:[%s204 + $0x11c0] sm:$0xff]
        %v856 = vld [vmem:[%s204 + $0x11c8] sm:$0xff]
        %v857 = vld [vmem:[%s204 + $0x11d0] sm:$0xff]
        %v858 = vld [vmem:[%s204 + $0x11d8] sm:$0xff]
        %v859 = vld [vmem:[%s204 + $0x11e0] sm:$0xff]
        %v860 = vld [vmem:[%s204 + $0x11e8] sm:$0xff]
        %v861 = vld [vmem:[%s204 + $0x11f0] sm:$0xff]
        %v862 = vld [vmem:[%s204 + $0x11f8] sm:$0xff]
        %v863 = vld [vmem:[%s204 + $0x1200] sm:$0xff]
        %v864 = vld [vmem:[%s204 + $0x1208] sm:$0xff]
        %v865 = vld [vmem:[%s204 + $0x1210] sm:$0xff]
        %v866 = vld [vmem:[%s204 + $0x1218] sm:$0xff]
        %v867 = vld [vmem:[%s204 + $0x1220] sm:$0xff]
        %v868 = vld [vmem:[%s204 + $0x1228] sm:$0xff]
        %v869 = vld [vmem:[%s204 + $0x1230] sm:$0xff]
        %v870 = vld [vmem:[%s204 + $0x1238] sm:$0xff]
        %v871 = vld [vmem:[%s204 + $0x1240] sm:$0xff]
        %v872 = vld [vmem:[%s204 + $0x1248] sm:$0xff]
        %v873 = vld [vmem:[%s204 + $0x1250] sm:$0xff]
        %v874 = vld [vmem:[%s204 + $0x1258] sm:$0xff]
        %v875 = vld [vmem:[%s204 + $0x1260] sm:$0xff]
        %v876 = vld [vmem:[%s204 + $0x1268] sm:$0xff]
        %v877 = vld [vmem:[%s204 + $0x1270] sm:$0xff]
        %v878 = vld [vmem:[%s204 + $0x1278] sm:$0xff]
        %v879 = vld [vmem:[%s204 + $0x1280] sm:$0xff]
        %v880 = vld [vmem:[%s204 + $0x1288] sm:$0xff]
        %v881 = vld [vmem:[%s204 + $0x1290] sm:$0xff]
        %v882 = vld [vmem:[%s204 + $0x1298] sm:$0xff]
        %v883 = vld [vmem:[%s204 + $0x12a0] sm:$0xff]
        %v884 = vld [vmem:[%s204 + $0x12a8] sm:$0xff]
        %v885 = vld [vmem:[%s204 + $0x12b0] sm:$0xff]
        %v886 = vld [vmem:[%s204 + $0x12b8] sm:$0xff]
        %v887 = vld [vmem:[%s204 + $0x12c0] sm:$0xff]
        %v888 = vld [vmem:[%s204 + $0x12c8] sm:$0xff]
        %v889 = vld [vmem:[%s204 + $0x12d0] sm:$0xff]
        %v890 = vld [vmem:[%s204 + $0x12d8] sm:$0xff]
        %v891 = vld [vmem:[%s204 + $0x12e0] sm:$0xff]
        %v892 = vld [vmem:[%s204 + $0x12e8] sm:$0xff]
        %v893 = vld [vmem:[%s204 + $0x12f0] sm:$0xff]
        %v894 = vld [vmem:[%s204 + $0x12f8] sm:$0xff]
        %v895 = vld [vmem:[%s204 + $0x1300] sm:$0xff]
        %v896 = vld [vmem:[%s204 + $0x1308] sm:$0xff]
        %v897 = vld [vmem:[%s204 + $0x1310] sm:$0xff]
        %v898 = vld [vmem:[%s204 + $0x1318] sm:$0xff]
        %v899 = vld [vmem:[%s204 + $0x1320] sm:$0xff]
        %v900 = vld [vmem:[%s204 + $0x1328] sm:$0xff]
        %v901 = vld [vmem:[%s204 + $0x1330] sm:$0xff]
        %v902 = vld [vmem:[%s204 + $0x1338] sm:$0xff]
        %v903 = vld [vmem:[%s204 + $0x1340] sm:$0xff]
        %v904 = vld [vmem:[%s204 + $0x1348] sm:$0xff]
        %v905 = vld [vmem:[%s204 + $0x1350] sm:$0xff]
        %v906 = vld [vmem:[%s204 + $0x1358] sm:$0xff]
        %v907 = vld [vmem:[%s204 + $0x1360] sm:$0xff]
        %v908 = vld [vmem:[%s204 + $0x1368] sm:$0xff]
        %v909 = vld [vmem:[%s204 + $0x1370] sm:$0xff]
        %v910 = vld [vmem:[%s204 + $0x1378] sm:$0xff]
        %v911 = vld [vmem:[%s204 + $0x1380] sm:$0xff]
        %v912 = vld [vmem:[%s204 + $0x1388] sm:$0xff]
        %v913 = vld [vmem:[%s204 + $0x1390] sm:$0xff]
        %v914 = vld [vmem:[%s204 + $0x1398] sm:$0xff]
        %v915 = vld [vmem:[%s204 + $0x13a0] sm:$0xff]
        %v916 = vld [vmem:[%s204 + $0x13a8] sm:$0xff]
        %v917 = vld [vmem:[%s204 + $0x13b0] sm:$0xff]
        %v918 = vld [vmem:[%s204 + $0x13b8] sm:$0xff]
        %v919 = vld [vmem:[%s204 + $0x13c0] sm:$0xff]
        %v920 = vld [vmem:[%s204 + $0x13c8] sm:$0xff]
        %v921 = vld [vmem:[%s204 + $0x13d0] sm:$0xff]
        %v922 = vld [vmem:[%s204 + $0x13d8] sm:$0xff]
        %v923 = vld [vmem:[%s204 + $0x13e0] sm:$0xff]
        %v924 = vld [vmem:[%s204 + $0x13e8] sm:$0xff]
        %v925 = vld [vmem:[%s204 + $0x13f0] sm:$0xff]
        %v926 = vld [vmem:[%s204 + $0x13f8] sm:$0xff]
        %v927 = vld [vmem:[%s204 + $0x1400] sm:$0xff]
        %v928 = vld [vmem:[%s204 + $0x1408] sm:$0xff]
        %v929 = vld [vmem:[%s204 + $0x1410] sm:$0xff]
        %v930 = vld [vmem:[%s204 + $0x1418] sm:$0xff]
        %v931 = vld [vmem:[%s204 + $0x1420] sm:$0xff]
        %v932 = vld [vmem:[%s204 + $0x1428] sm:$0xff]
        %v933 = vld [vmem:[%s204 + $0x1430] sm:$0xff]
        %v934 = vld [vmem:[%s204 + $0x1438] sm:$0xff]
        %v935 = vld [vmem:[%s204 + $0x1440] sm:$0xff]
        %v936 = vld [vmem:[%s204 + $0x1448] sm:$0xff]
        %v937 = vld [vmem:[%s204 + $0x1450] sm:$0xff]
        %v938 = vld [vmem:[%s204 + $0x1458] sm:$0xff]
        %v939 = vld [vmem:[%s204 + $0x1460] sm:$0xff]
        %v940 = vld [vmem:[%s204 + $0x1468] sm:$0xff]
        %v941 = vld [vmem:[%s204 + $0x1470] sm:$0xff]
        %v942 = vld [vmem:[%s204 + $0x1478] sm:$0xff]
        %v943 = vld [vmem:[%s204 + $0x1480] sm:$0xff]
        %v944 = vld [vmem:[%s204 + $0x1488] sm:$0xff]
        %v945 = vld [vmem:[%s204 + $0x1490] sm:$0xff]
        %v946 = vld [vmem:[%s204 + $0x1498] sm:$0xff]
        %v947 = vld [vmem:[%s204 + $0x14a0] sm:$0xff]
        %v948 = vld [vmem:[%s204 + $0x14a8] sm:$0xff]
        %v949 = vld [vmem:[%s204 + $0x14b0] sm:$0xff]
        %v950 = vld [vmem:[%s204 + $0x14b8] sm:$0xff]
        %v951 = vld [vmem:[%s204 + $0x14c0] sm:$0xff]
        %v952 = vld [vmem:[%s204 + $0x14c8] sm:$0xff]
        %v953 = vld [vmem:[%s204 + $0x14d0] sm:$0xff]
        %v954 = vld [vmem:[%s204 + $0x14d8] sm:$0xff]
        %v955 = vld [vmem:[%s204 + $0x14e0] sm:$0xff]
        %v956 = vld [vmem:[%s204 + $0x14e8] sm:$0xff]
        %v957 = vld [vmem:[%s204 + $0x14f0] sm:$0xff]
        %v958 = vld [vmem:[%s204 + $0x14f8] sm:$0xff]
        %v959 = vld [vmem:[%s204 + $0x1500] sm:$0xff]
        %v960 = vld [vmem:[%s204 + $0x1508] sm:$0xff]
        %v961 = vld [vmem:[%s204 + $0x1510] sm:$0xff]
        %v962 = vld [vmem:[%s204 + $0x1518] sm:$0xff]
        %v963 = vld [vmem:[%s204 + $0x1520] sm:$0xff]
        %v964 = vld [vmem:[%s204 + $0x1528] sm:$0xff]
        %v965 = vld [vmem:[%s204 + $0x1530] sm:$0xff]
        %v966 = vld [vmem:[%s204 + $0x1538] sm:$0xff]
        %v967 = vld [vmem:[%s204 + $0x1540] sm:$0xff]
        %v968 = vld [vmem:[%s204 + $0x1548] sm:$0xff]
        %v969 = vld [vmem:[%s204 + $0x1550] sm:$0xff]
        %v970 = vld [vmem:[%s204 + $0x1558] sm:$0xff]
        %v971 = vld [vmem:[%s204 + $0x1560] sm:$0xff]
        %v972 = vld [vmem:[%s204 + $0x1568] sm:$0xff]
        %v973 = vld [vmem:[%s204 + $0x1570] sm:$0xff]
        %v974 = vld [vmem:[%s204 + $0x1578] sm:$0xff]
        %v975 = vld [vmem:[%s204 + $0x1580] sm:$0xff]
        %v976 = vld [vmem:[%s204 + $0x1588] sm:$0xff]
        %v977 = vld [vmem:[%s204 + $0x1590] sm:$0xff]
        %v978 = vld [vmem:[%s204 + $0x1598] sm:$0xff]
        %v979 = vld [vmem:[%s204 + $0x15a0] sm:$0xff]
        %v980 = vld [vmem:[%s204 + $0x15a8] sm:$0xff]
        %v981 = vld [vmem:[%s204 + $0x15b0] sm:$0xff]
        %v982 = vld [vmem:[%s204 + $0x15b8] sm:$0xff]
        %v983 = vld [vmem:[%s204 + $0x15c0] sm:$0xff]
        %v984 = vld [vmem:[%s204 + $0x15c8] sm:$0xff]
        %v985 = vld [vmem:[%s204 + $0x15d0] sm:$0xff]
        %v986 = vld [vmem:[%s204 + $0x15d8] sm:$0xff]
        %v987 = vld [vmem:[%s204 + $0x15e0] sm:$0xff]
        %v988 = vld [vmem:[%s204 + $0x15e8] sm:$0xff]
        %v989 = vld [vmem:[%s204 + $0x15f0] sm:$0xff]
        %v990 = vld [vmem:[%s204 + $0x15f8] sm:$0xff]
        %v991 = vld [vmem:[%s204 + $0x1600] sm:$0xff]
        %v992 = vld [vmem:[%s204 + $0x1608] sm:$0xff]
        %v993 = vld [vmem:[%s204 + $0x1610] sm:$0xff]
        %v994 = vld [vmem:[%s204 + $0x1618] sm:$0xff]
        %v995 = vld [vmem:[%s204 + $0x1620] sm:$0xff]
        %v996 = vld [vmem:[%s204 + $0x1628] sm:$0xff]
        %v997 = vld [vmem:[%s204 + $0x1630] sm:$0xff]
        %v998 = vld [vmem:[%s204 + $0x1638] sm:$0xff]
        %v999 = vld [vmem:[%s204 + $0x1640] sm:$0xff]
        %v1000 = vld [vmem:[%s204 + $0x1648] sm:$0xff]
        %v1001 = vld [vmem:[%s204 + $0x1650] sm:$0xff]
        %v1002 = vld [vmem:[%s204 + $0x1658] sm:$0xff]
        %v1003 = vld [vmem:[%s204 + $0x1660] sm:$0xff]
        %v1004 = vld [vmem:[%s204 + $0x1668] sm:$0xff]
        %v1005 = vld [vmem:[%s204 + $0x1670] sm:$0xff]
        %v1006 = vld [vmem:[%s204 + $0x1678] sm:$0xff]
        %v1007 = vld [vmem:[%s204 + $0x1680] sm:$0xff]
        %v1008 = vld [vmem:[%s204 + $0x1688] sm:$0xff]
        %v1009 = vld [vmem:[%s204 + $0x1690] sm:$0xff]
        %v1010 = vld [vmem:[%s204 + $0x1698] sm:$0xff]
        %v1011 = vld [vmem:[%s204 + $0x16a0] sm:$0xff]
        %v1012 = vld [vmem:[%s204 + $0x16a8] sm:$0xff]
        %v1013 = vld [vmem:[%s204 + $0x16b0] sm:$0xff]
        %v1014 = vld [vmem:[%s204 + $0x16b8] sm:$0xff]
        %v1015 = vld [vmem:[%s204 + $0x16c0] sm:$0xff]
        %v1016 = vld [vmem:[%s204 + $0x16c8] sm:$0xff]
        %v1017 = vld [vmem:[%s204 + $0x16d0] sm:$0xff]
        %v1018 = vld [vmem:[%s204 + $0x16d8] sm:$0xff]
        %v1019 = vld [vmem:[%s204 + $0x16e0] sm:$0xff]
        %v1020 = vld [vmem:[%s204 + $0x16e8] sm:$0xff]
        %v1021 = vld [vmem:[%s204 + $0x16f0] sm:$0xff]
        %v1022 = vld [vmem:[%s204 + $0x16f8] sm:$0xff]
        %v1023 = vld [vmem:[%s204 + $0x1700] sm:$0xff]
        %v1024 = vld [vmem:[%s204 + $0x1708] sm:$0xff]
        %v1025 = vld [vmem:[%s204 + $0x1710] sm:$0xff]
        %v1026 = vld [vmem:[%s204 + $0x1718] sm:$0xff]
        %v1027 = vld [vmem:[%s204 + $0x1720] sm:$0xff]
        %v1028 = vld [vmem:[%s204 + $0x1728] sm:$0xff]
        %v1029 = vld [vmem:[%s204 + $0x1730] sm:$0xff]
        %v1030 = vld [vmem:[%s204 + $0x1738] sm:$0xff]
        %v1031 = vld [vmem:[%s204 + $0x1740] sm:$0xff]
        %v1032 = vld [vmem:[%s204 + $0x1748] sm:$0xff]
        %v1033 = vld [vmem:[%s204 + $0x1750] sm:$0xff]
        %v1034 = vld [vmem:[%s204 + $0x1758] sm:$0xff]
        %v1035 = vld [vmem:[%s204 + $0x1760] sm:$0xff]
        %v1036 = vld [vmem:[%s204 + $0x1768] sm:$0xff]
        %v1037 = vld [vmem:[%s204 + $0x1770] sm:$0xff]
        %v1038 = vld [vmem:[%s204 + $0x1778] sm:$0xff]
        %v1039 = vld [vmem:[%s204 + $0x1780] sm:$0xff]
        %v1040 = vld [vmem:[%s204 + $0x1788] sm:$0xff]
        %v1041 = vld [vmem:[%s204 + $0x1790] sm:$0xff]
        %v1042 = vld [vmem:[%s204 + $0x1798] sm:$0xff]
        %v1043 = vld [vmem:[%s204 + $0x17a0] sm:$0xff]
        %v1044 = vld [vmem:[%s204 + $0x17a8] sm:$0xff]
        %v1045 = vld [vmem:[%s204 + $0x17b0] sm:$0xff]
        %v1046 = vld [vmem:[%s204 + $0x17b8] sm:$0xff]
        %v1047 = vld [vmem:[%s204 + $0x17c0] sm:$0xff]
        %v1048 = vld [vmem:[%s204 + $0x17c8] sm:$0xff]
        %v1049 = vld [vmem:[%s204 + $0x17d0] sm:$0xff]
        %v1050 = vld [vmem:[%s204 + $0x17d8] sm:$0xff]
        %v1051 = vld [vmem:[%s204 + $0x17e0] sm:$0xff]
        %v1052 = vld [vmem:[%s204 + $0x17e8] sm:$0xff]
        %v1053 = vld [vmem:[%s204 + $0x17f0] sm:$0xff]
        %v1054 = vld [vmem:[%s204 + $0x17f8] sm:$0xff]
        %v1055 = vld [vmem:[%s204 + $0x1800] sm:$0xff]
        %v1056 = vld [vmem:[%s204 + $0x1808] sm:$0xff]
        %v1057 = vld [vmem:[%s204 + $0x1810] sm:$0xff]
        %v1058 = vld [vmem:[%s204 + $0x1818] sm:$0xff]
        %v1059 = vld [vmem:[%s204 + $0x1820] sm:$0xff]
        %v1060 = vld [vmem:[%s204 + $0x1828] sm:$0xff]
        %v1061 = vld [vmem:[%s204 + $0x1830] sm:$0xff]
        %v1062 = vld [vmem:[%s204 + $0x1838] sm:$0xff]
        %v1063 = vld [vmem:[%s204 + $0x1840] sm:$0xff]
        %v1064 = vld [vmem:[%s204 + $0x1848] sm:$0xff]
        %v1065 = vld [vmem:[%s204 + $0x1850] sm:$0xff]
        %v1066 = vld [vmem:[%s204 + $0x1858] sm:$0xff]
        %v1067 = vld [vmem:[%s204 + $0x1860] sm:$0xff]
        %v1068 = vld [vmem:[%s204 + $0x1868] sm:$0xff]
        %v1069 = vld [vmem:[%s204 + $0x1870] sm:$0xff]
        %v1070 = vld [vmem:[%s204 + $0x1878] sm:$0xff]
        %v1071 = vld [vmem:[%s204 + $0x1880] sm:$0xff]
        %v1072 = vld [vmem:[%s204 + $0x1888] sm:$0xff]
        %v1073 = vld [vmem:[%s204 + $0x1890] sm:$0xff]
        %v1074 = vld [vmem:[%s204 + $0x1898] sm:$0xff]
        %v1075 = vld [vmem:[%s204 + $0x18a0] sm:$0xff]
        %v1076 = vld [vmem:[%s204 + $0x18a8] sm:$0xff]
        %v1077 = vld [vmem:[%s204 + $0x18b0] sm:$0xff]
        %v1078 = vld [vmem:[%s204 + $0x18b8] sm:$0xff]
        %v1079 = vld [vmem:[%s204 + $0x18c0] sm:$0xff]
        %v1080 = vld [vmem:[%s204 + $0x18c8] sm:$0xff]
        %v1081 = vld [vmem:[%s204 + $0x18d0] sm:$0xff]
        %v1082 = vld [vmem:[%s204 + $0x18d8] sm:$0xff]
        %v1083 = vld [vmem:[%s204 + $0x18e0] sm:$0xff]
        %v1084 = vld [vmem:[%s204 + $0x18e8] sm:$0xff]
        %v1085 = vld [vmem:[%s204 + $0x18f0] sm:$0xff]
        %v1086 = vld [vmem:[%s204 + $0x18f8] sm:$0xff]
        %v1087 = vld [vmem:[%s204 + $0x1900] sm:$0xff]
        %v1088 = vld [vmem:[%s204 + $0x1908] sm:$0xff]
        %v1089 = vld [vmem:[%s204 + $0x1910] sm:$0xff]
        %v1090 = vld [vmem:[%s204 + $0x1918] sm:$0xff]
        %v1091 = vld [vmem:[%s204 + $0x1920] sm:$0xff]
        %v1092 = vld [vmem:[%s204 + $0x1928] sm:$0xff]
        %v1093 = vld [vmem:[%s204 + $0x1930] sm:$0xff]
        %v1094 = vld [vmem:[%s204 + $0x1938] sm:$0xff]
        %v1095 = vld [vmem:[%s204 + $0x1940] sm:$0xff]
        %v1096 = vld [vmem:[%s204 + $0x1948] sm:$0xff]
        %v1097 = vld [vmem:[%s204 + $0x1950] sm:$0xff]
        %v1098 = vld [vmem:[%s204 + $0x1958] sm:$0xff]
        %v1099 = vld [vmem:[%s204 + $0x1960] sm:$0xff]
        %v1100 = vld [vmem:[%s204 + $0x1968] sm:$0xff]
        %v1101 = vld [vmem:[%s204 + $0x1970] sm:$0xff]
        %v1102 = vld [vmem:[%s204 + $0x1978] sm:$0xff]
        %v1103 = vld [vmem:[%s204 + $0x1980] sm:$0xff]
        %v1104 = vld [vmem:[%s204 + $0x1988] sm:$0xff]
        %v1105 = vld [vmem:[%s204 + $0x1990] sm:$0xff]
        %v1106 = vld [vmem:[%s204 + $0x1998] sm:$0xff]
        %v1107 = vld [vmem:[%s204 + $0x19a0] sm:$0xff]
        %v1108 = vld [vmem:[%s204 + $0x19a8] sm:$0xff]
        %v1109 = vld [vmem:[%s204 + $0x19b0] sm:$0xff]
        %v1110 = vld [vmem:[%s204 + $0x19b8] sm:$0xff]
        %v1111 = vld [vmem:[%s204 + $0x19c0] sm:$0xff]
        %v1112 = vld [vmem:[%s204 + $0x19c8] sm:$0xff]
        %v1113 = vld [vmem:[%s204 + $0x19d0] sm:$0xff]
        %v1114 = vld [vmem:[%s204 + $0x19d8] sm:$0xff]
        %v1115 = vld [vmem:[%s204 + $0x19e0] sm:$0xff]
        %v1116 = vld [vmem:[%s204 + $0x19e8] sm:$0xff]
        %v1117 = vld [vmem:[%s204 + $0x19f0] sm:$0xff]
        %v1118 = vld [vmem:[%s204 + $0x19f8] sm:$0xff]
        %v1119 = vld [vmem:[%s204 + $0x1a00] sm:$0xff]
        %v1120 = vld [vmem:[%s204 + $0x1a08] sm:$0xff]
        %v1121 = vld [vmem:[%s204 + $0x1a10] sm:$0xff]
        %v1122 = vld [vmem:[%s204 + $0x1a18] sm:$0xff]
        %v1123 = vld [vmem:[%s204 + $0x1a20] sm:$0xff]
        %v1124 = vld [vmem:[%s204 + $0x1a28] sm:$0xff]
        %v1125 = vld [vmem:[%s204 + $0x1a30] sm:$0xff]
        %v1126 = vld [vmem:[%s204 + $0x1a38] sm:$0xff]
        %v1127 = vld [vmem:[%s204 + $0x1a40] sm:$0xff]
        %v1128 = vld [vmem:[%s204 + $0x1a48] sm:$0xff]
        %v1129 = vld [vmem:[%s204 + $0x1a50] sm:$0xff]
        %v1130 = vld [vmem:[%s204 + $0x1a58] sm:$0xff]
        %v1131 = vld [vmem:[%s204 + $0x1a60] sm:$0xff]
        %v1132 = vld [vmem:[%s204 + $0x1a68] sm:$0xff]
        %v1133 = vld [vmem:[%s204 + $0x1a70] sm:$0xff]
        %v1134 = vld [vmem:[%s204 + $0x1a78] sm:$0xff]
        %v1135 = vld [vmem:[%s204 + $0x1a80] sm:$0xff]
        %v1136 = vld [vmem:[%s204 + $0x1a88] sm:$0xff]
        %v1137 = vld [vmem:[%s204 + $0x1a90] sm:$0xff]
        %v1138 = vld [vmem:[%s204 + $0x1a98] sm:$0xff]
        %v1139 = vld [vmem:[%s204 + $0x1aa0] sm:$0xff]
        %v1140 = vld [vmem:[%s204 + $0x1aa8] sm:$0xff]
        %v1141 = vld [vmem:[%s204 + $0x1ab0] sm:$0xff]
        %v1142 = vld [vmem:[%s204 + $0x1ab8] sm:$0xff]
        %v1143 = vld [vmem:[%s204 + $0x1ac0] sm:$0xff]
        %v1144 = vld [vmem:[%s204 + $0x1ac8] sm:$0xff]
        %v1145 = vld [vmem:[%s204 + $0x1ad0] sm:$0xff]
        %v1146 = vld [vmem:[%s204 + $0x1ad8] sm:$0xff]
        %v1147 = vld [vmem:[%s204 + $0x1ae0] sm:$0xff]
        %v1148 = vld [vmem:[%s204 + $0x1ae8] sm:$0xff]
        %v1149 = vld [vmem:[%s204 + $0x1af0] sm:$0xff]
        %v1150 = vld [vmem:[%s204 + $0x1af8] sm:$0xff]
        %v1151 = vld [vmem:[%s204 + $0x1b00] sm:$0xff]
        %v1152 = vld [vmem:[%s204 + $0x1b08] sm:$0xff]
        %v1153 = vld [vmem:[%s204 + $0x1b10] sm:$0xff]
        %v1154 = vld [vmem:[%s204 + $0x1b18] sm:$0xff]
        %v1155 = vld [vmem:[%s204 + $0x1b20] sm:$0xff]
        %v1156 = vld [vmem:[%s204 + $0x1b28] sm:$0xff]
        %v1157 = vld [vmem:[%s204 + $0x1b30] sm:$0xff]
        %v1158 = vld [vmem:[%s204 + $0x1b38] sm:$0xff]
        %v1159 = vld [vmem:[%s204 + $0x1b40] sm:$0xff]
        %v1160 = vld [vmem:[%s204 + $0x1b48] sm:$0xff]
        %v1161 = vld [vmem:[%s204 + $0x1b50] sm:$0xff]
        %v1162 = vld [vmem:[%s204 + $0x1b58] sm:$0xff]
        %v1163 = vld [vmem:[%s204 + $0x1b60] sm:$0xff]
        %v1164 = vld [vmem:[%s204 + $0x1b68] sm:$0xff]
        %v1165 = vld [vmem:[%s204 + $0x1b70] sm:$0xff]
        %v1166 = vld [vmem:[%s204 + $0x1b78] sm:$0xff]
        %v1167 = vld [vmem:[%s204 + $0x1b80] sm:$0xff]
        %v1168 = vld [vmem:[%s204 + $0x1b88] sm:$0xff]
        %v1169 = vld [vmem:[%s204 + $0x1b90] sm:$0xff]
        %v1170 = vld [vmem:[%s204 + $0x1b98] sm:$0xff]
        %v1171 = vld [vmem:[%s204 + $0x1ba0] sm:$0xff]
        %v1172 = vld [vmem:[%s204 + $0x1ba8] sm:$0xff]
        %v1173 = vld [vmem:[%s204 + $0x1bb0] sm:$0xff]
        %v1174 = vld [vmem:[%s204 + $0x1bb8] sm:$0xff]
        %v1175 = vld [vmem:[%s204 + $0x1bc0] sm:$0xff]
        %v1176 = vld [vmem:[%s204 + $0x1bc8] sm:$0xff]
        %v1177 = vld [vmem:[%s204 + $0x1bd0] sm:$0xff]
        %v1178 = vld [vmem:[%s204 + $0x1bd8] sm:$0xff]
        %v1179 = vld [vmem:[%s204 + $0x1be0] sm:$0xff]
        %v1180 = vld [vmem:[%s204 + $0x1be8] sm:$0xff]
        %v1181 = vld [vmem:[%s204 + $0x1bf0] sm:$0xff]
        %v1182 = vld [vmem:[%s204 + $0x1bf8] sm:$0xff]
        %v1183 = vld [vmem:[%s204 + $0x1c00] sm:$0xff]
        %v1184 = vld [vmem:[%s204 + $0x1c08] sm:$0xff]
        %v1185 = vld [vmem:[%s204 + $0x1c10] sm:$0xff]
        %v1186 = vld [vmem:[%s204 + $0x1c18] sm:$0xff]
        %v1187 = vld [vmem:[%s204 + $0x1c20] sm:$0xff]
        %v1188 = vld [vmem:[%s204 + $0x1c28] sm:$0xff]
        %v1189 = vld [vmem:[%s204 + $0x1c30] sm:$0xff]
        %v1190 = vld [vmem:[%s204 + $0x1c38] sm:$0xff]
        %v1191 = vld [vmem:[%s204 + $0x1c40] sm:$0xff]
        %v1192 = vld [vmem:[%s204 + $0x1c48] sm:$0xff]
        %v1193 = vld [vmem:[%s204 + $0x1c50] sm:$0xff]
        %v1194 = vld [vmem:[%s204 + $0x1c58] sm:$0xff]
        %v1195 = vld [vmem:[%s204 + $0x1c60] sm:$0xff]
        %v1196 = vld [vmem:[%s204 + $0x1c68] sm:$0xff]
        %v1197 = vld [vmem:[%s204 + $0x1c70] sm:$0xff]
        %v1198 = vld [vmem:[%s204 + $0x1c78] sm:$0xff]
        %v1199 = vld [vmem:[%s204 + $0x1c80] sm:$0xff]
        %v1200 = vld [vmem:[%s204 + $0x1c88] sm:$0xff]
        %v1201 = vld [vmem:[%s204 + $0x1c90] sm:$0xff]
        %v1202 = vld [vmem:[%s204 + $0x1c98] sm:$0xff]
        %v1203 = vld [vmem:[%s204 + $0x1ca0] sm:$0xff]
        %v1204 = vld [vmem:[%s204 + $0x1ca8] sm:$0xff]
        %v1205 = vld [vmem:[%s204 + $0x1cb0] sm:$0xff]
        %v1206 = vld [vmem:[%s204 + $0x1cb8] sm:$0xff]
        %v1207 = vld [vmem:[%s204 + $0x1cc0] sm:$0xff]
        %v1208 = vld [vmem:[%s204 + $0x1cc8] sm:$0xff]
        %v1209 = vld [vmem:[%s204 + $0x1cd0] sm:$0xff]
        %v1210 = vld [vmem:[%s204 + $0x1cd8] sm:$0xff]
        %v1211 = vld [vmem:[%s204 + $0x1ce0] sm:$0xff]
        %v1212 = vld [vmem:[%s204 + $0x1ce8] sm:$0xff]
        %v1213 = vld [vmem:[%s204 + $0x1cf0] sm:$0xff]
        %v1214 = vld [vmem:[%s204 + $0x1cf8] sm:$0xff]
        %v1215 = vld [vmem:[%s204 + $0x1d00] sm:$0xff]
        %v1216 = vld [vmem:[%s204 + $0x1d08] sm:$0xff]
        %v1217 = vld [vmem:[%s204 + $0x1d10] sm:$0xff]
        %v1218 = vld [vmem:[%s204 + $0x1d18] sm:$0xff]
        %v1219 = vld [vmem:[%s204 + $0x1d20] sm:$0xff]
        %v1220 = vld [vmem:[%s204 + $0x1d28] sm:$0xff]
        %v1221 = vld [vmem:[%s204 + $0x1d30] sm:$0xff]
        %v1222 = vld [vmem:[%s204 + $0x1d38] sm:$0xff]
        %v1223 = vld [vmem:[%s204 + $0x1d40] sm:$0xff]
        %v1224 = vld [vmem:[%s204 + $0x1d48] sm:$0xff]
        %v1225 = vld [vmem:[%s204 + $0x1d50] sm:$0xff]
        %v1226 = vld [vmem:[%s204 + $0x1d58] sm:$0xff]
        %v1227 = vld [vmem:[%s204 + $0x1d60] sm:$0xff]
        %v1228 = vld [vmem:[%s204 + $0x1d68] sm:$0xff]
        %v1229 = vld [vmem:[%s204 + $0x1d70] sm:$0xff]
        %v1230 = vld [vmem:[%s204 + $0x1d78] sm:$0xff]
        %v1231 = vld [vmem:[%s204 + $0x1d80] sm:$0xff]
        %v1232 = vld [vmem:[%s204 + $0x1d88] sm:$0xff]
        %v1233 = vld [vmem:[%s204 + $0x1d90] sm:$0xff]
        %v1234 = vld [vmem:[%s204 + $0x1d98] sm:$0xff]
        %v1235 = vld [vmem:[%s204 + $0x1da0] sm:$0xff]
        %v1236 = vld [vmem:[%s204 + $0x1da8] sm:$0xff]
        %v1237 = vld [vmem:[%s204 + $0x1db0] sm:$0xff]
        %v1238 = vld [vmem:[%s204 + $0x1db8] sm:$0xff]
        %v1239 = vld [vmem:[%s204 + $0x1dc0] sm:$0xff]
        %v1240 = vld [vmem:[%s204 + $0x1dc8] sm:$0xff]
        %v1241 = vld [vmem:[%s204 + $0x1dd0] sm:$0xff]
        %v1242 = vld [vmem:[%s204 + $0x1dd8] sm:$0xff]
        %v1243 = vld [vmem:[%s204 + $0x1de0] sm:$0xff]
        %v1244 = vld [vmem:[%s204 + $0x1de8] sm:$0xff]
        %v1245 = vld [vmem:[%s204 + $0x1df0] sm:$0xff]
        %v1246 = vld [vmem:[%s204 + $0x1df8] sm:$0xff]
        %v1247 = vld [vmem:[%s204 + $0x1e00] sm:$0xff]
        %v1248 = vld [vmem:[%s204 + $0x1e08] sm:$0xff]
        %v1249 = vld [vmem:[%s204 + $0x1e10] sm:$0xff]
        %v1250 = vld [vmem:[%s204 + $0x1e18] sm:$0xff]
        %v1251 = vld [vmem:[%s204 + $0x1e20] sm:$0xff]
        %v1252 = vld [vmem:[%s204 + $0x1e28] sm:$0xff]
        %v1253 = vld [vmem:[%s204 + $0x1e30] sm:$0xff]
        %v1254 = vld [vmem:[%s204 + $0x1e38] sm:$0xff]
        %v1255 = vld [vmem:[%s204 + $0x1e40] sm:$0xff]
        %v1256 = vld [vmem:[%s204 + $0x1e48] sm:$0xff]
        %v1257 = vld [vmem:[%s204 + $0x1e50] sm:$0xff]
        %v1258 = vld [vmem:[%s204 + $0x1e58] sm:$0xff]
        %v1259 = vld [vmem:[%s204 + $0x1e60] sm:$0xff]
        %v1260 = vld [vmem:[%s204 + $0x1e68] sm:$0xff]
        %v1261 = vld [vmem:[%s204 + $0x1e70] sm:$0xff]
        %v1262 = vld [vmem:[%s204 + $0x1e78] sm:$0xff]
        %v1263 = vld [vmem:[%s204 + $0x1e80] sm:$0xff]
        %v1264 = vld [vmem:[%s204 + $0x1e88] sm:$0xff]
        %v1265 = vld [vmem:[%s204 + $0x1e90] sm:$0xff]
        %v1266 = vld [vmem:[%s204 + $0x1e98] sm:$0xff]
        %v1267 = vld [vmem:[%s204 + $0x1ea0] sm:$0xff]
        %v1268 = vld [vmem:[%s204 + $0x1ea8] sm:$0xff]
        %v1269 = vld [vmem:[%s204 + $0x1eb0] sm:$0xff]
        %v1270 = vld [vmem:[%s204 + $0x1eb8] sm:$0xff]
        %v1271 = vld [vmem:[%s204 + $0x1ec0] sm:$0xff]
        %v1272 = vld [vmem:[%s204 + $0x1ec8] sm:$0xff]
        %v1273 = vld [vmem:[%s204 + $0x1ed0] sm:$0xff]
        %v1274 = vld [vmem:[%s204 + $0x1ed8] sm:$0xff]
        %v1275 = vld [vmem:[%s204 + $0x1ee0] sm:$0xff]
        %v1276 = vld [vmem:[%s204 + $0x1ee8] sm:$0xff]
        %v1277 = vld [vmem:[%s204 + $0x1ef0] sm:$0xff]
        %v1278 = vld [vmem:[%s204 + $0x1ef8] sm:$0xff]
        %v1279 = vld [vmem:[%s204 + $0x1f00] sm:$0xff]
        %v1280 = vld [vmem:[%s204 + $0x1f08] sm:$0xff]
        %v1281 = vld [vmem:[%s204 + $0x1f10] sm:$0xff]
        %v1282 = vld [vmem:[%s204 + $0x1f18] sm:$0xff]
        %v1283 = vld [vmem:[%s204 + $0x1f20] sm:$0xff]
        %v1284 = vld [vmem:[%s204 + $0x1f28] sm:$0xff]
        %v1285 = vld [vmem:[%s204 + $0x1f30] sm:$0xff]
        %v1286 = vld [vmem:[%s204 + $0x1f38] sm:$0xff]
        %v1287 = vld [vmem:[%s204 + $0x1f40] sm:$0xff]
        %v1288 = vld [vmem:[%s204 + $0x1f48] sm:$0xff]
        %v1289 = vld [vmem:[%s204 + $0x1f50] sm:$0xff]
        %v1290 = vld [vmem:[%s204 + $0x1f58] sm:$0xff]
        %v1291 = vld [vmem:[%s204 + $0x1f60] sm:$0xff]
        %v1292 = vld [vmem:[%s204 + $0x1f68] sm:$0xff]
        %v1293 = vld [vmem:[%s204 + $0x1f70] sm:$0xff]
        %v1294 = vld [vmem:[%s204 + $0x1f78] sm:$0xff]
        %v1295 = vld [vmem:[%s204 + $0x1f80] sm:$0xff]
        %v1296 = vld [vmem:[%s204 + $0x1f88] sm:$0xff]
        %v1297 = vld [vmem:[%s204 + $0x1f90] sm:$0xff]
        %v1298 = vld [vmem:[%s204 + $0x1f98] sm:$0xff]
        %v1299 = vld [vmem:[%s204 + $0x1fa0] sm:$0xff]
        %v1300 = vld [vmem:[%s204 + $0x1fa8] sm:$0xff]
        %v1301 = vld [vmem:[%s204 + $0x1fb0] sm:$0xff]
        %v1302 = vld [vmem:[%s204 + $0x1fb8] sm:$0xff]
        %v1303 = vld [vmem:[%s204 + $0x1fc0] sm:$0xff]
        %v1304 = vld [vmem:[%s204 + $0x1fc8] sm:$0xff]
        %v1305 = vld [vmem:[%s204 + $0x1fd0] sm:$0xff]
        %v1306 = vld [vmem:[%s204 + $0x1fd8] sm:$0xff]
        %v1307 = vld [vmem:[%s204 + $0x1fe0] sm:$0xff]
        %v1308 = vld [vmem:[%s204 + $0x1fe8] sm:$0xff]
        %v1309 = vld [vmem:[%s204 + $0x1ff0] sm:$0xff]
        %v1310 = vld [vmem:[%s204 + $0x1ff8] sm:$0xff]
        %v1327 = vunpack.c.l.b16 %v271
        %v1328 = vunpack.c.h.b16 %v271
        %v1329 = vunpack.c.l.b16 %v272
        %v1330 = vunpack.c.h.b16 %v272
        %v1331 = vunpack.c.l.b16 %v273
        %v1332 = vunpack.c.h.b16 %v273
        %v1333 = vunpack.c.l.b16 %v274
        %v1334 = vunpack.c.h.b16 %v274
        %v1335 = vunpack.c.l.b16 %v275
        %v1336 = vunpack.c.h.b16 %v275
        %v1337 = vunpack.c.l.b16 %v276
        %v1338 = vunpack.c.h.b16 %v276
        %v1339 = vunpack.c.l.b16 %v277
        %v1340 = vunpack.c.h.b16 %v277
        %v1341 = vunpack.c.l.b16 %v278
        %v1342 = vunpack.c.h.b16 %v278
        %v1343 = vunpack.c.l.b16 %v279
        %v1344 = vunpack.c.h.b16 %v279
        %v1345 = vunpack.c.l.b16 %v280
        %v1346 = vunpack.c.h.b16 %v280
        %v1347 = vunpack.c.l.b16 %v281
        %v1348 = vunpack.c.h.b16 %v281
        %v1349 = vunpack.c.l.b16 %v282
        %v1350 = vunpack.c.h.b16 %v282
        %v1351 = vunpack.c.l.b16 %v283
        %v1352 = vunpack.c.h.b16 %v283
        %v1353 = vunpack.c.l.b16 %v284
        %v1354 = vunpack.c.h.b16 %v284
        %v1355 = vunpack.c.l.b16 %v285
        %v1356 = vunpack.c.h.b16 %v285
        %v1357 = vunpack.c.l.b16 %v286
        %v1358 = vunpack.c.h.b16 %v286
        %v1359 = vpack.c.b16 %v1343, %v1327
        %v1360 = vpack.c.b16 %v1344, %v1328
        %v1361 = vpack.c.b16 %v1345, %v1329
        %v1362 = vpack.c.b16 %v1346, %v1330
        %v1363 = vpack.c.b16 %v1347, %v1331
        %v1364 = vpack.c.b16 %v1348, %v1332
        %v1365 = vpack.c.b16 %v1349, %v1333
        %v1366 = vpack.c.b16 %v1350, %v1334
        %v1367 = vpack.c.b16 %v1351, %v1335
        %v1368 = vpack.c.b16 %v1352, %v1336
        %v1369 = vpack.c.b16 %v1353, %v1337
        %v1370 = vpack.c.b16 %v1354, %v1338
        %v1371 = vpack.c.b16 %v1355, %v1339
        %v1372 = vpack.c.b16 %v1356, %v1340
        %v1373 = vpack.c.b16 %v1357, %v1341
        %v1374 = vpack.c.b16 %v1358, %v1342
        %v2415 = vunpack.c.l.b16 %v287
        %v2416 = vunpack.c.h.b16 %v287
        %v2417 = vunpack.c.l.b16 %v288
        %v2418 = vunpack.c.h.b16 %v288
        %v2419 = vunpack.c.l.b16 %v289
        %v2420 = vunpack.c.h.b16 %v289
        %v2421 = vunpack.c.l.b16 %v290
        %v2422 = vunpack.c.h.b16 %v290
        %v2423 = vunpack.c.l.b16 %v291
        %v2424 = vunpack.c.h.b16 %v291
        %v2425 = vunpack.c.l.b16 %v292
        %v2426 = vunpack.c.h.b16 %v292
        %v2427 = vunpack.c.l.b16 %v293
        %v2428 = vunpack.c.h.b16 %v293
        %v2429 = vunpack.c.l.b16 %v294
        %v2430 = vunpack.c.h.b16 %v294
        %v2431 = vunpack.c.l.b16 %v295
        %v2432 = vunpack.c.h.b16 %v295
        %v2433 = vunpack.c.l.b16 %v296
        %v2434 = vunpack.c.h.b16 %v296
        %v2435 = vunpack.c.l.b16 %v297
        %v2436 = vunpack.c.h.b16 %v297
        %v2437 = vunpack.c.l.b16 %v298
        %v2438 = vunpack.c.h.b16 %v298
        %v2439 = vunpack.c.l.b16 %v299
        %v2440 = vunpack.c.h.b16 %v299
        %v2441 = vunpack.c.l.b16 %v300
        %v2442 = vunpack.c.h.b16 %v300
        %v2443 = vunpack.c.l.b16 %v301
        %v2444 = vunpack.c.h.b16 %v301
        %v2445 = vunpack.c.l.b16 %v302
        %v2446 = vunpack.c.h.b16 %v302
        %v2447 = vunpack.c.l.b16 %v303
        %v2448 = vunpack.c.h.b16 %v303
        %v2449 = vunpack.c.l.b16 %v304
        %v2450 = vunpack.c.h.b16 %v304
        %v2451 = vunpack.c.l.b16 %v305
        %v2452 = vunpack.c.h.b16 %v305
        %v2453 = vunpack.c.l.b16 %v306
        %v2454 = vunpack.c.h.b16 %v306
        %v2455 = vunpack.c.l.b16 %v307
        %v2456 = vunpack.c.h.b16 %v307
        %v2457 = vunpack.c.l.b16 %v308
        %v2458 = vunpack.c.h.b16 %v308
        %v2459 = vunpack.c.l.b16 %v309
        %v2460 = vunpack.c.h.b16 %v309
        %v2461 = vunpack.c.l.b16 %v310
        %v2462 = vunpack.c.h.b16 %v310
        %v2463 = vunpack.c.l.b16 %v311
        %v2464 = vunpack.c.h.b16 %v311
        %v2465 = vunpack.c.l.b16 %v312
        %v2466 = vunpack.c.h.b16 %v312
        %v2467 = vunpack.c.l.b16 %v313
        %v2468 = vunpack.c.h.b16 %v313
        %v2469 = vunpack.c.l.b16 %v314
        %v2470 = vunpack.c.h.b16 %v314
        %v2471 = vunpack.c.l.b16 %v315
        %v2472 = vunpack.c.h.b16 %v315
        %v2473 = vunpack.c.l.b16 %v316
        %v2474 = vunpack.c.h.b16 %v316
        %v2475 = vunpack.c.l.b16 %v317
        %v2476 = vunpack.c.h.b16 %v317
        %v2477 = vunpack.c.l.b16 %v318
        %v2478 = vunpack.c.h.b16 %v318
        %v2479 = vunpack.c.l.b16 %v319
        %v2480 = vunpack.c.h.b16 %v319
        %v2481 = vunpack.c.l.b16 %v320
        %v2482 = vunpack.c.h.b16 %v320
        %v2483 = vunpack.c.l.b16 %v321
        %v2484 = vunpack.c.h.b16 %v321
        %v2485 = vunpack.c.l.b16 %v322
        %v2486 = vunpack.c.h.b16 %v322
        %v2487 = vunpack.c.l.b16 %v323
        %v2488 = vunpack.c.h.b16 %v323
        %v2489 = vunpack.c.l.b16 %v324
        %v2490 = vunpack.c.h.b16 %v324
        %v2491 = vunpack.c.l.b16 %v325
        %v2492 = vunpack.c.h.b16 %v325
        %v2493 = vunpack.c.l.b16 %v326
        %v2494 = vunpack.c.h.b16 %v326
        %v2495 = vunpack.c.l.b16 %v327
        %v2496 = vunpack.c.h.b16 %v327
        %v2497 = vunpack.c.l.b16 %v328
        %v2498 = vunpack.c.h.b16 %v328
        %v2499 = vunpack.c.l.b16 %v329
        %v2500 = vunpack.c.h.b16 %v329
        %v2501 = vunpack.c.l.b16 %v330
        %v2502 = vunpack.c.h.b16 %v330
        %v2503 = vunpack.c.l.b16 %v331
        %v2504 = vunpack.c.h.b16 %v331
        %v2505 = vunpack.c.l.b16 %v332
        %v2506 = vunpack.c.h.b16 %v332
        %v2507 = vunpack.c.l.b16 %v333
        %v2508 = vunpack.c.h.b16 %v333
        %v2509 = vunpack.c.l.b16 %v334
        %v2510 = vunpack.c.h.b16 %v334
        %v2511 = vunpack.c.l.b16 %v335
        %v2512 = vunpack.c.h.b16 %v335
        %v2513 = vunpack.c.l.b16 %v336
        %v2514 = vunpack.c.h.b16 %v336
        %v2515 = vunpack.c.l.b16 %v337
        %v2516 = vunpack.c.h.b16 %v337
        %v2517 = vunpack.c.l.b16 %v338
        %v2518 = vunpack.c.h.b16 %v338
        %v2519 = vunpack.c.l.b16 %v339
        %v2520 = vunpack.c.h.b16 %v339
        %v2521 = vunpack.c.l.b16 %v340
        %v2522 = vunpack.c.h.b16 %v340
        %v2523 = vunpack.c.l.b16 %v341
        %v2524 = vunpack.c.h.b16 %v341
        %v2525 = vunpack.c.l.b16 %v342
        %v2526 = vunpack.c.h.b16 %v342
        %v2527 = vunpack.c.l.b16 %v343
        %v2528 = vunpack.c.h.b16 %v343
        %v2529 = vunpack.c.l.b16 %v344
        %v2530 = vunpack.c.h.b16 %v344
        %v2531 = vunpack.c.l.b16 %v345
        %v2532 = vunpack.c.h.b16 %v345
        %v2533 = vunpack.c.l.b16 %v346
        %v2534 = vunpack.c.h.b16 %v346
        %v2535 = vunpack.c.l.b16 %v347
        %v2536 = vunpack.c.h.b16 %v347
        %v2537 = vunpack.c.l.b16 %v348
        %v2538 = vunpack.c.h.b16 %v348
        %v2539 = vunpack.c.l.b16 %v349
        %v2540 = vunpack.c.h.b16 %v349
        %v2541 = vunpack.c.l.b16 %v350
        %v2542 = vunpack.c.h.b16 %v350
        %v2543 = vunpack.c.l.b16 %v351
        %v2544 = vunpack.c.h.b16 %v351
        %v2545 = vunpack.c.l.b16 %v352
        %v2546 = vunpack.c.h.b16 %v352
        %v2547 = vunpack.c.l.b16 %v353
        %v2548 = vunpack.c.h.b16 %v353
        %v2549 = vunpack.c.l.b16 %v354
        %v2550 = vunpack.c.h.b16 %v354
        %v2551 = vunpack.c.l.b16 %v355
        %v2552 = vunpack.c.h.b16 %v355
        %v2553 = vunpack.c.l.b16 %v356
        %v2554 = vunpack.c.h.b16 %v356
        %v2555 = vunpack.c.l.b16 %v357
        %v2556 = vunpack.c.h.b16 %v357
        %v2557 = vunpack.c.l.b16 %v358
        %v2558 = vunpack.c.h.b16 %v358
        %v2559 = vunpack.c.l.b16 %v359
        %v2560 = vunpack.c.h.b16 %v359
        %v2561 = vunpack.c.l.b16 %v360
        %v2562 = vunpack.c.h.b16 %v360
        %v2563 = vunpack.c.l.b16 %v361
        %v2564 = vunpack.c.h.b16 %v361
        %v2565 = vunpack.c.l.b16 %v362
        %v2566 = vunpack.c.h.b16 %v362
        %v2567 = vunpack.c.l.b16 %v363
        %v2568 = vunpack.c.h.b16 %v363
        %v2569 = vunpack.c.l.b16 %v364
        %v2570 = vunpack.c.h.b16 %v364
        %v2571 = vunpack.c.l.b16 %v365
        %v2572 = vunpack.c.h.b16 %v365
        %v2573 = vunpack.c.l.b16 %v366
        %v2574 = vunpack.c.h.b16 %v366
        %v2575 = vunpack.c.l.b16 %v367
        %v2576 = vunpack.c.h.b16 %v367
        %v2577 = vunpack.c.l.b16 %v368
        %v2578 = vunpack.c.h.b16 %v368
        %v2579 = vunpack.c.l.b16 %v369
        %v2580 = vunpack.c.h.b16 %v369
        %v2581 = vunpack.c.l.b16 %v370
        %v2582 = vunpack.c.h.b16 %v370
        %v2583 = vunpack.c.l.b16 %v371
        %v2584 = vunpack.c.h.b16 %v371
        %v2585 = vunpack.c.l.b16 %v372
        %v2586 = vunpack.c.h.b16 %v372
        %v2587 = vunpack.c.l.b16 %v373
        %v2588 = vunpack.c.h.b16 %v373
        %v2589 = vunpack.c.l.b16 %v374
        %v2590 = vunpack.c.h.b16 %v374
        %v2591 = vunpack.c.l.b16 %v375
        %v2592 = vunpack.c.h.b16 %v375
        %v2593 = vunpack.c.l.b16 %v376
        %v2594 = vunpack.c.h.b16 %v376
        %v2595 = vunpack.c.l.b16 %v377
        %v2596 = vunpack.c.h.b16 %v377
        %v2597 = vunpack.c.l.b16 %v378
        %v2598 = vunpack.c.h.b16 %v378
        %v2599 = vunpack.c.l.b16 %v379
        %v2600 = vunpack.c.h.b16 %v379
        %v2601 = vunpack.c.l.b16 %v380
        %v2602 = vunpack.c.h.b16 %v380
        %v2603 = vunpack.c.l.b16 %v381
        %v2604 = vunpack.c.h.b16 %v381
        %v2605 = vunpack.c.l.b16 %v382
        %v2606 = vunpack.c.h.b16 %v382
        %v2607 = vunpack.c.l.b16 %v383
        %v2608 = vunpack.c.h.b16 %v383
        %v2609 = vunpack.c.l.b16 %v384
        %v2610 = vunpack.c.h.b16 %v384
        %v2611 = vunpack.c.l.b16 %v385
        %v2612 = vunpack.c.h.b16 %v385
        %v2613 = vunpack.c.l.b16 %v386
        %v2614 = vunpack.c.h.b16 %v386
        %v2615 = vunpack.c.l.b16 %v387
        %v2616 = vunpack.c.h.b16 %v387
        %v2617 = vunpack.c.l.b16 %v388
        %v2618 = vunpack.c.h.b16 %v388
        %v2619 = vunpack.c.l.b16 %v389
        %v2620 = vunpack.c.h.b16 %v389
        %v2621 = vunpack.c.l.b16 %v390
        %v2622 = vunpack.c.h.b16 %v390
        %v2623 = vunpack.c.l.b16 %v391
        %v2624 = vunpack.c.h.b16 %v391
        %v2625 = vunpack.c.l.b16 %v392
        %v2626 = vunpack.c.h.b16 %v392
        %v2627 = vunpack.c.l.b16 %v393
        %v2628 = vunpack.c.h.b16 %v393
        %v2629 = vunpack.c.l.b16 %v394
        %v2630 = vunpack.c.h.b16 %v394
        %v2631 = vunpack.c.l.b16 %v395
        %v2632 = vunpack.c.h.b16 %v395
        %v2633 = vunpack.c.l.b16 %v396
        %v2634 = vunpack.c.h.b16 %v396
        %v2635 = vunpack.c.l.b16 %v397
        %v2636 = vunpack.c.h.b16 %v397
        %v2637 = vunpack.c.l.b16 %v398
        %v2638 = vunpack.c.h.b16 %v398
        %v2639 = vunpack.c.l.b16 %v399
        %v2640 = vunpack.c.h.b16 %v399
        %v2641 = vunpack.c.l.b16 %v400
        %v2642 = vunpack.c.h.b16 %v400
        %v2643 = vunpack.c.l.b16 %v401
        %v2644 = vunpack.c.h.b16 %v401
        %v2645 = vunpack.c.l.b16 %v402
        %v2646 = vunpack.c.h.b16 %v402
        %v2647 = vunpack.c.l.b16 %v403
        %v2648 = vunpack.c.h.b16 %v403
        %v2649 = vunpack.c.l.b16 %v404
        %v2650 = vunpack.c.h.b16 %v404
        %v2651 = vunpack.c.l.b16 %v405
        %v2652 = vunpack.c.h.b16 %v405
        %v2653 = vunpack.c.l.b16 %v406
        %v2654 = vunpack.c.h.b16 %v406
        %v2655 = vunpack.c.l.b16 %v407
        %v2656 = vunpack.c.h.b16 %v407
        %v2657 = vunpack.c.l.b16 %v408
        %v2658 = vunpack.c.h.b16 %v408
        %v2659 = vunpack.c.l.b16 %v409
        %v2660 = vunpack.c.h.b16 %v409
        %v2661 = vunpack.c.l.b16 %v410
        %v2662 = vunpack.c.h.b16 %v410
        %v2663 = vunpack.c.l.b16 %v411
        %v2664 = vunpack.c.h.b16 %v411
        %v2665 = vunpack.c.l.b16 %v412
        %v2666 = vunpack.c.h.b16 %v412
        %v2667 = vunpack.c.l.b16 %v413
        %v2668 = vunpack.c.h.b16 %v413
        %v2669 = vunpack.c.l.b16 %v414
        %v2670 = vunpack.c.h.b16 %v414
        %v2671 = vunpack.c.l.b16 %v415
        %v2672 = vunpack.c.h.b16 %v415
        %v2673 = vunpack.c.l.b16 %v416
        %v2674 = vunpack.c.h.b16 %v416
        %v2675 = vunpack.c.l.b16 %v417
        %v2676 = vunpack.c.h.b16 %v417
        %v2677 = vunpack.c.l.b16 %v418
        %v2678 = vunpack.c.h.b16 %v418
        %v2679 = vunpack.c.l.b16 %v419
        %v2680 = vunpack.c.h.b16 %v419
        %v2681 = vunpack.c.l.b16 %v420
        %v2682 = vunpack.c.h.b16 %v420
        %v2683 = vunpack.c.l.b16 %v421
        %v2684 = vunpack.c.h.b16 %v421
        %v2685 = vunpack.c.l.b16 %v422
        %v2686 = vunpack.c.h.b16 %v422
        %v2687 = vunpack.c.l.b16 %v423
        %v2688 = vunpack.c.h.b16 %v423
        %v2689 = vunpack.c.l.b16 %v424
        %v2690 = vunpack.c.h.b16 %v424
        %v2691 = vunpack.c.l.b16 %v425
        %v2692 = vunpack.c.h.b16 %v425
        %v2693 = vunpack.c.l.b16 %v426
        %v2694 = vunpack.c.h.b16 %v426
        %v2695 = vunpack.c.l.b16 %v427
        %v2696 = vunpack.c.h.b16 %v427
        %v2697 = vunpack.c.l.b16 %v428
        %v2698 = vunpack.c.h.b16 %v428
        %v2699 = vunpack.c.l.b16 %v429
        %v2700 = vunpack.c.h.b16 %v429
        %v2701 = vunpack.c.l.b16 %v430
        %v2702 = vunpack.c.h.b16 %v430
        %v2703 = vunpack.c.l.b16 %v431
        %v2704 = vunpack.c.h.b16 %v431
        %v2705 = vunpack.c.l.b16 %v432
        %v2706 = vunpack.c.h.b16 %v432
        %v2707 = vunpack.c.l.b16 %v433
        %v2708 = vunpack.c.h.b16 %v433
        %v2709 = vunpack.c.l.b16 %v434
        %v2710 = vunpack.c.h.b16 %v434
        %v2711 = vunpack.c.l.b16 %v435
        %v2712 = vunpack.c.h.b16 %v435
        %v2713 = vunpack.c.l.b16 %v436
        %v2714 = vunpack.c.h.b16 %v436
        %v2715 = vunpack.c.l.b16 %v437
        %v2716 = vunpack.c.h.b16 %v437
        %v2717 = vunpack.c.l.b16 %v438
        %v2718 = vunpack.c.h.b16 %v438
        %v2719 = vunpack.c.l.b16 %v439
        %v2720 = vunpack.c.h.b16 %v439
        %v2721 = vunpack.c.l.b16 %v440
        %v2722 = vunpack.c.h.b16 %v440
        %v2723 = vunpack.c.l.b16 %v441
        %v2724 = vunpack.c.h.b16 %v441
        %v2725 = vunpack.c.l.b16 %v442
        %v2726 = vunpack.c.h.b16 %v442
        %v2727 = vunpack.c.l.b16 %v443
        %v2728 = vunpack.c.h.b16 %v443
        %v2729 = vunpack.c.l.b16 %v444
        %v2730 = vunpack.c.h.b16 %v444
        %v2731 = vunpack.c.l.b16 %v445
        %v2732 = vunpack.c.h.b16 %v445
        %v2733 = vunpack.c.l.b16 %v446
        %v2734 = vunpack.c.h.b16 %v446
        %v2735 = vunpack.c.l.b16 %v447
        %v2736 = vunpack.c.h.b16 %v447
        %v2737 = vunpack.c.l.b16 %v448
        %v2738 = vunpack.c.h.b16 %v448
        %v2739 = vunpack.c.l.b16 %v449
        %v2740 = vunpack.c.h.b16 %v449
        %v2741 = vunpack.c.l.b16 %v450
        %v2742 = vunpack.c.h.b16 %v450
        %v2743 = vunpack.c.l.b16 %v451
        %v2744 = vunpack.c.h.b16 %v451
        %v2745 = vunpack.c.l.b16 %v452
        %v2746 = vunpack.c.h.b16 %v452
        %v2747 = vunpack.c.l.b16 %v453
        %v2748 = vunpack.c.h.b16 %v453
        %v2749 = vunpack.c.l.b16 %v454
        %v2750 = vunpack.c.h.b16 %v454
        %v2751 = vunpack.c.l.b16 %v455
        %v2752 = vunpack.c.h.b16 %v455
        %v2753 = vunpack.c.l.b16 %v456
        %v2754 = vunpack.c.h.b16 %v456
        %v2755 = vunpack.c.l.b16 %v457
        %v2756 = vunpack.c.h.b16 %v457
        %v2757 = vunpack.c.l.b16 %v458
        %v2758 = vunpack.c.h.b16 %v458
        %v2759 = vunpack.c.l.b16 %v459
        %v2760 = vunpack.c.h.b16 %v459
        %v2761 = vunpack.c.l.b16 %v460
        %v2762 = vunpack.c.h.b16 %v460
        %v2763 = vunpack.c.l.b16 %v461
        %v2764 = vunpack.c.h.b16 %v461
        %v2765 = vunpack.c.l.b16 %v462
        %v2766 = vunpack.c.h.b16 %v462
        %v2767 = vunpack.c.l.b16 %v463
        %v2768 = vunpack.c.h.b16 %v463
        %v2769 = vunpack.c.l.b16 %v464
        %v2770 = vunpack.c.h.b16 %v464
        %v2771 = vunpack.c.l.b16 %v465
        %v2772 = vunpack.c.h.b16 %v465
        %v2773 = vunpack.c.l.b16 %v466
        %v2774 = vunpack.c.h.b16 %v466
        %v2775 = vunpack.c.l.b16 %v467
        %v2776 = vunpack.c.h.b16 %v467
        %v2777 = vunpack.c.l.b16 %v468
        %v2778 = vunpack.c.h.b16 %v468
        %v2779 = vunpack.c.l.b16 %v469
        %v2780 = vunpack.c.h.b16 %v469
        %v2781 = vunpack.c.l.b16 %v470
        %v2782 = vunpack.c.h.b16 %v470
        %v2783 = vunpack.c.l.b16 %v471
        %v2784 = vunpack.c.h.b16 %v471
        %v2785 = vunpack.c.l.b16 %v472
        %v2786 = vunpack.c.h.b16 %v472
        %v2787 = vunpack.c.l.b16 %v473
        %v2788 = vunpack.c.h.b16 %v473
        %v2789 = vunpack.c.l.b16 %v474
        %v2790 = vunpack.c.h.b16 %v474
        %v2791 = vunpack.c.l.b16 %v475
        %v2792 = vunpack.c.h.b16 %v475
        %v2793 = vunpack.c.l.b16 %v476
        %v2794 = vunpack.c.h.b16 %v476
        %v2795 = vunpack.c.l.b16 %v477
        %v2796 = vunpack.c.h.b16 %v477
        %v2797 = vunpack.c.l.b16 %v478
        %v2798 = vunpack.c.h.b16 %v478
        %v2799 = vunpack.c.l.b16 %v479
        %v2800 = vunpack.c.h.b16 %v479
        %v2801 = vunpack.c.l.b16 %v480
        %v2802 = vunpack.c.h.b16 %v480
        %v2803 = vunpack.c.l.b16 %v481
        %v2804 = vunpack.c.h.b16 %v481
        %v2805 = vunpack.c.l.b16 %v482
        %v2806 = vunpack.c.h.b16 %v482
        %v2807 = vunpack.c.l.b16 %v483
        %v2808 = vunpack.c.h.b16 %v483
        %v2809 = vunpack.c.l.b16 %v484
        %v2810 = vunpack.c.h.b16 %v484
        %v2811 = vunpack.c.l.b16 %v485
        %v2812 = vunpack.c.h.b16 %v485
        %v2813 = vunpack.c.l.b16 %v486
        %v2814 = vunpack.c.h.b16 %v486
        %v2815 = vunpack.c.l.b16 %v487
        %v2816 = vunpack.c.h.b16 %v487
        %v2817 = vunpack.c.l.b16 %v488
        %v2818 = vunpack.c.h.b16 %v488
        %v2819 = vunpack.c.l.b16 %v489
        %v2820 = vunpack.c.h.b16 %v489
        %v2821 = vunpack.c.l.b16 %v490
        %v2822 = vunpack.c.h.b16 %v490
        %v2823 = vunpack.c.l.b16 %v491
        %v2824 = vunpack.c.h.b16 %v491
        %v2825 = vunpack.c.l.b16 %v492
        %v2826 = vunpack.c.h.b16 %v492
        %v2827 = vunpack.c.l.b16 %v493
        %v2828 = vunpack.c.h.b16 %v493
        %v2829 = vunpack.c.l.b16 %v494
        %v2830 = vunpack.c.h.b16 %v494
        %v2831 = vunpack.c.l.b16 %v495
        %v2832 = vunpack.c.h.b16 %v495
        %v2833 = vunpack.c.l.b16 %v496
        %v2834 = vunpack.c.h.b16 %v496
        %v2835 = vunpack.c.l.b16 %v497
        %v2836 = vunpack.c.h.b16 %v497
        %v2837 = vunpack.c.l.b16 %v498
        %v2838 = vunpack.c.h.b16 %v498
        %v2839 = vunpack.c.l.b16 %v499
        %v2840 = vunpack.c.h.b16 %v499
        %v2841 = vunpack.c.l.b16 %v500
        %v2842 = vunpack.c.h.b16 %v500
        %v2843 = vunpack.c.l.b16 %v501
        %v2844 = vunpack.c.h.b16 %v501
        %v2845 = vunpack.c.l.b16 %v502
        %v2846 = vunpack.c.h.b16 %v502
        %v2847 = vunpack.c.l.b16 %v503
        %v2848 = vunpack.c.h.b16 %v503
        %v2849 = vunpack.c.l.b16 %v504
        %v2850 = vunpack.c.h.b16 %v504
        %v2851 = vunpack.c.l.b16 %v505
        %v2852 = vunpack.c.h.b16 %v505
        %v2853 = vunpack.c.l.b16 %v506
        %v2854 = vunpack.c.h.b16 %v506
        %v2855 = vunpack.c.l.b16 %v507
        %v2856 = vunpack.c.h.b16 %v507
        %v2857 = vunpack.c.l.b16 %v508
        %v2858 = vunpack.c.h.b16 %v508
        %v2859 = vunpack.c.l.b16 %v509
        %v2860 = vunpack.c.h.b16 %v509
        %v2861 = vunpack.c.l.b16 %v510
        %v2862 = vunpack.c.h.b16 %v510
        %v2863 = vunpack.c.l.b16 %v511
        %v2864 = vunpack.c.h.b16 %v511
        %v2865 = vunpack.c.l.b16 %v512
        %v2866 = vunpack.c.h.b16 %v512
        %v2867 = vunpack.c.l.b16 %v513
        %v2868 = vunpack.c.h.b16 %v513
        %v2869 = vunpack.c.l.b16 %v514
        %v2870 = vunpack.c.h.b16 %v514
        %v2871 = vunpack.c.l.b16 %v515
        %v2872 = vunpack.c.h.b16 %v515
        %v2873 = vunpack.c.l.b16 %v516
        %v2874 = vunpack.c.h.b16 %v516
        %v2875 = vunpack.c.l.b16 %v517
        %v2876 = vunpack.c.h.b16 %v517
        %v2877 = vunpack.c.l.b16 %v518
        %v2878 = vunpack.c.h.b16 %v518
        %v2879 = vunpack.c.l.b16 %v519
        %v2880 = vunpack.c.h.b16 %v519
        %v2881 = vunpack.c.l.b16 %v520
        %v2882 = vunpack.c.h.b16 %v520
        %v2883 = vunpack.c.l.b16 %v521
        %v2884 = vunpack.c.h.b16 %v521
        %v2885 = vunpack.c.l.b16 %v522
        %v2886 = vunpack.c.h.b16 %v522
        %v2887 = vunpack.c.l.b16 %v523
        %v2888 = vunpack.c.h.b16 %v523
        %v2889 = vunpack.c.l.b16 %v524
        %v2890 = vunpack.c.h.b16 %v524
        %v2891 = vunpack.c.l.b16 %v525
        %v2892 = vunpack.c.h.b16 %v525
        %v2893 = vunpack.c.l.b16 %v526
        %v2894 = vunpack.c.h.b16 %v526
        %v2895 = vunpack.c.l.b16 %v527
        %v2896 = vunpack.c.h.b16 %v527
        %v2897 = vunpack.c.l.b16 %v528
        %v2898 = vunpack.c.h.b16 %v528
        %v2899 = vunpack.c.l.b16 %v529
        %v2900 = vunpack.c.h.b16 %v529
        %v2901 = vunpack.c.l.b16 %v530
        %v2902 = vunpack.c.h.b16 %v530
        %v2903 = vunpack.c.l.b16 %v531
        %v2904 = vunpack.c.h.b16 %v531
        %v2905 = vunpack.c.l.b16 %v532
        %v2906 = vunpack.c.h.b16 %v532
        %v2907 = vunpack.c.l.b16 %v533
        %v2908 = vunpack.c.h.b16 %v533
        %v2909 = vunpack.c.l.b16 %v534
        %v2910 = vunpack.c.h.b16 %v534
        %v2911 = vunpack.c.l.b16 %v535
        %v2912 = vunpack.c.h.b16 %v535
        %v2913 = vunpack.c.l.b16 %v536
        %v2914 = vunpack.c.h.b16 %v536
        %v2915 = vunpack.c.l.b16 %v537
        %v2916 = vunpack.c.h.b16 %v537
        %v2917 = vunpack.c.l.b16 %v538
        %v2918 = vunpack.c.h.b16 %v538
        %v2919 = vunpack.c.l.b16 %v539
        %v2920 = vunpack.c.h.b16 %v539
        %v2921 = vunpack.c.l.b16 %v540
        %v2922 = vunpack.c.h.b16 %v540
        %v2923 = vunpack.c.l.b16 %v541
        %v2924 = vunpack.c.h.b16 %v541
        %v2925 = vunpack.c.l.b16 %v542
        %v2926 = vunpack.c.h.b16 %v542
        %v2927 = vunpack.c.l.b16 %v543
        %v2928 = vunpack.c.h.b16 %v543
        %v2929 = vunpack.c.l.b16 %v544
        %v2930 = vunpack.c.h.b16 %v544
        %v2931 = vunpack.c.l.b16 %v545
        %v2932 = vunpack.c.h.b16 %v545
        %v2933 = vunpack.c.l.b16 %v546
        %v2934 = vunpack.c.h.b16 %v546
        %v2935 = vunpack.c.l.b16 %v547
        %v2936 = vunpack.c.h.b16 %v547
        %v2937 = vunpack.c.l.b16 %v548
        %v2938 = vunpack.c.h.b16 %v548
        %v2939 = vunpack.c.l.b16 %v549
        %v2940 = vunpack.c.h.b16 %v549
        %v2941 = vunpack.c.l.b16 %v550
        %v2942 = vunpack.c.h.b16 %v550
        %v2943 = vunpack.c.l.b16 %v551
        %v2944 = vunpack.c.h.b16 %v551
        %v2945 = vunpack.c.l.b16 %v552
        %v2946 = vunpack.c.h.b16 %v552
        %v2947 = vunpack.c.l.b16 %v553
        %v2948 = vunpack.c.h.b16 %v553
        %v2949 = vunpack.c.l.b16 %v554
        %v2950 = vunpack.c.h.b16 %v554
        %v2951 = vunpack.c.l.b16 %v555
        %v2952 = vunpack.c.h.b16 %v555
        %v2953 = vunpack.c.l.b16 %v556
        %v2954 = vunpack.c.h.b16 %v556
        %v2955 = vunpack.c.l.b16 %v557
        %v2956 = vunpack.c.h.b16 %v557
        %v2957 = vunpack.c.l.b16 %v558
        %v2958 = vunpack.c.h.b16 %v558
        %v2959 = vunpack.c.l.b16 %v559
        %v2960 = vunpack.c.h.b16 %v559
        %v2961 = vunpack.c.l.b16 %v560
        %v2962 = vunpack.c.h.b16 %v560
        %v2963 = vunpack.c.l.b16 %v561
        %v2964 = vunpack.c.h.b16 %v561
        %v2965 = vunpack.c.l.b16 %v562
        %v2966 = vunpack.c.h.b16 %v562
        %v2967 = vunpack.c.l.b16 %v563
        %v2968 = vunpack.c.h.b16 %v563
        %v2969 = vunpack.c.l.b16 %v564
        %v2970 = vunpack.c.h.b16 %v564
        %v2971 = vunpack.c.l.b16 %v565
        %v2972 = vunpack.c.h.b16 %v565
        %v2973 = vunpack.c.l.b16 %v566
        %v2974 = vunpack.c.h.b16 %v566
        %v2975 = vunpack.c.l.b16 %v567
        %v2976 = vunpack.c.h.b16 %v567
        %v2977 = vunpack.c.l.b16 %v568
        %v2978 = vunpack.c.h.b16 %v568
        %v2979 = vunpack.c.l.b16 %v569
        %v2980 = vunpack.c.h.b16 %v569
        %v2981 = vunpack.c.l.b16 %v570
        %v2982 = vunpack.c.h.b16 %v570
        %v2983 = vunpack.c.l.b16 %v571
        %v2984 = vunpack.c.h.b16 %v571
        %v2985 = vunpack.c.l.b16 %v572
        %v2986 = vunpack.c.h.b16 %v572
        %v2987 = vunpack.c.l.b16 %v573
        %v2988 = vunpack.c.h.b16 %v573
        %v2989 = vunpack.c.l.b16 %v574
        %v2990 = vunpack.c.h.b16 %v574
        %v2991 = vunpack.c.l.b16 %v575
        %v2992 = vunpack.c.h.b16 %v575
        %v2993 = vunpack.c.l.b16 %v576
        %v2994 = vunpack.c.h.b16 %v576
        %v2995 = vunpack.c.l.b16 %v577
        %v2996 = vunpack.c.h.b16 %v577
        %v2997 = vunpack.c.l.b16 %v578
        %v2998 = vunpack.c.h.b16 %v578
        %v2999 = vunpack.c.l.b16 %v579
        %v3000 = vunpack.c.h.b16 %v579
        %v3001 = vunpack.c.l.b16 %v580
        %v3002 = vunpack.c.h.b16 %v580
        %v3003 = vunpack.c.l.b16 %v581
        %v3004 = vunpack.c.h.b16 %v581
        %v3005 = vunpack.c.l.b16 %v582
        %v3006 = vunpack.c.h.b16 %v582
        %v3007 = vunpack.c.l.b16 %v583
        %v3008 = vunpack.c.h.b16 %v583
        %v3009 = vunpack.c.l.b16 %v584
        %v3010 = vunpack.c.h.b16 %v584
        %v3011 = vunpack.c.l.b16 %v585
        %v3012 = vunpack.c.h.b16 %v585
        %v3013 = vunpack.c.l.b16 %v586
        %v3014 = vunpack.c.h.b16 %v586
        %v3015 = vunpack.c.l.b16 %v587
        %v3016 = vunpack.c.h.b16 %v587
        %v3017 = vunpack.c.l.b16 %v588
        %v3018 = vunpack.c.h.b16 %v588
        %v3019 = vunpack.c.l.b16 %v589
        %v3020 = vunpack.c.h.b16 %v589
        %v3021 = vunpack.c.l.b16 %v590
        %v3022 = vunpack.c.h.b16 %v590
        %v3023 = vunpack.c.l.b16 %v591
        %v3024 = vunpack.c.h.b16 %v591
        %v3025 = vunpack.c.l.b16 %v592
        %v3026 = vunpack.c.h.b16 %v592
        %v3027 = vunpack.c.l.b16 %v593
        %v3028 = vunpack.c.h.b16 %v593
        %v3029 = vunpack.c.l.b16 %v594
        %v3030 = vunpack.c.h.b16 %v594
        %v3031 = vunpack.c.l.b16 %v595
        %v3032 = vunpack.c.h.b16 %v595
        %v3033 = vunpack.c.l.b16 %v596
        %v3034 = vunpack.c.h.b16 %v596
        %v3035 = vunpack.c.l.b16 %v597
        %v3036 = vunpack.c.h.b16 %v597
        %v3037 = vunpack.c.l.b16 %v598
        %v3038 = vunpack.c.h.b16 %v598
        %v3039 = vunpack.c.l.b16 %v599
        %v3040 = vunpack.c.h.b16 %v599
        %v3041 = vunpack.c.l.b16 %v600
        %v3042 = vunpack.c.h.b16 %v600
        %v3043 = vunpack.c.l.b16 %v601
        %v3044 = vunpack.c.h.b16 %v601
        %v3045 = vunpack.c.l.b16 %v602
        %v3046 = vunpack.c.h.b16 %v602
        %v3047 = vunpack.c.l.b16 %v603
        %v3048 = vunpack.c.h.b16 %v603
        %v3049 = vunpack.c.l.b16 %v604
        %v3050 = vunpack.c.h.b16 %v604
        %v3051 = vunpack.c.l.b16 %v605
        %v3052 = vunpack.c.h.b16 %v605
        %v3053 = vunpack.c.l.b16 %v606
        %v3054 = vunpack.c.h.b16 %v606
        %v3055 = vunpack.c.l.b16 %v607
        %v3056 = vunpack.c.h.b16 %v607
        %v3057 = vunpack.c.l.b16 %v608
        %v3058 = vunpack.c.h.b16 %v608
        %v3059 = vunpack.c.l.b16 %v609
        %v3060 = vunpack.c.h.b16 %v609
        %v3061 = vunpack.c.l.b16 %v610
        %v3062 = vunpack.c.h.b16 %v610
        %v3063 = vunpack.c.l.b16 %v611
        %v3064 = vunpack.c.h.b16 %v611
        %v3065 = vunpack.c.l.b16 %v612
        %v3066 = vunpack.c.h.b16 %v612
        %v3067 = vunpack.c.l.b16 %v613
        %v3068 = vunpack.c.h.b16 %v613
        %v3069 = vunpack.c.l.b16 %v614
        %v3070 = vunpack.c.h.b16 %v614
        %v3071 = vunpack.c.l.b16 %v615
        %v3072 = vunpack.c.h.b16 %v615
        %v3073 = vunpack.c.l.b16 %v616
        %v3074 = vunpack.c.h.b16 %v616
        %v3075 = vunpack.c.l.b16 %v617
        %v3076 = vunpack.c.h.b16 %v617
        %v3077 = vunpack.c.l.b16 %v618
        %v3078 = vunpack.c.h.b16 %v618
        %v3079 = vunpack.c.l.b16 %v619
        %v3080 = vunpack.c.h.b16 %v619
        %v3081 = vunpack.c.l.b16 %v620
        %v3082 = vunpack.c.h.b16 %v620
        %v3083 = vunpack.c.l.b16 %v621
        %v3084 = vunpack.c.h.b16 %v621
        %v3085 = vunpack.c.l.b16 %v622
        %v3086 = vunpack.c.h.b16 %v622
        %v3087 = vunpack.c.l.b16 %v623
        %v3088 = vunpack.c.h.b16 %v623
        %v3089 = vunpack.c.l.b16 %v624
        %v3090 = vunpack.c.h.b16 %v624
        %v3091 = vunpack.c.l.b16 %v625
        %v3092 = vunpack.c.h.b16 %v625
        %v3093 = vunpack.c.l.b16 %v626
        %v3094 = vunpack.c.h.b16 %v626
        %v3095 = vunpack.c.l.b16 %v627
        %v3096 = vunpack.c.h.b16 %v627
        %v3097 = vunpack.c.l.b16 %v628
        %v3098 = vunpack.c.h.b16 %v628
        %v3099 = vunpack.c.l.b16 %v629
        %v3100 = vunpack.c.h.b16 %v629
        %v3101 = vunpack.c.l.b16 %v630
        %v3102 = vunpack.c.h.b16 %v630
        %v3103 = vunpack.c.l.b16 %v631
        %v3104 = vunpack.c.h.b16 %v631
        %v3105 = vunpack.c.l.b16 %v632
        %v3106 = vunpack.c.h.b16 %v632
        %v3107 = vunpack.c.l.b16 %v633
        %v3108 = vunpack.c.h.b16 %v633
        %v3109 = vunpack.c.l.b16 %v634
        %v3110 = vunpack.c.h.b16 %v634
        %v3111 = vunpack.c.l.b16 %v635
        %v3112 = vunpack.c.h.b16 %v635
        %v3113 = vunpack.c.l.b16 %v636
        %v3114 = vunpack.c.h.b16 %v636
        %v3115 = vunpack.c.l.b16 %v637
        %v3116 = vunpack.c.h.b16 %v637
        %v3117 = vunpack.c.l.b16 %v638
        %v3118 = vunpack.c.h.b16 %v638
        %v3119 = vunpack.c.l.b16 %v639
        %v3120 = vunpack.c.h.b16 %v639
        %v3121 = vunpack.c.l.b16 %v640
        %v3122 = vunpack.c.h.b16 %v640
        %v3123 = vunpack.c.l.b16 %v641
        %v3124 = vunpack.c.h.b16 %v641
        %v3125 = vunpack.c.l.b16 %v642
        %v3126 = vunpack.c.h.b16 %v642
        %v3127 = vunpack.c.l.b16 %v643
        %v3128 = vunpack.c.h.b16 %v643
        %v3129 = vunpack.c.l.b16 %v644
        %v3130 = vunpack.c.h.b16 %v644
        %v3131 = vunpack.c.l.b16 %v645
        %v3132 = vunpack.c.h.b16 %v645
        %v3133 = vunpack.c.l.b16 %v646
        %v3134 = vunpack.c.h.b16 %v646
        %v3135 = vunpack.c.l.b16 %v647
        %v3136 = vunpack.c.h.b16 %v647
        %v3137 = vunpack.c.l.b16 %v648
        %v3138 = vunpack.c.h.b16 %v648
        %v3139 = vunpack.c.l.b16 %v649
        %v3140 = vunpack.c.h.b16 %v649
        %v3141 = vunpack.c.l.b16 %v650
        %v3142 = vunpack.c.h.b16 %v650
        %v3143 = vunpack.c.l.b16 %v651
        %v3144 = vunpack.c.h.b16 %v651
        %v3145 = vunpack.c.l.b16 %v652
        %v3146 = vunpack.c.h.b16 %v652
        %v3147 = vunpack.c.l.b16 %v653
        %v3148 = vunpack.c.h.b16 %v653
        %v3149 = vunpack.c.l.b16 %v654
        %v3150 = vunpack.c.h.b16 %v654
        %v3151 = vunpack.c.l.b16 %v655
        %v3152 = vunpack.c.h.b16 %v655
        %v3153 = vunpack.c.l.b16 %v656
        %v3154 = vunpack.c.h.b16 %v656
        %v3155 = vunpack.c.l.b16 %v657
        %v3156 = vunpack.c.h.b16 %v657
        %v3157 = vunpack.c.l.b16 %v658
        %v3158 = vunpack.c.h.b16 %v658
        %v3159 = vunpack.c.l.b16 %v659
        %v3160 = vunpack.c.h.b16 %v659
        %v3161 = vunpack.c.l.b16 %v660
        %v3162 = vunpack.c.h.b16 %v660
        %v3163 = vunpack.c.l.b16 %v661
        %v3164 = vunpack.c.h.b16 %v661
        %v3165 = vunpack.c.l.b16 %v662
        %v3166 = vunpack.c.h.b16 %v662
        %v3167 = vunpack.c.l.b16 %v663
        %v3168 = vunpack.c.h.b16 %v663
        %v3169 = vunpack.c.l.b16 %v664
        %v3170 = vunpack.c.h.b16 %v664
        %v3171 = vunpack.c.l.b16 %v665
        %v3172 = vunpack.c.h.b16 %v665
        %v3173 = vunpack.c.l.b16 %v666
        %v3174 = vunpack.c.h.b16 %v666
        %v3175 = vunpack.c.l.b16 %v667
        %v3176 = vunpack.c.h.b16 %v667
        %v3177 = vunpack.c.l.b16 %v668
        %v3178 = vunpack.c.h.b16 %v668
        %v3179 = vunpack.c.l.b16 %v669
        %v3180 = vunpack.c.h.b16 %v669
        %v3181 = vunpack.c.l.b16 %v670
        %v3182 = vunpack.c.h.b16 %v670
        %v3183 = vunpack.c.l.b16 %v671
        %v3184 = vunpack.c.h.b16 %v671
        %v3185 = vunpack.c.l.b16 %v672
        %v3186 = vunpack.c.h.b16 %v672
        %v3187 = vunpack.c.l.b16 %v673
        %v3188 = vunpack.c.h.b16 %v673
        %v3189 = vunpack.c.l.b16 %v674
        %v3190 = vunpack.c.h.b16 %v674
        %v3191 = vunpack.c.l.b16 %v675
        %v3192 = vunpack.c.h.b16 %v675
        %v3193 = vunpack.c.l.b16 %v676
        %v3194 = vunpack.c.h.b16 %v676
        %v3195 = vunpack.c.l.b16 %v677
        %v3196 = vunpack.c.h.b16 %v677
        %v3197 = vunpack.c.l.b16 %v678
        %v3198 = vunpack.c.h.b16 %v678
        %v3199 = vunpack.c.l.b16 %v679
        %v3200 = vunpack.c.h.b16 %v679
        %v3201 = vunpack.c.l.b16 %v680
        %v3202 = vunpack.c.h.b16 %v680
        %v3203 = vunpack.c.l.b16 %v681
        %v3204 = vunpack.c.h.b16 %v681
        %v3205 = vunpack.c.l.b16 %v682
        %v3206 = vunpack.c.h.b16 %v682
        %v3207 = vunpack.c.l.b16 %v683
        %v3208 = vunpack.c.h.b16 %v683
        %v3209 = vunpack.c.l.b16 %v684
        %v3210 = vunpack.c.h.b16 %v684
        %v3211 = vunpack.c.l.b16 %v685
        %v3212 = vunpack.c.h.b16 %v685
        %v3213 = vunpack.c.l.b16 %v686
        %v3214 = vunpack.c.h.b16 %v686
        %v3215 = vunpack.c.l.b16 %v687
        %v3216 = vunpack.c.h.b16 %v687
        %v3217 = vunpack.c.l.b16 %v688
        %v3218 = vunpack.c.h.b16 %v688
        %v3219 = vunpack.c.l.b16 %v689
        %v3220 = vunpack.c.h.b16 %v689
        %v3221 = vunpack.c.l.b16 %v690
        %v3222 = vunpack.c.h.b16 %v690
        %v3223 = vunpack.c.l.b16 %v691
        %v3224 = vunpack.c.h.b16 %v691
        %v3225 = vunpack.c.l.b16 %v692
        %v3226 = vunpack.c.h.b16 %v692
        %v3227 = vunpack.c.l.b16 %v693
        %v3228 = vunpack.c.h.b16 %v693
        %v3229 = vunpack.c.l.b16 %v694
        %v3230 = vunpack.c.h.b16 %v694
        %v3231 = vunpack.c.l.b16 %v695
        %v3232 = vunpack.c.h.b16 %v695
        %v3233 = vunpack.c.l.b16 %v696
        %v3234 = vunpack.c.h.b16 %v696
        %v3235 = vunpack.c.l.b16 %v697
        %v3236 = vunpack.c.h.b16 %v697
        %v3237 = vunpack.c.l.b16 %v698
        %v3238 = vunpack.c.h.b16 %v698
        %v3239 = vunpack.c.l.b16 %v699
        %v3240 = vunpack.c.h.b16 %v699
        %v3241 = vunpack.c.l.b16 %v700
        %v3242 = vunpack.c.h.b16 %v700
        %v3243 = vunpack.c.l.b16 %v701
        %v3244 = vunpack.c.h.b16 %v701
        %v3245 = vunpack.c.l.b16 %v702
        %v3246 = vunpack.c.h.b16 %v702
        %v3247 = vunpack.c.l.b16 %v703
        %v3248 = vunpack.c.h.b16 %v703
        %v3249 = vunpack.c.l.b16 %v704
        %v3250 = vunpack.c.h.b16 %v704
        %v3251 = vunpack.c.l.b16 %v705
        %v3252 = vunpack.c.h.b16 %v705
        %v3253 = vunpack.c.l.b16 %v706
        %v3254 = vunpack.c.h.b16 %v706
        %v3255 = vunpack.c.l.b16 %v707
        %v3256 = vunpack.c.h.b16 %v707
        %v3257 = vunpack.c.l.b16 %v708
        %v3258 = vunpack.c.h.b16 %v708
        %v3259 = vunpack.c.l.b16 %v709
        %v3260 = vunpack.c.h.b16 %v709
        %v3261 = vunpack.c.l.b16 %v710
        %v3262 = vunpack.c.h.b16 %v710
        %v3263 = vunpack.c.l.b16 %v711
        %v3264 = vunpack.c.h.b16 %v711
        %v3265 = vunpack.c.l.b16 %v712
        %v3266 = vunpack.c.h.b16 %v712
        %v3267 = vunpack.c.l.b16 %v713
        %v3268 = vunpack.c.h.b16 %v713
        %v3269 = vunpack.c.l.b16 %v714
        %v3270 = vunpack.c.h.b16 %v714
        %v3271 = vunpack.c.l.b16 %v715
        %v3272 = vunpack.c.h.b16 %v715
        %v3273 = vunpack.c.l.b16 %v716
        %v3274 = vunpack.c.h.b16 %v716
        %v3275 = vunpack.c.l.b16 %v717
        %v3276 = vunpack.c.h.b16 %v717
        %v3277 = vunpack.c.l.b16 %v718
        %v3278 = vunpack.c.h.b16 %v718
        %v3279 = vunpack.c.l.b16 %v719
        %v3280 = vunpack.c.h.b16 %v719
        %v3281 = vunpack.c.l.b16 %v720
        %v3282 = vunpack.c.h.b16 %v720
        %v3283 = vunpack.c.l.b16 %v721
        %v3284 = vunpack.c.h.b16 %v721
        %v3285 = vunpack.c.l.b16 %v722
        %v3286 = vunpack.c.h.b16 %v722
        %v3287 = vunpack.c.l.b16 %v723
        %v3288 = vunpack.c.h.b16 %v723
        %v3289 = vunpack.c.l.b16 %v724
        %v3290 = vunpack.c.h.b16 %v724
        %v3291 = vunpack.c.l.b16 %v725
        %v3292 = vunpack.c.h.b16 %v725
        %v3293 = vunpack.c.l.b16 %v726
        %v3294 = vunpack.c.h.b16 %v726
        %v3295 = vunpack.c.l.b16 %v727
        %v3296 = vunpack.c.h.b16 %v727
        %v3297 = vunpack.c.l.b16 %v728
        %v3298 = vunpack.c.h.b16 %v728
        %v3299 = vunpack.c.l.b16 %v729
        %v3300 = vunpack.c.h.b16 %v729
        %v3301 = vunpack.c.l.b16 %v730
        %v3302 = vunpack.c.h.b16 %v730
        %v3303 = vunpack.c.l.b16 %v731
        %v3304 = vunpack.c.h.b16 %v731
        %v3305 = vunpack.c.l.b16 %v732
        %v3306 = vunpack.c.h.b16 %v732
        %v3307 = vunpack.c.l.b16 %v733
        %v3308 = vunpack.c.h.b16 %v733
        %v3309 = vunpack.c.l.b16 %v734
        %v3310 = vunpack.c.h.b16 %v734
        %v3311 = vunpack.c.l.b16 %v735
        %v3312 = vunpack.c.h.b16 %v735
        %v3313 = vunpack.c.l.b16 %v736
        %v3314 = vunpack.c.h.b16 %v736
        %v3315 = vunpack.c.l.b16 %v737
        %v3316 = vunpack.c.h.b16 %v737
        %v3317 = vunpack.c.l.b16 %v738
        %v3318 = vunpack.c.h.b16 %v738
        %v3319 = vunpack.c.l.b16 %v739
        %v3320 = vunpack.c.h.b16 %v739
        %v3321 = vunpack.c.l.b16 %v740
        %v3322 = vunpack.c.h.b16 %v740
        %v3323 = vunpack.c.l.b16 %v741
        %v3324 = vunpack.c.h.b16 %v741
        %v3325 = vunpack.c.l.b16 %v742
        %v3326 = vunpack.c.h.b16 %v742
        %v3327 = vunpack.c.l.b16 %v743
        %v3328 = vunpack.c.h.b16 %v743
        %v3329 = vunpack.c.l.b16 %v744
        %v3330 = vunpack.c.h.b16 %v744
        %v3331 = vunpack.c.l.b16 %v745
        %v3332 = vunpack.c.h.b16 %v745
        %v3333 = vunpack.c.l.b16 %v746
        %v3334 = vunpack.c.h.b16 %v746
        %v3335 = vunpack.c.l.b16 %v747
        %v3336 = vunpack.c.h.b16 %v747
        %v3337 = vunpack.c.l.b16 %v748
        %v3338 = vunpack.c.h.b16 %v748
        %v3339 = vunpack.c.l.b16 %v749
        %v3340 = vunpack.c.h.b16 %v749
        %v3341 = vunpack.c.l.b16 %v750
        %v3342 = vunpack.c.h.b16 %v750
        %v3343 = vunpack.c.l.b16 %v751
        %v3344 = vunpack.c.h.b16 %v751
        %v3345 = vunpack.c.l.b16 %v752
        %v3346 = vunpack.c.h.b16 %v752
        %v3347 = vunpack.c.l.b16 %v753
        %v3348 = vunpack.c.h.b16 %v753
        %v3349 = vunpack.c.l.b16 %v754
        %v3350 = vunpack.c.h.b16 %v754
        %v3351 = vunpack.c.l.b16 %v755
        %v3352 = vunpack.c.h.b16 %v755
        %v3353 = vunpack.c.l.b16 %v756
        %v3354 = vunpack.c.h.b16 %v756
        %v3355 = vunpack.c.l.b16 %v757
        %v3356 = vunpack.c.h.b16 %v757
        %v3357 = vunpack.c.l.b16 %v758
        %v3358 = vunpack.c.h.b16 %v758
        %v3359 = vunpack.c.l.b16 %v759
        %v3360 = vunpack.c.h.b16 %v759
        %v3361 = vunpack.c.l.b16 %v760
        %v3362 = vunpack.c.h.b16 %v760
        %v3363 = vunpack.c.l.b16 %v761
        %v3364 = vunpack.c.h.b16 %v761
        %v3365 = vunpack.c.l.b16 %v762
        %v3366 = vunpack.c.h.b16 %v762
        %v3367 = vunpack.c.l.b16 %v763
        %v3368 = vunpack.c.h.b16 %v763
        %v3369 = vunpack.c.l.b16 %v764
        %v3370 = vunpack.c.h.b16 %v764
        %v3371 = vunpack.c.l.b16 %v765
        %v3372 = vunpack.c.h.b16 %v765
        %v3373 = vunpack.c.l.b16 %v766
        %v3374 = vunpack.c.h.b16 %v766
        %v3375 = vunpack.c.l.b16 %v767
        %v3376 = vunpack.c.h.b16 %v767
        %v3377 = vunpack.c.l.b16 %v768
        %v3378 = vunpack.c.h.b16 %v768
        %v3379 = vunpack.c.l.b16 %v769
        %v3380 = vunpack.c.h.b16 %v769
        %v3381 = vunpack.c.l.b16 %v770
        %v3382 = vunpack.c.h.b16 %v770
        %v3383 = vunpack.c.l.b16 %v771
        %v3384 = vunpack.c.h.b16 %v771
        %v3385 = vunpack.c.l.b16 %v772
        %v3386 = vunpack.c.h.b16 %v772
        %v3387 = vunpack.c.l.b16 %v773
        %v3388 = vunpack.c.h.b16 %v773
        %v3389 = vunpack.c.l.b16 %v774
        %v3390 = vunpack.c.h.b16 %v774
        %v3391 = vunpack.c.l.b16 %v775
        %v3392 = vunpack.c.h.b16 %v775
        %v3393 = vunpack.c.l.b16 %v776
        %v3394 = vunpack.c.h.b16 %v776
        %v3395 = vunpack.c.l.b16 %v777
        %v3396 = vunpack.c.h.b16 %v777
        %v3397 = vunpack.c.l.b16 %v778
        %v3398 = vunpack.c.h.b16 %v778
        %v3399 = vunpack.c.l.b16 %v779
        %v3400 = vunpack.c.h.b16 %v779
        %v3401 = vunpack.c.l.b16 %v780
        %v3402 = vunpack.c.h.b16 %v780
        %v3403 = vunpack.c.l.b16 %v781
        %v3404 = vunpack.c.h.b16 %v781
        %v3405 = vunpack.c.l.b16 %v782
        %v3406 = vunpack.c.h.b16 %v782
        %v3407 = vunpack.c.l.b16 %v783
        %v3408 = vunpack.c.h.b16 %v783
        %v3409 = vunpack.c.l.b16 %v784
        %v3410 = vunpack.c.h.b16 %v784
        %v3411 = vunpack.c.l.b16 %v785
        %v3412 = vunpack.c.h.b16 %v785
        %v3413 = vunpack.c.l.b16 %v786
        %v3414 = vunpack.c.h.b16 %v786
        %v3415 = vunpack.c.l.b16 %v787
        %v3416 = vunpack.c.h.b16 %v787
        %v3417 = vunpack.c.l.b16 %v788
        %v3418 = vunpack.c.h.b16 %v788
        %v3419 = vunpack.c.l.b16 %v789
        %v3420 = vunpack.c.h.b16 %v789
        %v3421 = vunpack.c.l.b16 %v790
        %v3422 = vunpack.c.h.b16 %v790
        %v3423 = vunpack.c.l.b16 %v791
        %v3424 = vunpack.c.h.b16 %v791
        %v3425 = vunpack.c.l.b16 %v792
        %v3426 = vunpack.c.h.b16 %v792
        %v3427 = vunpack.c.l.b16 %v793
        %v3428 = vunpack.c.h.b16 %v793
        %v3429 = vunpack.c.l.b16 %v794
        %v3430 = vunpack.c.h.b16 %v794
        %v3431 = vunpack.c.l.b16 %v795
        %v3432 = vunpack.c.h.b16 %v795
        %v3433 = vunpack.c.l.b16 %v796
        %v3434 = vunpack.c.h.b16 %v796
        %v3435 = vunpack.c.l.b16 %v797
        %v3436 = vunpack.c.h.b16 %v797
        %v3437 = vunpack.c.l.b16 %v798
        %v3438 = vunpack.c.h.b16 %v798
        %v3439 = vunpack.c.l.b16 %v799
        %v3440 = vunpack.c.h.b16 %v799
        %v3441 = vunpack.c.l.b16 %v800
        %v3442 = vunpack.c.h.b16 %v800
        %v3443 = vunpack.c.l.b16 %v801
        %v3444 = vunpack.c.h.b16 %v801
        %v3445 = vunpack.c.l.b16 %v802
        %v3446 = vunpack.c.h.b16 %v802
        %v3447 = vunpack.c.l.b16 %v803
        %v3448 = vunpack.c.h.b16 %v803
        %v3449 = vunpack.c.l.b16 %v804
        %v3450 = vunpack.c.h.b16 %v804
        %v3451 = vunpack.c.l.b16 %v805
        %v3452 = vunpack.c.h.b16 %v805
        %v3453 = vunpack.c.l.b16 %v806
        %v3454 = vunpack.c.h.b16 %v806
        %v3455 = vunpack.c.l.b16 %v807
        %v3456 = vunpack.c.h.b16 %v807
        %v3457 = vunpack.c.l.b16 %v808
        %v3458 = vunpack.c.h.b16 %v808
        %v3459 = vunpack.c.l.b16 %v809
        %v3460 = vunpack.c.h.b16 %v809
        %v3461 = vunpack.c.l.b16 %v810
        %v3462 = vunpack.c.h.b16 %v810
        %v3463 = vunpack.c.l.b16 %v811
        %v3464 = vunpack.c.h.b16 %v811
        %v3465 = vunpack.c.l.b16 %v812
        %v3466 = vunpack.c.h.b16 %v812
        %v3467 = vunpack.c.l.b16 %v813
        %v3468 = vunpack.c.h.b16 %v813
        %v3469 = vunpack.c.l.b16 %v814
        %v3470 = vunpack.c.h.b16 %v814
        %v3471 = vunpack.c.l.b16 %v815
        %v3472 = vunpack.c.h.b16 %v815
        %v3473 = vunpack.c.l.b16 %v816
        %v3474 = vunpack.c.h.b16 %v816
        %v3475 = vunpack.c.l.b16 %v817
        %v3476 = vunpack.c.h.b16 %v817
        %v3477 = vunpack.c.l.b16 %v818
        %v3478 = vunpack.c.h.b16 %v818
        %v3479 = vunpack.c.l.b16 %v819
        %v3480 = vunpack.c.h.b16 %v819
        %v3481 = vunpack.c.l.b16 %v820
        %v3482 = vunpack.c.h.b16 %v820
        %v3483 = vunpack.c.l.b16 %v821
        %v3484 = vunpack.c.h.b16 %v821
        %v3485 = vunpack.c.l.b16 %v822
        %v3486 = vunpack.c.h.b16 %v822
        %v3487 = vunpack.c.l.b16 %v823
        %v3488 = vunpack.c.h.b16 %v823
        %v3489 = vunpack.c.l.b16 %v824
        %v3490 = vunpack.c.h.b16 %v824
        %v3491 = vunpack.c.l.b16 %v825
        %v3492 = vunpack.c.h.b16 %v825
        %v3493 = vunpack.c.l.b16 %v826
        %v3494 = vunpack.c.h.b16 %v826
        %v3495 = vunpack.c.l.b16 %v827
        %v3496 = vunpack.c.h.b16 %v827
        %v3497 = vunpack.c.l.b16 %v828
        %v3498 = vunpack.c.h.b16 %v828
        %v3499 = vunpack.c.l.b16 %v829
        %v3500 = vunpack.c.h.b16 %v829
        %v3501 = vunpack.c.l.b16 %v830
        %v3502 = vunpack.c.h.b16 %v830
        %v3503 = vunpack.c.l.b16 %v831
        %v3504 = vunpack.c.h.b16 %v831
        %v3505 = vunpack.c.l.b16 %v832
        %v3506 = vunpack.c.h.b16 %v832
        %v3507 = vunpack.c.l.b16 %v833
        %v3508 = vunpack.c.h.b16 %v833
        %v3509 = vunpack.c.l.b16 %v834
        %v3510 = vunpack.c.h.b16 %v834
        %v3511 = vunpack.c.l.b16 %v835
        %v3512 = vunpack.c.h.b16 %v835
        %v3513 = vunpack.c.l.b16 %v836
        %v3514 = vunpack.c.h.b16 %v836
        %v3515 = vunpack.c.l.b16 %v837
        %v3516 = vunpack.c.h.b16 %v837
        %v3517 = vunpack.c.l.b16 %v838
        %v3518 = vunpack.c.h.b16 %v838
        %v3519 = vunpack.c.l.b16 %v839
        %v3520 = vunpack.c.h.b16 %v839
        %v3521 = vunpack.c.l.b16 %v840
        %v3522 = vunpack.c.h.b16 %v840
        %v3523 = vunpack.c.l.b16 %v841
        %v3524 = vunpack.c.h.b16 %v841
        %v3525 = vunpack.c.l.b16 %v842
        %v3526 = vunpack.c.h.b16 %v842
        %v3527 = vunpack.c.l.b16 %v843
        %v3528 = vunpack.c.h.b16 %v843
        %v3529 = vunpack.c.l.b16 %v844
        %v3530 = vunpack.c.h.b16 %v844
        %v3531 = vunpack.c.l.b16 %v845
        %v3532 = vunpack.c.h.b16 %v845
        %v3533 = vunpack.c.l.b16 %v846
        %v3534 = vunpack.c.h.b16 %v846
        %v3535 = vunpack.c.l.b16 %v847
        %v3536 = vunpack.c.h.b16 %v847
        %v3537 = vunpack.c.l.b16 %v848
        %v3538 = vunpack.c.h.b16 %v848
        %v3539 = vunpack.c.l.b16 %v849
        %v3540 = vunpack.c.h.b16 %v849
        %v3541 = vunpack.c.l.b16 %v850
        %v3542 = vunpack.c.h.b16 %v850
        %v3543 = vunpack.c.l.b16 %v851
        %v3544 = vunpack.c.h.b16 %v851
        %v3545 = vunpack.c.l.b16 %v852
        %v3546 = vunpack.c.h.b16 %v852
        %v3547 = vunpack.c.l.b16 %v853
        %v3548 = vunpack.c.h.b16 %v853
        %v3549 = vunpack.c.l.b16 %v854
        %v3550 = vunpack.c.h.b16 %v854
        %v3551 = vunpack.c.l.b16 %v855
        %v3552 = vunpack.c.h.b16 %v855
        %v3553 = vunpack.c.l.b16 %v856
        %v3554 = vunpack.c.h.b16 %v856
        %v3555 = vunpack.c.l.b16 %v857
        %v3556 = vunpack.c.h.b16 %v857
        %v3557 = vunpack.c.l.b16 %v858
        %v3558 = vunpack.c.h.b16 %v858
        %v3559 = vunpack.c.l.b16 %v859
        %v3560 = vunpack.c.h.b16 %v859
        %v3561 = vunpack.c.l.b16 %v860
        %v3562 = vunpack.c.h.b16 %v860
        %v3563 = vunpack.c.l.b16 %v861
        %v3564 = vunpack.c.h.b16 %v861
        %v3565 = vunpack.c.l.b16 %v862
        %v3566 = vunpack.c.h.b16 %v862
        %v3567 = vunpack.c.l.b16 %v863
        %v3568 = vunpack.c.h.b16 %v863
        %v3569 = vunpack.c.l.b16 %v864
        %v3570 = vunpack.c.h.b16 %v864
        %v3571 = vunpack.c.l.b16 %v865
        %v3572 = vunpack.c.h.b16 %v865
        %v3573 = vunpack.c.l.b16 %v866
        %v3574 = vunpack.c.h.b16 %v866
        %v3575 = vunpack.c.l.b16 %v867
        %v3576 = vunpack.c.h.b16 %v867
        %v3577 = vunpack.c.l.b16 %v868
        %v3578 = vunpack.c.h.b16 %v868
        %v3579 = vunpack.c.l.b16 %v869
        %v3580 = vunpack.c.h.b16 %v869
        %v3581 = vunpack.c.l.b16 %v870
        %v3582 = vunpack.c.h.b16 %v870
        %v3583 = vunpack.c.l.b16 %v871
        %v3584 = vunpack.c.h.b16 %v871
        %v3585 = vunpack.c.l.b16 %v872
        %v3586 = vunpack.c.h.b16 %v872
        %v3587 = vunpack.c.l.b16 %v873
        %v3588 = vunpack.c.h.b16 %v873
        %v3589 = vunpack.c.l.b16 %v874
        %v3590 = vunpack.c.h.b16 %v874
        %v3591 = vunpack.c.l.b16 %v875
        %v3592 = vunpack.c.h.b16 %v875
        %v3593 = vunpack.c.l.b16 %v876
        %v3594 = vunpack.c.h.b16 %v876
        %v3595 = vunpack.c.l.b16 %v877
        %v3596 = vunpack.c.h.b16 %v877
        %v3597 = vunpack.c.l.b16 %v878
        %v3598 = vunpack.c.h.b16 %v878
        %v3599 = vunpack.c.l.b16 %v879
        %v3600 = vunpack.c.h.b16 %v879
        %v3601 = vunpack.c.l.b16 %v880
        %v3602 = vunpack.c.h.b16 %v880
        %v3603 = vunpack.c.l.b16 %v881
        %v3604 = vunpack.c.h.b16 %v881
        %v3605 = vunpack.c.l.b16 %v882
        %v3606 = vunpack.c.h.b16 %v882
        %v3607 = vunpack.c.l.b16 %v883
        %v3608 = vunpack.c.h.b16 %v883
        %v3609 = vunpack.c.l.b16 %v884
        %v3610 = vunpack.c.h.b16 %v884
        %v3611 = vunpack.c.l.b16 %v885
        %v3612 = vunpack.c.h.b16 %v885
        %v3613 = vunpack.c.l.b16 %v886
        %v3614 = vunpack.c.h.b16 %v886
        %v3615 = vunpack.c.l.b16 %v887
        %v3616 = vunpack.c.h.b16 %v887
        %v3617 = vunpack.c.l.b16 %v888
        %v3618 = vunpack.c.h.b16 %v888
        %v3619 = vunpack.c.l.b16 %v889
        %v3620 = vunpack.c.h.b16 %v889
        %v3621 = vunpack.c.l.b16 %v890
        %v3622 = vunpack.c.h.b16 %v890
        %v3623 = vunpack.c.l.b16 %v891
        %v3624 = vunpack.c.h.b16 %v891
        %v3625 = vunpack.c.l.b16 %v892
        %v3626 = vunpack.c.h.b16 %v892
        %v3627 = vunpack.c.l.b16 %v893
        %v3628 = vunpack.c.h.b16 %v893
        %v3629 = vunpack.c.l.b16 %v894
        %v3630 = vunpack.c.h.b16 %v894
        %v3631 = vunpack.c.l.b16 %v895
        %v3632 = vunpack.c.h.b16 %v895
        %v3633 = vunpack.c.l.b16 %v896
        %v3634 = vunpack.c.h.b16 %v896
        %v3635 = vunpack.c.l.b16 %v897
        %v3636 = vunpack.c.h.b16 %v897
        %v3637 = vunpack.c.l.b16 %v898
        %v3638 = vunpack.c.h.b16 %v898
        %v3639 = vunpack.c.l.b16 %v899
        %v3640 = vunpack.c.h.b16 %v899
        %v3641 = vunpack.c.l.b16 %v900
        %v3642 = vunpack.c.h.b16 %v900
        %v3643 = vunpack.c.l.b16 %v901
        %v3644 = vunpack.c.h.b16 %v901
        %v3645 = vunpack.c.l.b16 %v902
        %v3646 = vunpack.c.h.b16 %v902
        %v3647 = vunpack.c.l.b16 %v903
        %v3648 = vunpack.c.h.b16 %v903
        %v3649 = vunpack.c.l.b16 %v904
        %v3650 = vunpack.c.h.b16 %v904
        %v3651 = vunpack.c.l.b16 %v905
        %v3652 = vunpack.c.h.b16 %v905
        %v3653 = vunpack.c.l.b16 %v906
        %v3654 = vunpack.c.h.b16 %v906
        %v3655 = vunpack.c.l.b16 %v907
        %v3656 = vunpack.c.h.b16 %v907
        %v3657 = vunpack.c.l.b16 %v908
        %v3658 = vunpack.c.h.b16 %v908
        %v3659 = vunpack.c.l.b16 %v909
        %v3660 = vunpack.c.h.b16 %v909
        %v3661 = vunpack.c.l.b16 %v910
        %v3662 = vunpack.c.h.b16 %v910
        %v3663 = vunpack.c.l.b16 %v911
        %v3664 = vunpack.c.h.b16 %v911
        %v3665 = vunpack.c.l.b16 %v912
        %v3666 = vunpack.c.h.b16 %v912
        %v3667 = vunpack.c.l.b16 %v913
        %v3668 = vunpack.c.h.b16 %v913
        %v3669 = vunpack.c.l.b16 %v914
        %v3670 = vunpack.c.h.b16 %v914
        %v3671 = vunpack.c.l.b16 %v915
        %v3672 = vunpack.c.h.b16 %v915
        %v3673 = vunpack.c.l.b16 %v916
        %v3674 = vunpack.c.h.b16 %v916
        %v3675 = vunpack.c.l.b16 %v917
        %v3676 = vunpack.c.h.b16 %v917
        %v3677 = vunpack.c.l.b16 %v918
        %v3678 = vunpack.c.h.b16 %v918
        %v3679 = vunpack.c.l.b16 %v919
        %v3680 = vunpack.c.h.b16 %v919
        %v3681 = vunpack.c.l.b16 %v920
        %v3682 = vunpack.c.h.b16 %v920
        %v3683 = vunpack.c.l.b16 %v921
        %v3684 = vunpack.c.h.b16 %v921
        %v3685 = vunpack.c.l.b16 %v922
        %v3686 = vunpack.c.h.b16 %v922
        %v3687 = vunpack.c.l.b16 %v923
        %v3688 = vunpack.c.h.b16 %v923
        %v3689 = vunpack.c.l.b16 %v924
        %v3690 = vunpack.c.h.b16 %v924
        %v3691 = vunpack.c.l.b16 %v925
        %v3692 = vunpack.c.h.b16 %v925
        %v3693 = vunpack.c.l.b16 %v926
        %v3694 = vunpack.c.h.b16 %v926
        %v3695 = vunpack.c.l.b16 %v927
        %v3696 = vunpack.c.h.b16 %v927
        %v3697 = vunpack.c.l.b16 %v928
        %v3698 = vunpack.c.h.b16 %v928
        %v3699 = vunpack.c.l.b16 %v929
        %v3700 = vunpack.c.h.b16 %v929
        %v3701 = vunpack.c.l.b16 %v930
        %v3702 = vunpack.c.h.b16 %v930
        %v3703 = vunpack.c.l.b16 %v931
        %v3704 = vunpack.c.h.b16 %v931
        %v3705 = vunpack.c.l.b16 %v932
        %v3706 = vunpack.c.h.b16 %v932
        %v3707 = vunpack.c.l.b16 %v933
        %v3708 = vunpack.c.h.b16 %v933
        %v3709 = vunpack.c.l.b16 %v934
        %v3710 = vunpack.c.h.b16 %v934
        %v3711 = vunpack.c.l.b16 %v935
        %v3712 = vunpack.c.h.b16 %v935
        %v3713 = vunpack.c.l.b16 %v936
        %v3714 = vunpack.c.h.b16 %v936
        %v3715 = vunpack.c.l.b16 %v937
        %v3716 = vunpack.c.h.b16 %v937
        %v3717 = vunpack.c.l.b16 %v938
        %v3718 = vunpack.c.h.b16 %v938
        %v3719 = vunpack.c.l.b16 %v939
        %v3720 = vunpack.c.h.b16 %v939
        %v3721 = vunpack.c.l.b16 %v940
        %v3722 = vunpack.c.h.b16 %v940
        %v3723 = vunpack.c.l.b16 %v941
        %v3724 = vunpack.c.h.b16 %v941
        %v3725 = vunpack.c.l.b16 %v942
        %v3726 = vunpack.c.h.b16 %v942
        %v3727 = vunpack.c.l.b16 %v943
        %v3728 = vunpack.c.h.b16 %v943
        %v3729 = vunpack.c.l.b16 %v944
        %v3730 = vunpack.c.h.b16 %v944
        %v3731 = vunpack.c.l.b16 %v945
        %v3732 = vunpack.c.h.b16 %v945
        %v3733 = vunpack.c.l.b16 %v946
        %v3734 = vunpack.c.h.b16 %v946
        %v3735 = vunpack.c.l.b16 %v947
        %v3736 = vunpack.c.h.b16 %v947
        %v3737 = vunpack.c.l.b16 %v948
        %v3738 = vunpack.c.h.b16 %v948
        %v3739 = vunpack.c.l.b16 %v949
        %v3740 = vunpack.c.h.b16 %v949
        %v3741 = vunpack.c.l.b16 %v950
        %v3742 = vunpack.c.h.b16 %v950
        %v3743 = vunpack.c.l.b16 %v951
        %v3744 = vunpack.c.h.b16 %v951
        %v3745 = vunpack.c.l.b16 %v952
        %v3746 = vunpack.c.h.b16 %v952
        %v3747 = vunpack.c.l.b16 %v953
        %v3748 = vunpack.c.h.b16 %v953
        %v3749 = vunpack.c.l.b16 %v954
        %v3750 = vunpack.c.h.b16 %v954
        %v3751 = vunpack.c.l.b16 %v955
        %v3752 = vunpack.c.h.b16 %v955
        %v3753 = vunpack.c.l.b16 %v956
        %v3754 = vunpack.c.h.b16 %v956
        %v3755 = vunpack.c.l.b16 %v957
        %v3756 = vunpack.c.h.b16 %v957
        %v3757 = vunpack.c.l.b16 %v958
        %v3758 = vunpack.c.h.b16 %v958
        %v3759 = vunpack.c.l.b16 %v959
        %v3760 = vunpack.c.h.b16 %v959
        %v3761 = vunpack.c.l.b16 %v960
        %v3762 = vunpack.c.h.b16 %v960
        %v3763 = vunpack.c.l.b16 %v961
        %v3764 = vunpack.c.h.b16 %v961
        %v3765 = vunpack.c.l.b16 %v962
        %v3766 = vunpack.c.h.b16 %v962
        %v3767 = vunpack.c.l.b16 %v963
        %v3768 = vunpack.c.h.b16 %v963
        %v3769 = vunpack.c.l.b16 %v964
        %v3770 = vunpack.c.h.b16 %v964
        %v3771 = vunpack.c.l.b16 %v965
        %v3772 = vunpack.c.h.b16 %v965
        %v3773 = vunpack.c.l.b16 %v966
        %v3774 = vunpack.c.h.b16 %v966
        %v3775 = vunpack.c.l.b16 %v967
        %v3776 = vunpack.c.h.b16 %v967
        %v3777 = vunpack.c.l.b16 %v968
        %v3778 = vunpack.c.h.b16 %v968
        %v3779 = vunpack.c.l.b16 %v969
        %v3780 = vunpack.c.h.b16 %v969
        %v3781 = vunpack.c.l.b16 %v970
        %v3782 = vunpack.c.h.b16 %v970
        %v3783 = vunpack.c.l.b16 %v971
        %v3784 = vunpack.c.h.b16 %v971
        %v3785 = vunpack.c.l.b16 %v972
        %v3786 = vunpack.c.h.b16 %v972
        %v3787 = vunpack.c.l.b16 %v973
        %v3788 = vunpack.c.h.b16 %v973
        %v3789 = vunpack.c.l.b16 %v974
        %v3790 = vunpack.c.h.b16 %v974
        %v3791 = vunpack.c.l.b16 %v975
        %v3792 = vunpack.c.h.b16 %v975
        %v3793 = vunpack.c.l.b16 %v976
        %v3794 = vunpack.c.h.b16 %v976
        %v3795 = vunpack.c.l.b16 %v977
        %v3796 = vunpack.c.h.b16 %v977
        %v3797 = vunpack.c.l.b16 %v978
        %v3798 = vunpack.c.h.b16 %v978
        %v3799 = vunpack.c.l.b16 %v979
        %v3800 = vunpack.c.h.b16 %v979
        %v3801 = vunpack.c.l.b16 %v980
        %v3802 = vunpack.c.h.b16 %v980
        %v3803 = vunpack.c.l.b16 %v981
        %v3804 = vunpack.c.h.b16 %v981
        %v3805 = vunpack.c.l.b16 %v982
        %v3806 = vunpack.c.h.b16 %v982
        %v3807 = vunpack.c.l.b16 %v983
        %v3808 = vunpack.c.h.b16 %v983
        %v3809 = vunpack.c.l.b16 %v984
        %v3810 = vunpack.c.h.b16 %v984
        %v3811 = vunpack.c.l.b16 %v985
        %v3812 = vunpack.c.h.b16 %v985
        %v3813 = vunpack.c.l.b16 %v986
        %v3814 = vunpack.c.h.b16 %v986
        %v3815 = vunpack.c.l.b16 %v987
        %v3816 = vunpack.c.h.b16 %v987
        %v3817 = vunpack.c.l.b16 %v988
        %v3818 = vunpack.c.h.b16 %v988
        %v3819 = vunpack.c.l.b16 %v989
        %v3820 = vunpack.c.h.b16 %v989
        %v3821 = vunpack.c.l.b16 %v990
        %v3822 = vunpack.c.h.b16 %v990
        %v3823 = vunpack.c.l.b16 %v991
        %v3824 = vunpack.c.h.b16 %v991
        %v3825 = vunpack.c.l.b16 %v992
        %v3826 = vunpack.c.h.b16 %v992
        %v3827 = vunpack.c.l.b16 %v993
        %v3828 = vunpack.c.h.b16 %v993
        %v3829 = vunpack.c.l.b16 %v994
        %v3830 = vunpack.c.h.b16 %v994
        %v3831 = vunpack.c.l.b16 %v995
        %v3832 = vunpack.c.h.b16 %v995
        %v3833 = vunpack.c.l.b16 %v996
        %v3834 = vunpack.c.h.b16 %v996
        %v3835 = vunpack.c.l.b16 %v997
        %v3836 = vunpack.c.h.b16 %v997
        %v3837 = vunpack.c.l.b16 %v998
        %v3838 = vunpack.c.h.b16 %v998
        %v3839 = vunpack.c.l.b16 %v999
        %v3840 = vunpack.c.h.b16 %v999
        %v3841 = vunpack.c.l.b16 %v1000
        %v3842 = vunpack.c.h.b16 %v1000
        %v3843 = vunpack.c.l.b16 %v1001
        %v3844 = vunpack.c.h.b16 %v1001
        %v3845 = vunpack.c.l.b16 %v1002
        %v3846 = vunpack.c.h.b16 %v1002
        %v3847 = vunpack.c.l.b16 %v1003
        %v3848 = vunpack.c.h.b16 %v1003
        %v3849 = vunpack.c.l.b16 %v1004
        %v3850 = vunpack.c.h.b16 %v1004
        %v3851 = vunpack.c.l.b16 %v1005
        %v3852 = vunpack.c.h.b16 %v1005
        %v3853 = vunpack.c.l.b16 %v1006
        %v3854 = vunpack.c.h.b16 %v1006
        %v3855 = vunpack.c.l.b16 %v1007
        %v3856 = vunpack.c.h.b16 %v1007
        %v3857 = vunpack.c.l.b16 %v1008
        %v3858 = vunpack.c.h.b16 %v1008
        %v3859 = vunpack.c.l.b16 %v1009
        %v3860 = vunpack.c.h.b16 %v1009
        %v3861 = vunpack.c.l.b16 %v1010
        %v3862 = vunpack.c.h.b16 %v1010
        %v3863 = vunpack.c.l.b16 %v1011
        %v3864 = vunpack.c.h.b16 %v1011
        %v3865 = vunpack.c.l.b16 %v1012
        %v3866 = vunpack.c.h.b16 %v1012
        %v3867 = vunpack.c.l.b16 %v1013
        %v3868 = vunpack.c.h.b16 %v1013
        %v3869 = vunpack.c.l.b16 %v1014
        %v3870 = vunpack.c.h.b16 %v1014
        %v3871 = vunpack.c.l.b16 %v1015
        %v3872 = vunpack.c.h.b16 %v1015
        %v3873 = vunpack.c.l.b16 %v1016
        %v3874 = vunpack.c.h.b16 %v1016
        %v3875 = vunpack.c.l.b16 %v1017
        %v3876 = vunpack.c.h.b16 %v1017
        %v3877 = vunpack.c.l.b16 %v1018
        %v3878 = vunpack.c.h.b16 %v1018
        %v3879 = vunpack.c.l.b16 %v1019
        %v3880 = vunpack.c.h.b16 %v1019
        %v3881 = vunpack.c.l.b16 %v1020
        %v3882 = vunpack.c.h.b16 %v1020
        %v3883 = vunpack.c.l.b16 %v1021
        %v3884 = vunpack.c.h.b16 %v1021
        %v3885 = vunpack.c.l.b16 %v1022
        %v3886 = vunpack.c.h.b16 %v1022
        %v3887 = vunpack.c.l.b16 %v1023
        %v3888 = vunpack.c.h.b16 %v1023
        %v3889 = vunpack.c.l.b16 %v1024
        %v3890 = vunpack.c.h.b16 %v1024
        %v3891 = vunpack.c.l.b16 %v1025
        %v3892 = vunpack.c.h.b16 %v1025
        %v3893 = vunpack.c.l.b16 %v1026
        %v3894 = vunpack.c.h.b16 %v1026
        %v3895 = vunpack.c.l.b16 %v1027
        %v3896 = vunpack.c.h.b16 %v1027
        %v3897 = vunpack.c.l.b16 %v1028
        %v3898 = vunpack.c.h.b16 %v1028
        %v3899 = vunpack.c.l.b16 %v1029
        %v3900 = vunpack.c.h.b16 %v1029
        %v3901 = vunpack.c.l.b16 %v1030
        %v3902 = vunpack.c.h.b16 %v1030
        %v3903 = vunpack.c.l.b16 %v1031
        %v3904 = vunpack.c.h.b16 %v1031
        %v3905 = vunpack.c.l.b16 %v1032
        %v3906 = vunpack.c.h.b16 %v1032
        %v3907 = vunpack.c.l.b16 %v1033
        %v3908 = vunpack.c.h.b16 %v1033
        %v3909 = vunpack.c.l.b16 %v1034
        %v3910 = vunpack.c.h.b16 %v1034
        %v3911 = vunpack.c.l.b16 %v1035
        %v3912 = vunpack.c.h.b16 %v1035
        %v3913 = vunpack.c.l.b16 %v1036
        %v3914 = vunpack.c.h.b16 %v1036
        %v3915 = vunpack.c.l.b16 %v1037
        %v3916 = vunpack.c.h.b16 %v1037
        %v3917 = vunpack.c.l.b16 %v1038
        %v3918 = vunpack.c.h.b16 %v1038
        %v3919 = vunpack.c.l.b16 %v1039
        %v3920 = vunpack.c.h.b16 %v1039
        %v3921 = vunpack.c.l.b16 %v1040
        %v3922 = vunpack.c.h.b16 %v1040
        %v3923 = vunpack.c.l.b16 %v1041
        %v3924 = vunpack.c.h.b16 %v1041
        %v3925 = vunpack.c.l.b16 %v1042
        %v3926 = vunpack.c.h.b16 %v1042
        %v3927 = vunpack.c.l.b16 %v1043
        %v3928 = vunpack.c.h.b16 %v1043
        %v3929 = vunpack.c.l.b16 %v1044
        %v3930 = vunpack.c.h.b16 %v1044
        %v3931 = vunpack.c.l.b16 %v1045
        %v3932 = vunpack.c.h.b16 %v1045
        %v3933 = vunpack.c.l.b16 %v1046
        %v3934 = vunpack.c.h.b16 %v1046
        %v3935 = vunpack.c.l.b16 %v1047
        %v3936 = vunpack.c.h.b16 %v1047
        %v3937 = vunpack.c.l.b16 %v1048
        %v3938 = vunpack.c.h.b16 %v1048
        %v3939 = vunpack.c.l.b16 %v1049
        %v3940 = vunpack.c.h.b16 %v1049
        %v3941 = vunpack.c.l.b16 %v1050
        %v3942 = vunpack.c.h.b16 %v1050
        %v3943 = vunpack.c.l.b16 %v1051
        %v3944 = vunpack.c.h.b16 %v1051
        %v3945 = vunpack.c.l.b16 %v1052
        %v3946 = vunpack.c.h.b16 %v1052
        %v3947 = vunpack.c.l.b16 %v1053
        %v3948 = vunpack.c.h.b16 %v1053
        %v3949 = vunpack.c.l.b16 %v1054
        %v3950 = vunpack.c.h.b16 %v1054
        %v3951 = vunpack.c.l.b16 %v1055
        %v3952 = vunpack.c.h.b16 %v1055
        %v3953 = vunpack.c.l.b16 %v1056
        %v3954 = vunpack.c.h.b16 %v1056
        %v3955 = vunpack.c.l.b16 %v1057
        %v3956 = vunpack.c.h.b16 %v1057
        %v3957 = vunpack.c.l.b16 %v1058
        %v3958 = vunpack.c.h.b16 %v1058
        %v3959 = vunpack.c.l.b16 %v1059
        %v3960 = vunpack.c.h.b16 %v1059
        %v3961 = vunpack.c.l.b16 %v1060
        %v3962 = vunpack.c.h.b16 %v1060
        %v3963 = vunpack.c.l.b16 %v1061
        %v3964 = vunpack.c.h.b16 %v1061
        %v3965 = vunpack.c.l.b16 %v1062
        %v3966 = vunpack.c.h.b16 %v1062
        %v3967 = vunpack.c.l.b16 %v1063
        %v3968 = vunpack.c.h.b16 %v1063
        %v3969 = vunpack.c.l.b16 %v1064
        %v3970 = vunpack.c.h.b16 %v1064
        %v3971 = vunpack.c.l.b16 %v1065
        %v3972 = vunpack.c.h.b16 %v1065
        %v3973 = vunpack.c.l.b16 %v1066
        %v3974 = vunpack.c.h.b16 %v1066
        %v3975 = vunpack.c.l.b16 %v1067
        %v3976 = vunpack.c.h.b16 %v1067
        %v3977 = vunpack.c.l.b16 %v1068
        %v3978 = vunpack.c.h.b16 %v1068
        %v3979 = vunpack.c.l.b16 %v1069
        %v3980 = vunpack.c.h.b16 %v1069
        %v3981 = vunpack.c.l.b16 %v1070
        %v3982 = vunpack.c.h.b16 %v1070
        %v3983 = vunpack.c.l.b16 %v1071
        %v3984 = vunpack.c.h.b16 %v1071
        %v3985 = vunpack.c.l.b16 %v1072
        %v3986 = vunpack.c.h.b16 %v1072
        %v3987 = vunpack.c.l.b16 %v1073
        %v3988 = vunpack.c.h.b16 %v1073
        %v3989 = vunpack.c.l.b16 %v1074
        %v3990 = vunpack.c.h.b16 %v1074
        %v3991 = vunpack.c.l.b16 %v1075
        %v3992 = vunpack.c.h.b16 %v1075
        %v3993 = vunpack.c.l.b16 %v1076
        %v3994 = vunpack.c.h.b16 %v1076
        %v3995 = vunpack.c.l.b16 %v1077
        %v3996 = vunpack.c.h.b16 %v1077
        %v3997 = vunpack.c.l.b16 %v1078
        %v3998 = vunpack.c.h.b16 %v1078
        %v3999 = vunpack.c.l.b16 %v1079
        %v4000 = vunpack.c.h.b16 %v1079
        %v4001 = vunpack.c.l.b16 %v1080
        %v4002 = vunpack.c.h.b16 %v1080
        %v4003 = vunpack.c.l.b16 %v1081
        %v4004 = vunpack.c.h.b16 %v1081
        %v4005 = vunpack.c.l.b16 %v1082
        %v4006 = vunpack.c.h.b16 %v1082
        %v4007 = vunpack.c.l.b16 %v1083
        %v4008 = vunpack.c.h.b16 %v1083
        %v4009 = vunpack.c.l.b16 %v1084
        %v4010 = vunpack.c.h.b16 %v1084
        %v4011 = vunpack.c.l.b16 %v1085
        %v4012 = vunpack.c.h.b16 %v1085
        %v4013 = vunpack.c.l.b16 %v1086
        %v4014 = vunpack.c.h.b16 %v1086
        %v4015 = vunpack.c.l.b16 %v1087
        %v4016 = vunpack.c.h.b16 %v1087
        %v4017 = vunpack.c.l.b16 %v1088
        %v4018 = vunpack.c.h.b16 %v1088
        %v4019 = vunpack.c.l.b16 %v1089
        %v4020 = vunpack.c.h.b16 %v1089
        %v4021 = vunpack.c.l.b16 %v1090
        %v4022 = vunpack.c.h.b16 %v1090
        %v4023 = vunpack.c.l.b16 %v1091
        %v4024 = vunpack.c.h.b16 %v1091
        %v4025 = vunpack.c.l.b16 %v1092
        %v4026 = vunpack.c.h.b16 %v1092
        %v4027 = vunpack.c.l.b16 %v1093
        %v4028 = vunpack.c.h.b16 %v1093
        %v4029 = vunpack.c.l.b16 %v1094
        %v4030 = vunpack.c.h.b16 %v1094
        %v4031 = vunpack.c.l.b16 %v1095
        %v4032 = vunpack.c.h.b16 %v1095
        %v4033 = vunpack.c.l.b16 %v1096
        %v4034 = vunpack.c.h.b16 %v1096
        %v4035 = vunpack.c.l.b16 %v1097
        %v4036 = vunpack.c.h.b16 %v1097
        %v4037 = vunpack.c.l.b16 %v1098
        %v4038 = vunpack.c.h.b16 %v1098
        %v4039 = vunpack.c.l.b16 %v1099
        %v4040 = vunpack.c.h.b16 %v1099
        %v4041 = vunpack.c.l.b16 %v1100
        %v4042 = vunpack.c.h.b16 %v1100
        %v4043 = vunpack.c.l.b16 %v1101
        %v4044 = vunpack.c.h.b16 %v1101
        %v4045 = vunpack.c.l.b16 %v1102
        %v4046 = vunpack.c.h.b16 %v1102
        %v4047 = vunpack.c.l.b16 %v1103
        %v4048 = vunpack.c.h.b16 %v1103
        %v4049 = vunpack.c.l.b16 %v1104
        %v4050 = vunpack.c.h.b16 %v1104
        %v4051 = vunpack.c.l.b16 %v1105
        %v4052 = vunpack.c.h.b16 %v1105
        %v4053 = vunpack.c.l.b16 %v1106
        %v4054 = vunpack.c.h.b16 %v1106
        %v4055 = vunpack.c.l.b16 %v1107
        %v4056 = vunpack.c.h.b16 %v1107
        %v4057 = vunpack.c.l.b16 %v1108
        %v4058 = vunpack.c.h.b16 %v1108
        %v4059 = vunpack.c.l.b16 %v1109
        %v4060 = vunpack.c.h.b16 %v1109
        %v4061 = vunpack.c.l.b16 %v1110
        %v4062 = vunpack.c.h.b16 %v1110
        %v4063 = vunpack.c.l.b16 %v1111
        %v4064 = vunpack.c.h.b16 %v1111
        %v4065 = vunpack.c.l.b16 %v1112
        %v4066 = vunpack.c.h.b16 %v1112
        %v4067 = vunpack.c.l.b16 %v1113
        %v4068 = vunpack.c.h.b16 %v1113
        %v4069 = vunpack.c.l.b16 %v1114
        %v4070 = vunpack.c.h.b16 %v1114
        %v4071 = vunpack.c.l.b16 %v1115
        %v4072 = vunpack.c.h.b16 %v1115
        %v4073 = vunpack.c.l.b16 %v1116
        %v4074 = vunpack.c.h.b16 %v1116
        %v4075 = vunpack.c.l.b16 %v1117
        %v4076 = vunpack.c.h.b16 %v1117
        %v4077 = vunpack.c.l.b16 %v1118
        %v4078 = vunpack.c.h.b16 %v1118
        %v4079 = vunpack.c.l.b16 %v1119
        %v4080 = vunpack.c.h.b16 %v1119
        %v4081 = vunpack.c.l.b16 %v1120
        %v4082 = vunpack.c.h.b16 %v1120
        %v4083 = vunpack.c.l.b16 %v1121
        %v4084 = vunpack.c.h.b16 %v1121
        %v4085 = vunpack.c.l.b16 %v1122
        %v4086 = vunpack.c.h.b16 %v1122
        %v4087 = vunpack.c.l.b16 %v1123
        %v4088 = vunpack.c.h.b16 %v1123
        %v4089 = vunpack.c.l.b16 %v1124
        %v4090 = vunpack.c.h.b16 %v1124
        %v4091 = vunpack.c.l.b16 %v1125
        %v4092 = vunpack.c.h.b16 %v1125
        %v4093 = vunpack.c.l.b16 %v1126
        %v4094 = vunpack.c.h.b16 %v1126
        %v4095 = vunpack.c.l.b16 %v1127
        %v4096 = vunpack.c.h.b16 %v1127
        %v4097 = vunpack.c.l.b16 %v1128
        %v4098 = vunpack.c.h.b16 %v1128
        %v4099 = vunpack.c.l.b16 %v1129
        %v4100 = vunpack.c.h.b16 %v1129
        %v4101 = vunpack.c.l.b16 %v1130
        %v4102 = vunpack.c.h.b16 %v1130
        %v4103 = vunpack.c.l.b16 %v1131
        %v4104 = vunpack.c.h.b16 %v1131
        %v4105 = vunpack.c.l.b16 %v1132
        %v4106 = vunpack.c.h.b16 %v1132
        %v4107 = vunpack.c.l.b16 %v1133
        %v4108 = vunpack.c.h.b16 %v1133
        %v4109 = vunpack.c.l.b16 %v1134
        %v4110 = vunpack.c.h.b16 %v1134
        %v4111 = vunpack.c.l.b16 %v1135
        %v4112 = vunpack.c.h.b16 %v1135
        %v4113 = vunpack.c.l.b16 %v1136
        %v4114 = vunpack.c.h.b16 %v1136
        %v4115 = vunpack.c.l.b16 %v1137
        %v4116 = vunpack.c.h.b16 %v1137
        %v4117 = vunpack.c.l.b16 %v1138
        %v4118 = vunpack.c.h.b16 %v1138
        %v4119 = vunpack.c.l.b16 %v1139
        %v4120 = vunpack.c.h.b16 %v1139
        %v4121 = vunpack.c.l.b16 %v1140
        %v4122 = vunpack.c.h.b16 %v1140
        %v4123 = vunpack.c.l.b16 %v1141
        %v4124 = vunpack.c.h.b16 %v1141
        %v4125 = vunpack.c.l.b16 %v1142
        %v4126 = vunpack.c.h.b16 %v1142
        %v4127 = vunpack.c.l.b16 %v1143
        %v4128 = vunpack.c.h.b16 %v1143
        %v4129 = vunpack.c.l.b16 %v1144
        %v4130 = vunpack.c.h.b16 %v1144
        %v4131 = vunpack.c.l.b16 %v1145
        %v4132 = vunpack.c.h.b16 %v1145
        %v4133 = vunpack.c.l.b16 %v1146
        %v4134 = vunpack.c.h.b16 %v1146
        %v4135 = vunpack.c.l.b16 %v1147
        %v4136 = vunpack.c.h.b16 %v1147
        %v4137 = vunpack.c.l.b16 %v1148
        %v4138 = vunpack.c.h.b16 %v1148
        %v4139 = vunpack.c.l.b16 %v1149
        %v4140 = vunpack.c.h.b16 %v1149
        %v4141 = vunpack.c.l.b16 %v1150
        %v4142 = vunpack.c.h.b16 %v1150
        %v4143 = vunpack.c.l.b16 %v1151
        %v4144 = vunpack.c.h.b16 %v1151
        %v4145 = vunpack.c.l.b16 %v1152
        %v4146 = vunpack.c.h.b16 %v1152
        %v4147 = vunpack.c.l.b16 %v1153
        %v4148 = vunpack.c.h.b16 %v1153
        %v4149 = vunpack.c.l.b16 %v1154
        %v4150 = vunpack.c.h.b16 %v1154
        %v4151 = vunpack.c.l.b16 %v1155
        %v4152 = vunpack.c.h.b16 %v1155
        %v4153 = vunpack.c.l.b16 %v1156
        %v4154 = vunpack.c.h.b16 %v1156
        %v4155 = vunpack.c.l.b16 %v1157
        %v4156 = vunpack.c.h.b16 %v1157
        %v4157 = vunpack.c.l.b16 %v1158
        %v4158 = vunpack.c.h.b16 %v1158
        %v4159 = vunpack.c.l.b16 %v1159
        %v4160 = vunpack.c.h.b16 %v1159
        %v4161 = vunpack.c.l.b16 %v1160
        %v4162 = vunpack.c.h.b16 %v1160
        %v4163 = vunpack.c.l.b16 %v1161
        %v4164 = vunpack.c.h.b16 %v1161
        %v4165 = vunpack.c.l.b16 %v1162
        %v4166 = vunpack.c.h.b16 %v1162
        %v4167 = vunpack.c.l.b16 %v1163
        %v4168 = vunpack.c.h.b16 %v1163
        %v4169 = vunpack.c.l.b16 %v1164
        %v4170 = vunpack.c.h.b16 %v1164
        %v4171 = vunpack.c.l.b16 %v1165
        %v4172 = vunpack.c.h.b16 %v1165
        %v4173 = vunpack.c.l.b16 %v1166
        %v4174 = vunpack.c.h.b16 %v1166
        %v4175 = vunpack.c.l.b16 %v1167
        %v4176 = vunpack.c.h.b16 %v1167
        %v4177 = vunpack.c.l.b16 %v1168
        %v4178 = vunpack.c.h.b16 %v1168
        %v4179 = vunpack.c.l.b16 %v1169
        %v4180 = vunpack.c.h.b16 %v1169
        %v4181 = vunpack.c.l.b16 %v1170
        %v4182 = vunpack.c.h.b16 %v1170
        %v4183 = vunpack.c.l.b16 %v1171
        %v4184 = vunpack.c.h.b16 %v1171
        %v4185 = vunpack.c.l.b16 %v1172
        %v4186 = vunpack.c.h.b16 %v1172
        %v4187 = vunpack.c.l.b16 %v1173
        %v4188 = vunpack.c.h.b16 %v1173
        %v4189 = vunpack.c.l.b16 %v1174
        %v4190 = vunpack.c.h.b16 %v1174
        %v4191 = vunpack.c.l.b16 %v1175
        %v4192 = vunpack.c.h.b16 %v1175
        %v4193 = vunpack.c.l.b16 %v1176
        %v4194 = vunpack.c.h.b16 %v1176
        %v4195 = vunpack.c.l.b16 %v1177
        %v4196 = vunpack.c.h.b16 %v1177
        %v4197 = vunpack.c.l.b16 %v1178
        %v4198 = vunpack.c.h.b16 %v1178
        %v4199 = vunpack.c.l.b16 %v1179
        %v4200 = vunpack.c.h.b16 %v1179
        %v4201 = vunpack.c.l.b16 %v1180
        %v4202 = vunpack.c.h.b16 %v1180
        %v4203 = vunpack.c.l.b16 %v1181
        %v4204 = vunpack.c.h.b16 %v1181
        %v4205 = vunpack.c.l.b16 %v1182
        %v4206 = vunpack.c.h.b16 %v1182
        %v4207 = vunpack.c.l.b16 %v1183
        %v4208 = vunpack.c.h.b16 %v1183
        %v4209 = vunpack.c.l.b16 %v1184
        %v4210 = vunpack.c.h.b16 %v1184
        %v4211 = vunpack.c.l.b16 %v1185
        %v4212 = vunpack.c.h.b16 %v1185
        %v4213 = vunpack.c.l.b16 %v1186
        %v4214 = vunpack.c.h.b16 %v1186
        %v4215 = vunpack.c.l.b16 %v1187
        %v4216 = vunpack.c.h.b16 %v1187
        %v4217 = vunpack.c.l.b16 %v1188
        %v4218 = vunpack.c.h.b16 %v1188
        %v4219 = vunpack.c.l.b16 %v1189
        %v4220 = vunpack.c.h.b16 %v1189
        %v4221 = vunpack.c.l.b16 %v1190
        %v4222 = vunpack.c.h.b16 %v1190
        %v4223 = vunpack.c.l.b16 %v1191
        %v4224 = vunpack.c.h.b16 %v1191
        %v4225 = vunpack.c.l.b16 %v1192
        %v4226 = vunpack.c.h.b16 %v1192
        %v4227 = vunpack.c.l.b16 %v1193
        %v4228 = vunpack.c.h.b16 %v1193
        %v4229 = vunpack.c.l.b16 %v1194
        %v4230 = vunpack.c.h.b16 %v1194
        %v4231 = vunpack.c.l.b16 %v1195
        %v4232 = vunpack.c.h.b16 %v1195
        %v4233 = vunpack.c.l.b16 %v1196
        %v4234 = vunpack.c.h.b16 %v1196
        %v4235 = vunpack.c.l.b16 %v1197
        %v4236 = vunpack.c.h.b16 %v1197
        %v4237 = vunpack.c.l.b16 %v1198
        %v4238 = vunpack.c.h.b16 %v1198
        %v4239 = vunpack.c.l.b16 %v1199
        %v4240 = vunpack.c.h.b16 %v1199
        %v4241 = vunpack.c.l.b16 %v1200
        %v4242 = vunpack.c.h.b16 %v1200
        %v4243 = vunpack.c.l.b16 %v1201
        %v4244 = vunpack.c.h.b16 %v1201
        %v4245 = vunpack.c.l.b16 %v1202
        %v4246 = vunpack.c.h.b16 %v1202
        %v4247 = vunpack.c.l.b16 %v1203
        %v4248 = vunpack.c.h.b16 %v1203
        %v4249 = vunpack.c.l.b16 %v1204
        %v4250 = vunpack.c.h.b16 %v1204
        %v4251 = vunpack.c.l.b16 %v1205
        %v4252 = vunpack.c.h.b16 %v1205
        %v4253 = vunpack.c.l.b16 %v1206
        %v4254 = vunpack.c.h.b16 %v1206
        %v4255 = vunpack.c.l.b16 %v1207
        %v4256 = vunpack.c.h.b16 %v1207
        %v4257 = vunpack.c.l.b16 %v1208
        %v4258 = vunpack.c.h.b16 %v1208
        %v4259 = vunpack.c.l.b16 %v1209
        %v4260 = vunpack.c.h.b16 %v1209
        %v4261 = vunpack.c.l.b16 %v1210
        %v4262 = vunpack.c.h.b16 %v1210
        %v4263 = vunpack.c.l.b16 %v1211
        %v4264 = vunpack.c.h.b16 %v1211
        %v4265 = vunpack.c.l.b16 %v1212
        %v4266 = vunpack.c.h.b16 %v1212
        %v4267 = vunpack.c.l.b16 %v1213
        %v4268 = vunpack.c.h.b16 %v1213
        %v4269 = vunpack.c.l.b16 %v1214
        %v4270 = vunpack.c.h.b16 %v1214
        %v4271 = vunpack.c.l.b16 %v1215
        %v4272 = vunpack.c.h.b16 %v1215
        %v4273 = vunpack.c.l.b16 %v1216
        %v4274 = vunpack.c.h.b16 %v1216
        %v4275 = vunpack.c.l.b16 %v1217
        %v4276 = vunpack.c.h.b16 %v1217
        %v4277 = vunpack.c.l.b16 %v1218
        %v4278 = vunpack.c.h.b16 %v1218
        %v4279 = vunpack.c.l.b16 %v1219
        %v4280 = vunpack.c.h.b16 %v1219
        %v4281 = vunpack.c.l.b16 %v1220
        %v4282 = vunpack.c.h.b16 %v1220
        %v4283 = vunpack.c.l.b16 %v1221
        %v4284 = vunpack.c.h.b16 %v1221
        %v4285 = vunpack.c.l.b16 %v1222
        %v4286 = vunpack.c.h.b16 %v1222
        %v4287 = vunpack.c.l.b16 %v1223
        %v4288 = vunpack.c.h.b16 %v1223
        %v4289 = vunpack.c.l.b16 %v1224
        %v4290 = vunpack.c.h.b16 %v1224
        %v4291 = vunpack.c.l.b16 %v1225
        %v4292 = vunpack.c.h.b16 %v1225
        %v4293 = vunpack.c.l.b16 %v1226
        %v4294 = vunpack.c.h.b16 %v1226
        %v4295 = vunpack.c.l.b16 %v1227
        %v4296 = vunpack.c.h.b16 %v1227
        %v4297 = vunpack.c.l.b16 %v1228
        %v4298 = vunpack.c.h.b16 %v1228
        %v4299 = vunpack.c.l.b16 %v1229
        %v4300 = vunpack.c.h.b16 %v1229
        %v4301 = vunpack.c.l.b16 %v1230
        %v4302 = vunpack.c.h.b16 %v1230
        %v4303 = vunpack.c.l.b16 %v1231
        %v4304 = vunpack.c.h.b16 %v1231
        %v4305 = vunpack.c.l.b16 %v1232
        %v4306 = vunpack.c.h.b16 %v1232
        %v4307 = vunpack.c.l.b16 %v1233
        %v4308 = vunpack.c.h.b16 %v1233
        %v4309 = vunpack.c.l.b16 %v1234
        %v4310 = vunpack.c.h.b16 %v1234
        %v4311 = vunpack.c.l.b16 %v1235
        %v4312 = vunpack.c.h.b16 %v1235
        %v4313 = vunpack.c.l.b16 %v1236
        %v4314 = vunpack.c.h.b16 %v1236
        %v4315 = vunpack.c.l.b16 %v1237
        %v4316 = vunpack.c.h.b16 %v1237
        %v4317 = vunpack.c.l.b16 %v1238
        %v4318 = vunpack.c.h.b16 %v1238
        %v4319 = vunpack.c.l.b16 %v1239
        %v4320 = vunpack.c.h.b16 %v1239
        %v4321 = vunpack.c.l.b16 %v1240
        %v4322 = vunpack.c.h.b16 %v1240
        %v4323 = vunpack.c.l.b16 %v1241
        %v4324 = vunpack.c.h.b16 %v1241
        %v4325 = vunpack.c.l.b16 %v1242
        %v4326 = vunpack.c.h.b16 %v1242
        %v4327 = vunpack.c.l.b16 %v1243
        %v4328 = vunpack.c.h.b16 %v1243
        %v4329 = vunpack.c.l.b16 %v1244
        %v4330 = vunpack.c.h.b16 %v1244
        %v4331 = vunpack.c.l.b16 %v1245
        %v4332 = vunpack.c.h.b16 %v1245
        %v4333 = vunpack.c.l.b16 %v1246
        %v4334 = vunpack.c.h.b16 %v1246
        %v4335 = vunpack.c.l.b16 %v1247
        %v4336 = vunpack.c.h.b16 %v1247
        %v4337 = vunpack.c.l.b16 %v1248
        %v4338 = vunpack.c.h.b16 %v1248
        %v4339 = vunpack.c.l.b16 %v1249
        %v4340 = vunpack.c.h.b16 %v1249
        %v4341 = vunpack.c.l.b16 %v1250
        %v4342 = vunpack.c.h.b16 %v1250
        %v4343 = vunpack.c.l.b16 %v1251
        %v4344 = vunpack.c.h.b16 %v1251
        %v4345 = vunpack.c.l.b16 %v1252
        %v4346 = vunpack.c.h.b16 %v1252
        %v4347 = vunpack.c.l.b16 %v1253
        %v4348 = vunpack.c.h.b16 %v1253
        %v4349 = vunpack.c.l.b16 %v1254
        %v4350 = vunpack.c.h.b16 %v1254
        %v4351 = vunpack.c.l.b16 %v1255
        %v4352 = vunpack.c.h.b16 %v1255
        %v4353 = vunpack.c.l.b16 %v1256
        %v4354 = vunpack.c.h.b16 %v1256
        %v4355 = vunpack.c.l.b16 %v1257
        %v4356 = vunpack.c.h.b16 %v1257
        %v4357 = vunpack.c.l.b16 %v1258
        %v4358 = vunpack.c.h.b16 %v1258
        %v4359 = vunpack.c.l.b16 %v1259
        %v4360 = vunpack.c.h.b16 %v1259
        %v4361 = vunpack.c.l.b16 %v1260
        %v4362 = vunpack.c.h.b16 %v1260
        %v4363 = vunpack.c.l.b16 %v1261
        %v4364 = vunpack.c.h.b16 %v1261
        %v4365 = vunpack.c.l.b16 %v1262
        %v4366 = vunpack.c.h.b16 %v1262
        %v4367 = vunpack.c.l.b16 %v1263
        %v4368 = vunpack.c.h.b16 %v1263
        %v4369 = vunpack.c.l.b16 %v1264
        %v4370 = vunpack.c.h.b16 %v1264
        %v4371 = vunpack.c.l.b16 %v1265
        %v4372 = vunpack.c.h.b16 %v1265
        %v4373 = vunpack.c.l.b16 %v1266
        %v4374 = vunpack.c.h.b16 %v1266
        %v4375 = vunpack.c.l.b16 %v1267
        %v4376 = vunpack.c.h.b16 %v1267
        %v4377 = vunpack.c.l.b16 %v1268
        %v4378 = vunpack.c.h.b16 %v1268
        %v4379 = vunpack.c.l.b16 %v1269
        %v4380 = vunpack.c.h.b16 %v1269
        %v4381 = vunpack.c.l.b16 %v1270
        %v4382 = vunpack.c.h.b16 %v1270
        %v4383 = vunpack.c.l.b16 %v1271
        %v4384 = vunpack.c.h.b16 %v1271
        %v4385 = vunpack.c.l.b16 %v1272
        %v4386 = vunpack.c.h.b16 %v1272
        %v4387 = vunpack.c.l.b16 %v1273
        %v4388 = vunpack.c.h.b16 %v1273
        %v4389 = vunpack.c.l.b16 %v1274
        %v4390 = vunpack.c.h.b16 %v1274
        %v4391 = vunpack.c.l.b16 %v1275
        %v4392 = vunpack.c.h.b16 %v1275
        %v4393 = vunpack.c.l.b16 %v1276
        %v4394 = vunpack.c.h.b16 %v1276
        %v4395 = vunpack.c.l.b16 %v1277
        %v4396 = vunpack.c.h.b16 %v1277
        %v4397 = vunpack.c.l.b16 %v1278
        %v4398 = vunpack.c.h.b16 %v1278
        %v4399 = vunpack.c.l.b16 %v1279
        %v4400 = vunpack.c.h.b16 %v1279
        %v4401 = vunpack.c.l.b16 %v1280
        %v4402 = vunpack.c.h.b16 %v1280
        %v4403 = vunpack.c.l.b16 %v1281
        %v4404 = vunpack.c.h.b16 %v1281
        %v4405 = vunpack.c.l.b16 %v1282
        %v4406 = vunpack.c.h.b16 %v1282
        %v4407 = vunpack.c.l.b16 %v1283
        %v4408 = vunpack.c.h.b16 %v1283
        %v4409 = vunpack.c.l.b16 %v1284
        %v4410 = vunpack.c.h.b16 %v1284
        %v4411 = vunpack.c.l.b16 %v1285
        %v4412 = vunpack.c.h.b16 %v1285
        %v4413 = vunpack.c.l.b16 %v1286
        %v4414 = vunpack.c.h.b16 %v1286
        %v4415 = vunpack.c.l.b16 %v1287
        %v4416 = vunpack.c.h.b16 %v1287
        %v4417 = vunpack.c.l.b16 %v1288
        %v4418 = vunpack.c.h.b16 %v1288
        %v4419 = vunpack.c.l.b16 %v1289
        %v4420 = vunpack.c.h.b16 %v1289
        %v4421 = vunpack.c.l.b16 %v1290
        %v4422 = vunpack.c.h.b16 %v1290
        %v4423 = vunpack.c.l.b16 %v1291
        %v4424 = vunpack.c.h.b16 %v1291
        %v4425 = vunpack.c.l.b16 %v1292
        %v4426 = vunpack.c.h.b16 %v1292
        %v4427 = vunpack.c.l.b16 %v1293
        %v4428 = vunpack.c.h.b16 %v1293
        %v4429 = vunpack.c.l.b16 %v1294
        %v4430 = vunpack.c.h.b16 %v1294
        %v4431 = vunpack.c.l.b16 %v1295
        %v4432 = vunpack.c.h.b16 %v1295
        %v4433 = vunpack.c.l.b16 %v1296
        %v4434 = vunpack.c.h.b16 %v1296
        %v4435 = vunpack.c.l.b16 %v1297
        %v4436 = vunpack.c.h.b16 %v1297
        %v4437 = vunpack.c.l.b16 %v1298
        %v4438 = vunpack.c.h.b16 %v1298
        %v4439 = vunpack.c.l.b16 %v1299
        %v4440 = vunpack.c.h.b16 %v1299
        %v4441 = vunpack.c.l.b16 %v1300
        %v4442 = vunpack.c.h.b16 %v1300
        %v4443 = vunpack.c.l.b16 %v1301
        %v4444 = vunpack.c.h.b16 %v1301
        %v4445 = vunpack.c.l.b16 %v1302
        %v4446 = vunpack.c.h.b16 %v1302
        %v4447 = vunpack.c.l.b16 %v1303
        %v4448 = vunpack.c.h.b16 %v1303
        %v4449 = vunpack.c.l.b16 %v1304
        %v4450 = vunpack.c.h.b16 %v1304
        %v4451 = vunpack.c.l.b16 %v1305
        %v4452 = vunpack.c.h.b16 %v1305
        %v4453 = vunpack.c.l.b16 %v1306
        %v4454 = vunpack.c.h.b16 %v1306
        %v4455 = vunpack.c.l.b16 %v1307
        %v4456 = vunpack.c.h.b16 %v1307
        %v4457 = vunpack.c.l.b16 %v1308
        %v4458 = vunpack.c.h.b16 %v1308
        %v4459 = vunpack.c.l.b16 %v1309
        %v4460 = vunpack.c.h.b16 %v1309
        %v4461 = vunpack.c.l.b16 %v1310
        %v4462 = vunpack.c.h.b16 %v1310
        %v4463 = vpack.c.b16 %v2423, %v2415
        %v4464 = vpack.c.b16 %v2424, %v2416
        %v4465 = vpack.c.b16 %v2425, %v2417
        %v4466 = vpack.c.b16 %v2426, %v2418
        %v4467 = vpack.c.b16 %v2427, %v2419
        %v4468 = vpack.c.b16 %v2428, %v2420
        %v4469 = vpack.c.b16 %v2429, %v2421
        %v4470 = vpack.c.b16 %v2430, %v2422
        %v4471 = vpack.c.b16 %v2439, %v2431
        %v4472 = vpack.c.b16 %v2440, %v2432
        %v4473 = vpack.c.b16 %v2441, %v2433
        %v4474 = vpack.c.b16 %v2442, %v2434
        %v4475 = vpack.c.b16 %v2443, %v2435
        %v4476 = vpack.c.b16 %v2444, %v2436
        %v4477 = vpack.c.b16 %v2445, %v2437
        %v4478 = vpack.c.b16 %v2446, %v2438
        %v4479 = vpack.c.b16 %v2455, %v2447
        %v4480 = vpack.c.b16 %v2456, %v2448
        %v4481 = vpack.c.b16 %v2457, %v2449
        %v4482 = vpack.c.b16 %v2458, %v2450
        %v4483 = vpack.c.b16 %v2459, %v2451
        %v4484 = vpack.c.b16 %v2460, %v2452
        %v4485 = vpack.c.b16 %v2461, %v2453
        %v4486 = vpack.c.b16 %v2462, %v2454
        %v4487 = vpack.c.b16 %v2471, %v2463
        %v4488 = vpack.c.b16 %v2472, %v2464
        %v4489 = vpack.c.b16 %v2473, %v2465
        %v4490 = vpack.c.b16 %v2474, %v2466
        %v4491 = vpack.c.b16 %v2475, %v2467
        %v4492 = vpack.c.b16 %v2476, %v2468
        %v4493 = vpack.c.b16 %v2477, %v2469
        %v4494 = vpack.c.b16 %v2478, %v2470
        %v4495 = vpack.c.b16 %v2487, %v2479
        %v4496 = vpack.c.b16 %v2488, %v2480
        %v4497 = vpack.c.b16 %v2489, %v2481
        %v4498 = vpack.c.b16 %v2490, %v2482
        %v4499 = vpack.c.b16 %v2491, %v2483
        %v4500 = vpack.c.b16 %v2492, %v2484
        %v4501 = vpack.c.b16 %v2493, %v2485
        %v4502 = vpack.c.b16 %v2494, %v2486
        %v4503 = vpack.c.b16 %v2503, %v2495
        %v4504 = vpack.c.b16 %v2504, %v2496
        %v4505 = vpack.c.b16 %v2505, %v2497
        %v4506 = vpack.c.b16 %v2506, %v2498
        %v4507 = vpack.c.b16 %v2507, %v2499
        %v4508 = vpack.c.b16 %v2508, %v2500
        %v4509 = vpack.c.b16 %v2509, %v2501
        %v4510 = vpack.c.b16 %v2510, %v2502
        %v4511 = vpack.c.b16 %v2519, %v2511
        %v4512 = vpack.c.b16 %v2520, %v2512
        %v4513 = vpack.c.b16 %v2521, %v2513
        %v4514 = vpack.c.b16 %v2522, %v2514
        %v4515 = vpack.c.b16 %v2523, %v2515
        %v4516 = vpack.c.b16 %v2524, %v2516
        %v4517 = vpack.c.b16 %v2525, %v2517
        %v4518 = vpack.c.b16 %v2526, %v2518
        %v4519 = vpack.c.b16 %v2535, %v2527
        %v4520 = vpack.c.b16 %v2536, %v2528
        %v4521 = vpack.c.b16 %v2537, %v2529
        %v4522 = vpack.c.b16 %v2538, %v2530
        %v4523 = vpack.c.b16 %v2539, %v2531
        %v4524 = vpack.c.b16 %v2540, %v2532
        %v4525 = vpack.c.b16 %v2541, %v2533
        %v4526 = vpack.c.b16 %v2542, %v2534
        %v4527 = vpack.c.b16 %v2551, %v2543
        %v4528 = vpack.c.b16 %v2552, %v2544
        %v4529 = vpack.c.b16 %v2553, %v2545
        %v4530 = vpack.c.b16 %v2554, %v2546
        %v4531 = vpack.c.b16 %v2555, %v2547
        %v4532 = vpack.c.b16 %v2556, %v2548
        %v4533 = vpack.c.b16 %v2557, %v2549
        %v4534 = vpack.c.b16 %v2558, %v2550
        %v4535 = vpack.c.b16 %v2567, %v2559
        %v4536 = vpack.c.b16 %v2568, %v2560
        %v4537 = vpack.c.b16 %v2569, %v2561
        %v4538 = vpack.c.b16 %v2570, %v2562
        %v4539 = vpack.c.b16 %v2571, %v2563
        %v4540 = vpack.c.b16 %v2572, %v2564
        %v4541 = vpack.c.b16 %v2573, %v2565
        %v4542 = vpack.c.b16 %v2574, %v2566
        %v4543 = vpack.c.b16 %v2583, %v2575
        %v4544 = vpack.c.b16 %v2584, %v2576
        %v4545 = vpack.c.b16 %v2585, %v2577
        %v4546 = vpack.c.b16 %v2586, %v2578
        %v4547 = vpack.c.b16 %v2587, %v2579
        %v4548 = vpack.c.b16 %v2588, %v2580
        %v4549 = vpack.c.b16 %v2589, %v2581
        %v4550 = vpack.c.b16 %v2590, %v2582
        %v4551 = vpack.c.b16 %v2599, %v2591
        %v4552 = vpack.c.b16 %v2600, %v2592
        %v4553 = vpack.c.b16 %v2601, %v2593
        %v4554 = vpack.c.b16 %v2602, %v2594
        %v4555 = vpack.c.b16 %v2603, %v2595
        %v4556 = vpack.c.b16 %v2604, %v2596
        %v4557 = vpack.c.b16 %v2605, %v2597
        %v4558 = vpack.c.b16 %v2606, %v2598
        %v4559 = vpack.c.b16 %v2615, %v2607
        %v4560 = vpack.c.b16 %v2616, %v2608
        %v4561 = vpack.c.b16 %v2617, %v2609
        %v4562 = vpack.c.b16 %v2618, %v2610
        %v4563 = vpack.c.b16 %v2619, %v2611
        %v4564 = vpack.c.b16 %v2620, %v2612
        %v4565 = vpack.c.b16 %v2621, %v2613
        %v4566 = vpack.c.b16 %v2622, %v2614
        %v4567 = vpack.c.b16 %v2631, %v2623
        %v4568 = vpack.c.b16 %v2632, %v2624
        %v4569 = vpack.c.b16 %v2633, %v2625
        %v4570 = vpack.c.b16 %v2634, %v2626
        %v4571 = vpack.c.b16 %v2635, %v2627
        %v4572 = vpack.c.b16 %v2636, %v2628
        %v4573 = vpack.c.b16 %v2637, %v2629
        %v4574 = vpack.c.b16 %v2638, %v2630
        %v4575 = vpack.c.b16 %v2647, %v2639
        %v4576 = vpack.c.b16 %v2648, %v2640
        %v4577 = vpack.c.b16 %v2649, %v2641
        %v4578 = vpack.c.b16 %v2650, %v2642
        %v4579 = vpack.c.b16 %v2651, %v2643
        %v4580 = vpack.c.b16 %v2652, %v2644
        %v4581 = vpack.c.b16 %v2653, %v2645
        %v4582 = vpack.c.b16 %v2654, %v2646
        %v4583 = vpack.c.b16 %v2663, %v2655
        %v4584 = vpack.c.b16 %v2664, %v2656
        %v4585 = vpack.c.b16 %v2665, %v2657
        %v4586 = vpack.c.b16 %v2666, %v2658
        %v4587 = vpack.c.b16 %v2667, %v2659
        %v4588 = vpack.c.b16 %v2668, %v2660
        %v4589 = vpack.c.b16 %v2669, %v2661
        %v4590 = vpack.c.b16 %v2670, %v2662
        %v4591 = vpack.c.b16 %v2679, %v2671
        %v4592 = vpack.c.b16 %v2680, %v2672
        %v4593 = vpack.c.b16 %v2681, %v2673
        %v4594 = vpack.c.b16 %v2682, %v2674
        %v4595 = vpack.c.b16 %v2683, %v2675
        %v4596 = vpack.c.b16 %v2684, %v2676
        %v4597 = vpack.c.b16 %v2685, %v2677
        %v4598 = vpack.c.b16 %v2686, %v2678
        %v4599 = vpack.c.b16 %v2695, %v2687
        %v4600 = vpack.c.b16 %v2696, %v2688
        %v4601 = vpack.c.b16 %v2697, %v2689
        %v4602 = vpack.c.b16 %v2698, %v2690
        %v4603 = vpack.c.b16 %v2699, %v2691
        %v4604 = vpack.c.b16 %v2700, %v2692
        %v4605 = vpack.c.b16 %v2701, %v2693
        %v4606 = vpack.c.b16 %v2702, %v2694
        %v4607 = vpack.c.b16 %v2711, %v2703
        %v4608 = vpack.c.b16 %v2712, %v2704
        %v4609 = vpack.c.b16 %v2713, %v2705
        %v4610 = vpack.c.b16 %v2714, %v2706
        %v4611 = vpack.c.b16 %v2715, %v2707
        %v4612 = vpack.c.b16 %v2716, %v2708
        %v4613 = vpack.c.b16 %v2717, %v2709
        %v4614 = vpack.c.b16 %v2718, %v2710
        %v4615 = vpack.c.b16 %v2727, %v2719
        %v4616 = vpack.c.b16 %v2728, %v2720
        %v4617 = vpack.c.b16 %v2729, %v2721
        %v4618 = vpack.c.b16 %v2730, %v2722
        %v4619 = vpack.c.b16 %v2731, %v2723
        %v4620 = vpack.c.b16 %v2732, %v2724
        %v4621 = vpack.c.b16 %v2733, %v2725
        %v4622 = vpack.c.b16 %v2734, %v2726
        %v4623 = vpack.c.b16 %v2743, %v2735
        %v4624 = vpack.c.b16 %v2744, %v2736
        %v4625 = vpack.c.b16 %v2745, %v2737
        %v4626 = vpack.c.b16 %v2746, %v2738
        %v4627 = vpack.c.b16 %v2747, %v2739
        %v4628 = vpack.c.b16 %v2748, %v2740
        %v4629 = vpack.c.b16 %v2749, %v2741
        %v4630 = vpack.c.b16 %v2750, %v2742
        %v4631 = vpack.c.b16 %v2759, %v2751
        %v4632 = vpack.c.b16 %v2760, %v2752
        %v4633 = vpack.c.b16 %v2761, %v2753
        %v4634 = vpack.c.b16 %v2762, %v2754
        %v4635 = vpack.c.b16 %v2763, %v2755
        %v4636 = vpack.c.b16 %v2764, %v2756
        %v4637 = vpack.c.b16 %v2765, %v2757
        %v4638 = vpack.c.b16 %v2766, %v2758
        %v4639 = vpack.c.b16 %v2775, %v2767
        %v4640 = vpack.c.b16 %v2776, %v2768
        %v4641 = vpack.c.b16 %v2777, %v2769
        %v4642 = vpack.c.b16 %v2778, %v2770
        %v4643 = vpack.c.b16 %v2779, %v2771
        %v4644 = vpack.c.b16 %v2780, %v2772
        %v4645 = vpack.c.b16 %v2781, %v2773
        %v4646 = vpack.c.b16 %v2782, %v2774
        %v4647 = vpack.c.b16 %v2791, %v2783
        %v4648 = vpack.c.b16 %v2792, %v2784
        %v4649 = vpack.c.b16 %v2793, %v2785
        %v4650 = vpack.c.b16 %v2794, %v2786
        %v4651 = vpack.c.b16 %v2795, %v2787
        %v4652 = vpack.c.b16 %v2796, %v2788
        %v4653 = vpack.c.b16 %v2797, %v2789
        %v4654 = vpack.c.b16 %v2798, %v2790
        %v4655 = vpack.c.b16 %v2807, %v2799
        %v4656 = vpack.c.b16 %v2808, %v2800
        %v4657 = vpack.c.b16 %v2809, %v2801
        %v4658 = vpack.c.b16 %v2810, %v2802
        %v4659 = vpack.c.b16 %v2811, %v2803
        %v4660 = vpack.c.b16 %v2812, %v2804
        %v4661 = vpack.c.b16 %v2813, %v2805
        %v4662 = vpack.c.b16 %v2814, %v2806
        %v4663 = vpack.c.b16 %v2823, %v2815
        %v4664 = vpack.c.b16 %v2824, %v2816
        %v4665 = vpack.c.b16 %v2825, %v2817
        %v4666 = vpack.c.b16 %v2826, %v2818
        %v4667 = vpack.c.b16 %v2827, %v2819
        %v4668 = vpack.c.b16 %v2828, %v2820
        %v4669 = vpack.c.b16 %v2829, %v2821
        %v4670 = vpack.c.b16 %v2830, %v2822
        %v4671 = vpack.c.b16 %v2839, %v2831
        %v4672 = vpack.c.b16 %v2840, %v2832
        %v4673 = vpack.c.b16 %v2841, %v2833
        %v4674 = vpack.c.b16 %v2842, %v2834
        %v4675 = vpack.c.b16 %v2843, %v2835
        %v4676 = vpack.c.b16 %v2844, %v2836
        %v4677 = vpack.c.b16 %v2845, %v2837
        %v4678 = vpack.c.b16 %v2846, %v2838
        %v4679 = vpack.c.b16 %v2855, %v2847
        %v4680 = vpack.c.b16 %v2856, %v2848
        %v4681 = vpack.c.b16 %v2857, %v2849
        %v4682 = vpack.c.b16 %v2858, %v2850
        %v4683 = vpack.c.b16 %v2859, %v2851
        %v4684 = vpack.c.b16 %v2860, %v2852
        %v4685 = vpack.c.b16 %v2861, %v2853
        %v4686 = vpack.c.b16 %v2862, %v2854
        %v4687 = vpack.c.b16 %v2871, %v2863
        %v4688 = vpack.c.b16 %v2872, %v2864
        %v4689 = vpack.c.b16 %v2873, %v2865
        %v4690 = vpack.c.b16 %v2874, %v2866
        %v4691 = vpack.c.b16 %v2875, %v2867
        %v4692 = vpack.c.b16 %v2876, %v2868
        %v4693 = vpack.c.b16 %v2877, %v2869
        %v4694 = vpack.c.b16 %v2878, %v2870
        %v4695 = vpack.c.b16 %v2887, %v2879
        %v4696 = vpack.c.b16 %v2888, %v2880
        %v4697 = vpack.c.b16 %v2889, %v2881
        %v4698 = vpack.c.b16 %v2890, %v2882
        %v4699 = vpack.c.b16 %v2891, %v2883
        %v4700 = vpack.c.b16 %v2892, %v2884
        %v4701 = vpack.c.b16 %v2893, %v2885
        %v4702 = vpack.c.b16 %v2894, %v2886
        %v4703 = vpack.c.b16 %v2903, %v2895
        %v4704 = vpack.c.b16 %v2904, %v2896
        %v4705 = vpack.c.b16 %v2905, %v2897
        %v4706 = vpack.c.b16 %v2906, %v2898
        %v4707 = vpack.c.b16 %v2907, %v2899
        %v4708 = vpack.c.b16 %v2908, %v2900
        %v4709 = vpack.c.b16 %v2909, %v2901
        %v4710 = vpack.c.b16 %v2910, %v2902
        %v4711 = vpack.c.b16 %v2919, %v2911
        %v4712 = vpack.c.b16 %v2920, %v2912
        %v4713 = vpack.c.b16 %v2921, %v2913
        %v4714 = vpack.c.b16 %v2922, %v2914
        %v4715 = vpack.c.b16 %v2923, %v2915
        %v4716 = vpack.c.b16 %v2924, %v2916
        %v4717 = vpack.c.b16 %v2925, %v2917
        %v4718 = vpack.c.b16 %v2926, %v2918
        %v4719 = vpack.c.b16 %v2935, %v2927
        %v4720 = vpack.c.b16 %v2936, %v2928
        %v4721 = vpack.c.b16 %v2937, %v2929
        %v4722 = vpack.c.b16 %v2938, %v2930
        %v4723 = vpack.c.b16 %v2939, %v2931
        %v4724 = vpack.c.b16 %v2940, %v2932
        %v4725 = vpack.c.b16 %v2941, %v2933
        %v4726 = vpack.c.b16 %v2942, %v2934
        %v4727 = vpack.c.b16 %v2951, %v2943
        %v4728 = vpack.c.b16 %v2952, %v2944
        %v4729 = vpack.c.b16 %v2953, %v2945
        %v4730 = vpack.c.b16 %v2954, %v2946
        %v4731 = vpack.c.b16 %v2955, %v2947
        %v4732 = vpack.c.b16 %v2956, %v2948
        %v4733 = vpack.c.b16 %v2957, %v2949
        %v4734 = vpack.c.b16 %v2958, %v2950
        %v4735 = vpack.c.b16 %v2967, %v2959
        %v4736 = vpack.c.b16 %v2968, %v2960
        %v4737 = vpack.c.b16 %v2969, %v2961
        %v4738 = vpack.c.b16 %v2970, %v2962
        %v4739 = vpack.c.b16 %v2971, %v2963
        %v4740 = vpack.c.b16 %v2972, %v2964
        %v4741 = vpack.c.b16 %v2973, %v2965
        %v4742 = vpack.c.b16 %v2974, %v2966
        %v4743 = vpack.c.b16 %v2983, %v2975
        %v4744 = vpack.c.b16 %v2984, %v2976
        %v4745 = vpack.c.b16 %v2985, %v2977
        %v4746 = vpack.c.b16 %v2986, %v2978
        %v4747 = vpack.c.b16 %v2987, %v2979
        %v4748 = vpack.c.b16 %v2988, %v2980
        %v4749 = vpack.c.b16 %v2989, %v2981
        %v4750 = vpack.c.b16 %v2990, %v2982
        %v4751 = vpack.c.b16 %v2999, %v2991
        %v4752 = vpack.c.b16 %v3000, %v2992
        %v4753 = vpack.c.b16 %v3001, %v2993
        %v4754 = vpack.c.b16 %v3002, %v2994
        %v4755 = vpack.c.b16 %v3003, %v2995
        %v4756 = vpack.c.b16 %v3004, %v2996
        %v4757 = vpack.c.b16 %v3005, %v2997
        %v4758 = vpack.c.b16 %v3006, %v2998
        %v4759 = vpack.c.b16 %v3015, %v3007
        %v4760 = vpack.c.b16 %v3016, %v3008
        %v4761 = vpack.c.b16 %v3017, %v3009
        %v4762 = vpack.c.b16 %v3018, %v3010
        %v4763 = vpack.c.b16 %v3019, %v3011
        %v4764 = vpack.c.b16 %v3020, %v3012
        %v4765 = vpack.c.b16 %v3021, %v3013
        %v4766 = vpack.c.b16 %v3022, %v3014
        %v4767 = vpack.c.b16 %v3031, %v3023
        %v4768 = vpack.c.b16 %v3032, %v3024
        %v4769 = vpack.c.b16 %v3033, %v3025
        %v4770 = vpack.c.b16 %v3034, %v3026
        %v4771 = vpack.c.b16 %v3035, %v3027
        %v4772 = vpack.c.b16 %v3036, %v3028
        %v4773 = vpack.c.b16 %v3037, %v3029
        %v4774 = vpack.c.b16 %v3038, %v3030
        %v4775 = vpack.c.b16 %v3047, %v3039
        %v4776 = vpack.c.b16 %v3048, %v3040
        %v4777 = vpack.c.b16 %v3049, %v3041
        %v4778 = vpack.c.b16 %v3050, %v3042
        %v4779 = vpack.c.b16 %v3051, %v3043
        %v4780 = vpack.c.b16 %v3052, %v3044
        %v4781 = vpack.c.b16 %v3053, %v3045
        %v4782 = vpack.c.b16 %v3054, %v3046
        %v4783 = vpack.c.b16 %v3063, %v3055
        %v4784 = vpack.c.b16 %v3064, %v3056
        %v4785 = vpack.c.b16 %v3065, %v3057
        %v4786 = vpack.c.b16 %v3066, %v3058
        %v4787 = vpack.c.b16 %v3067, %v3059
        %v4788 = vpack.c.b16 %v3068, %v3060
        %v4789 = vpack.c.b16 %v3069, %v3061
        %v4790 = vpack.c.b16 %v3070, %v3062
        %v4791 = vpack.c.b16 %v3079, %v3071
        %v4792 = vpack.c.b16 %v3080, %v3072
        %v4793 = vpack.c.b16 %v3081, %v3073
        %v4794 = vpack.c.b16 %v3082, %v3074
        %v4795 = vpack.c.b16 %v3083, %v3075
        %v4796 = vpack.c.b16 %v3084, %v3076
        %v4797 = vpack.c.b16 %v3085, %v3077
        %v4798 = vpack.c.b16 %v3086, %v3078
        %v4799 = vpack.c.b16 %v3095, %v3087
        %v4800 = vpack.c.b16 %v3096, %v3088
        %v4801 = vpack.c.b16 %v3097, %v3089
        %v4802 = vpack.c.b16 %v3098, %v3090
        %v4803 = vpack.c.b16 %v3099, %v3091
        %v4804 = vpack.c.b16 %v3100, %v3092
        %v4805 = vpack.c.b16 %v3101, %v3093
        %v4806 = vpack.c.b16 %v3102, %v3094
        %v4807 = vpack.c.b16 %v3111, %v3103
        %v4808 = vpack.c.b16 %v3112, %v3104
        %v4809 = vpack.c.b16 %v3113, %v3105
        %v4810 = vpack.c.b16 %v3114, %v3106
        %v4811 = vpack.c.b16 %v3115, %v3107
        %v4812 = vpack.c.b16 %v3116, %v3108
        %v4813 = vpack.c.b16 %v3117, %v3109
        %v4814 = vpack.c.b16 %v3118, %v3110
        %v4815 = vpack.c.b16 %v3127, %v3119
        %v4816 = vpack.c.b16 %v3128, %v3120
        %v4817 = vpack.c.b16 %v3129, %v3121
        %v4818 = vpack.c.b16 %v3130, %v3122
        %v4819 = vpack.c.b16 %v3131, %v3123
        %v4820 = vpack.c.b16 %v3132, %v3124
        %v4821 = vpack.c.b16 %v3133, %v3125
        %v4822 = vpack.c.b16 %v3134, %v3126
        %v4823 = vpack.c.b16 %v3143, %v3135
        %v4824 = vpack.c.b16 %v3144, %v3136
        %v4825 = vpack.c.b16 %v3145, %v3137
        %v4826 = vpack.c.b16 %v3146, %v3138
        %v4827 = vpack.c.b16 %v3147, %v3139
        %v4828 = vpack.c.b16 %v3148, %v3140
        %v4829 = vpack.c.b16 %v3149, %v3141
        %v4830 = vpack.c.b16 %v3150, %v3142
        %v4831 = vpack.c.b16 %v3159, %v3151
        %v4832 = vpack.c.b16 %v3160, %v3152
        %v4833 = vpack.c.b16 %v3161, %v3153
        %v4834 = vpack.c.b16 %v3162, %v3154
        %v4835 = vpack.c.b16 %v3163, %v3155
        %v4836 = vpack.c.b16 %v3164, %v3156
        %v4837 = vpack.c.b16 %v3165, %v3157
        %v4838 = vpack.c.b16 %v3166, %v3158
        %v4839 = vpack.c.b16 %v3175, %v3167
        %v4840 = vpack.c.b16 %v3176, %v3168
        %v4841 = vpack.c.b16 %v3177, %v3169
        %v4842 = vpack.c.b16 %v3178, %v3170
        %v4843 = vpack.c.b16 %v3179, %v3171
        %v4844 = vpack.c.b16 %v3180, %v3172
        %v4845 = vpack.c.b16 %v3181, %v3173
        %v4846 = vpack.c.b16 %v3182, %v3174
        %v4847 = vpack.c.b16 %v3191, %v3183
        %v4848 = vpack.c.b16 %v3192, %v3184
        %v4849 = vpack.c.b16 %v3193, %v3185
        %v4850 = vpack.c.b16 %v3194, %v3186
        %v4851 = vpack.c.b16 %v3195, %v3187
        %v4852 = vpack.c.b16 %v3196, %v3188
        %v4853 = vpack.c.b16 %v3197, %v3189
        %v4854 = vpack.c.b16 %v3198, %v3190
        %v4855 = vpack.c.b16 %v3207, %v3199
        %v4856 = vpack.c.b16 %v3208, %v3200
        %v4857 = vpack.c.b16 %v3209, %v3201
        %v4858 = vpack.c.b16 %v3210, %v3202
        %v4859 = vpack.c.b16 %v3211, %v3203
        %v4860 = vpack.c.b16 %v3212, %v3204
        %v4861 = vpack.c.b16 %v3213, %v3205
        %v4862 = vpack.c.b16 %v3214, %v3206
        %v4863 = vpack.c.b16 %v3223, %v3215
        %v4864 = vpack.c.b16 %v3224, %v3216
        %v4865 = vpack.c.b16 %v3225, %v3217
        %v4866 = vpack.c.b16 %v3226, %v3218
        %v4867 = vpack.c.b16 %v3227, %v3219
        %v4868 = vpack.c.b16 %v3228, %v3220
        %v4869 = vpack.c.b16 %v3229, %v3221
        %v4870 = vpack.c.b16 %v3230, %v3222
        %v4871 = vpack.c.b16 %v3239, %v3231
        %v4872 = vpack.c.b16 %v3240, %v3232
        %v4873 = vpack.c.b16 %v3241, %v3233
        %v4874 = vpack.c.b16 %v3242, %v3234
        %v4875 = vpack.c.b16 %v3243, %v3235
        %v4876 = vpack.c.b16 %v3244, %v3236
        %v4877 = vpack.c.b16 %v3245, %v3237
        %v4878 = vpack.c.b16 %v3246, %v3238
        %v4879 = vpack.c.b16 %v3255, %v3247
        %v4880 = vpack.c.b16 %v3256, %v3248
        %v4881 = vpack.c.b16 %v3257, %v3249
        %v4882 = vpack.c.b16 %v3258, %v3250
        %v4883 = vpack.c.b16 %v3259, %v3251
        %v4884 = vpack.c.b16 %v3260, %v3252
        %v4885 = vpack.c.b16 %v3261, %v3253
        %v4886 = vpack.c.b16 %v3262, %v3254
        %v4887 = vpack.c.b16 %v3271, %v3263
        %v4888 = vpack.c.b16 %v3272, %v3264
        %v4889 = vpack.c.b16 %v3273, %v3265
        %v4890 = vpack.c.b16 %v3274, %v3266
        %v4891 = vpack.c.b16 %v3275, %v3267
        %v4892 = vpack.c.b16 %v3276, %v3268
        %v4893 = vpack.c.b16 %v3277, %v3269
        %v4894 = vpack.c.b16 %v3278, %v3270
        %v4895 = vpack.c.b16 %v3287, %v3279
        %v4896 = vpack.c.b16 %v3288, %v3280
        %v4897 = vpack.c.b16 %v3289, %v3281
        %v4898 = vpack.c.b16 %v3290, %v3282
        %v4899 = vpack.c.b16 %v3291, %v3283
        %v4900 = vpack.c.b16 %v3292, %v3284
        %v4901 = vpack.c.b16 %v3293, %v3285
        %v4902 = vpack.c.b16 %v3294, %v3286
        %v4903 = vpack.c.b16 %v3303, %v3295
        %v4904 = vpack.c.b16 %v3304, %v3296
        %v4905 = vpack.c.b16 %v3305, %v3297
        %v4906 = vpack.c.b16 %v3306, %v3298
        %v4907 = vpack.c.b16 %v3307, %v3299
        %v4908 = vpack.c.b16 %v3308, %v3300
        %v4909 = vpack.c.b16 %v3309, %v3301
        %v4910 = vpack.c.b16 %v3310, %v3302
        %v4911 = vpack.c.b16 %v3319, %v3311
        %v4912 = vpack.c.b16 %v3320, %v3312
        %v4913 = vpack.c.b16 %v3321, %v3313
        %v4914 = vpack.c.b16 %v3322, %v3314
        %v4915 = vpack.c.b16 %v3323, %v3315
        %v4916 = vpack.c.b16 %v3324, %v3316
        %v4917 = vpack.c.b16 %v3325, %v3317
        %v4918 = vpack.c.b16 %v3326, %v3318
        %v4919 = vpack.c.b16 %v3335, %v3327
        %v4920 = vpack.c.b16 %v3336, %v3328
        %v4921 = vpack.c.b16 %v3337, %v3329
        %v4922 = vpack.c.b16 %v3338, %v3330
        %v4923 = vpack.c.b16 %v3339, %v3331
        %v4924 = vpack.c.b16 %v3340, %v3332
        %v4925 = vpack.c.b16 %v3341, %v3333
        %v4926 = vpack.c.b16 %v3342, %v3334
        %v4927 = vpack.c.b16 %v3351, %v3343
        %v4928 = vpack.c.b16 %v3352, %v3344
        %v4929 = vpack.c.b16 %v3353, %v3345
        %v4930 = vpack.c.b16 %v3354, %v3346
        %v4931 = vpack.c.b16 %v3355, %v3347
        %v4932 = vpack.c.b16 %v3356, %v3348
        %v4933 = vpack.c.b16 %v3357, %v3349
        %v4934 = vpack.c.b16 %v3358, %v3350
        %v4935 = vpack.c.b16 %v3367, %v3359
        %v4936 = vpack.c.b16 %v3368, %v3360
        %v4937 = vpack.c.b16 %v3369, %v3361
        %v4938 = vpack.c.b16 %v3370, %v3362
        %v4939 = vpack.c.b16 %v3371, %v3363
        %v4940 = vpack.c.b16 %v3372, %v3364
        %v4941 = vpack.c.b16 %v3373, %v3365
        %v4942 = vpack.c.b16 %v3374, %v3366
        %v4943 = vpack.c.b16 %v3383, %v3375
        %v4944 = vpack.c.b16 %v3384, %v3376
        %v4945 = vpack.c.b16 %v3385, %v3377
        %v4946 = vpack.c.b16 %v3386, %v3378
        %v4947 = vpack.c.b16 %v3387, %v3379
        %v4948 = vpack.c.b16 %v3388, %v3380
        %v4949 = vpack.c.b16 %v3389, %v3381
        %v4950 = vpack.c.b16 %v3390, %v3382
        %v4951 = vpack.c.b16 %v3399, %v3391
        %v4952 = vpack.c.b16 %v3400, %v3392
        %v4953 = vpack.c.b16 %v3401, %v3393
        %v4954 = vpack.c.b16 %v3402, %v3394
        %v4955 = vpack.c.b16 %v3403, %v3395
        %v4956 = vpack.c.b16 %v3404, %v3396
        %v4957 = vpack.c.b16 %v3405, %v3397
        %v4958 = vpack.c.b16 %v3406, %v3398
        %v4959 = vpack.c.b16 %v3415, %v3407
        %v4960 = vpack.c.b16 %v3416, %v3408
        %v4961 = vpack.c.b16 %v3417, %v3409
        %v4962 = vpack.c.b16 %v3418, %v3410
        %v4963 = vpack.c.b16 %v3419, %v3411
        %v4964 = vpack.c.b16 %v3420, %v3412
        %v4965 = vpack.c.b16 %v3421, %v3413
        %v4966 = vpack.c.b16 %v3422, %v3414
        %v4967 = vpack.c.b16 %v3431, %v3423
        %v4968 = vpack.c.b16 %v3432, %v3424
        %v4969 = vpack.c.b16 %v3433, %v3425
        %v4970 = vpack.c.b16 %v3434, %v3426
        %v4971 = vpack.c.b16 %v3435, %v3427
        %v4972 = vpack.c.b16 %v3436, %v3428
        %v4973 = vpack.c.b16 %v3437, %v3429
        %v4974 = vpack.c.b16 %v3438, %v3430
        %v4975 = vpack.c.b16 %v3447, %v3439
        %v4976 = vpack.c.b16 %v3448, %v3440
        %v4977 = vpack.c.b16 %v3449, %v3441
        %v4978 = vpack.c.b16 %v3450, %v3442
        %v4979 = vpack.c.b16 %v3451, %v3443
        %v4980 = vpack.c.b16 %v3452, %v3444
        %v4981 = vpack.c.b16 %v3453, %v3445
        %v4982 = vpack.c.b16 %v3454, %v3446
        %v4983 = vpack.c.b16 %v3463, %v3455
        %v4984 = vpack.c.b16 %v3464, %v3456
        %v4985 = vpack.c.b16 %v3465, %v3457
        %v4986 = vpack.c.b16 %v3466, %v3458
        %v4987 = vpack.c.b16 %v3467, %v3459
        %v4988 = vpack.c.b16 %v3468, %v3460
        %v4989 = vpack.c.b16 %v3469, %v3461
        %v4990 = vpack.c.b16 %v3470, %v3462
        %v4991 = vpack.c.b16 %v3479, %v3471
        %v4992 = vpack.c.b16 %v3480, %v3472
        %v4993 = vpack.c.b16 %v3481, %v3473
        %v4994 = vpack.c.b16 %v3482, %v3474
        %v4995 = vpack.c.b16 %v3483, %v3475
        %v4996 = vpack.c.b16 %v3484, %v3476
        %v4997 = vpack.c.b16 %v3485, %v3477
        %v4998 = vpack.c.b16 %v3486, %v3478
        %v4999 = vpack.c.b16 %v3495, %v3487
        %v5000 = vpack.c.b16 %v3496, %v3488
        %v5001 = vpack.c.b16 %v3497, %v3489
        %v5002 = vpack.c.b16 %v3498, %v3490
        %v5003 = vpack.c.b16 %v3499, %v3491
        %v5004 = vpack.c.b16 %v3500, %v3492
        %v5005 = vpack.c.b16 %v3501, %v3493
        %v5006 = vpack.c.b16 %v3502, %v3494
        %v5007 = vpack.c.b16 %v3511, %v3503
        %v5008 = vpack.c.b16 %v3512, %v3504
        %v5009 = vpack.c.b16 %v3513, %v3505
        %v5010 = vpack.c.b16 %v3514, %v3506
        %v5011 = vpack.c.b16 %v3515, %v3507
        %v5012 = vpack.c.b16 %v3516, %v3508
        %v5013 = vpack.c.b16 %v3517, %v3509
        %v5014 = vpack.c.b16 %v3518, %v3510
        %v5015 = vpack.c.b16 %v3527, %v3519
        %v5016 = vpack.c.b16 %v3528, %v3520
        %v5017 = vpack.c.b16 %v3529, %v3521
        %v5018 = vpack.c.b16 %v3530, %v3522
        %v5019 = vpack.c.b16 %v3531, %v3523
        %v5020 = vpack.c.b16 %v3532, %v3524
        %v5021 = vpack.c.b16 %v3533, %v3525
        %v5022 = vpack.c.b16 %v3534, %v3526
        %v5023 = vpack.c.b16 %v3543, %v3535
        %v5024 = vpack.c.b16 %v3544, %v3536
        %v5025 = vpack.c.b16 %v3545, %v3537
        %v5026 = vpack.c.b16 %v3546, %v3538
        %v5027 = vpack.c.b16 %v3547, %v3539
        %v5028 = vpack.c.b16 %v3548, %v3540
        %v5029 = vpack.c.b16 %v3549, %v3541
        %v5030 = vpack.c.b16 %v3550, %v3542
        %v5031 = vpack.c.b16 %v3559, %v3551
        %v5032 = vpack.c.b16 %v3560, %v3552
        %v5033 = vpack.c.b16 %v3561, %v3553
        %v5034 = vpack.c.b16 %v3562, %v3554
        %v5035 = vpack.c.b16 %v3563, %v3555
        %v5036 = vpack.c.b16 %v3564, %v3556
        %v5037 = vpack.c.b16 %v3565, %v3557
        %v5038 = vpack.c.b16 %v3566, %v3558
        %v5039 = vpack.c.b16 %v3575, %v3567
        %v5040 = vpack.c.b16 %v3576, %v3568
        %v5041 = vpack.c.b16 %v3577, %v3569
        %v5042 = vpack.c.b16 %v3578, %v3570
        %v5043 = vpack.c.b16 %v3579, %v3571
        %v5044 = vpack.c.b16 %v3580, %v3572
        %v5045 = vpack.c.b16 %v3581, %v3573
        %v5046 = vpack.c.b16 %v3582, %v3574
        %v5047 = vpack.c.b16 %v3591, %v3583
        %v5048 = vpack.c.b16 %v3592, %v3584
        %v5049 = vpack.c.b16 %v3593, %v3585
        %v5050 = vpack.c.b16 %v3594, %v3586
        %v5051 = vpack.c.b16 %v3595, %v3587
        %v5052 = vpack.c.b16 %v3596, %v3588
        %v5053 = vpack.c.b16 %v3597, %v3589
        %v5054 = vpack.c.b16 %v3598, %v3590
        %v5055 = vpack.c.b16 %v3607, %v3599
        %v5056 = vpack.c.b16 %v3608, %v3600
        %v5057 = vpack.c.b16 %v3609, %v3601
        %v5058 = vpack.c.b16 %v3610, %v3602
        %v5059 = vpack.c.b16 %v3611, %v3603
        %v5060 = vpack.c.b16 %v3612, %v3604
        %v5061 = vpack.c.b16 %v3613, %v3605
        %v5062 = vpack.c.b16 %v3614, %v3606
        %v5063 = vpack.c.b16 %v3623, %v3615
        %v5064 = vpack.c.b16 %v3624, %v3616
        %v5065 = vpack.c.b16 %v3625, %v3617
        %v5066 = vpack.c.b16 %v3626, %v3618
        %v5067 = vpack.c.b16 %v3627, %v3619
        %v5068 = vpack.c.b16 %v3628, %v3620
        %v5069 = vpack.c.b16 %v3629, %v3621
        %v5070 = vpack.c.b16 %v3630, %v3622
        %v5071 = vpack.c.b16 %v3639, %v3631
        %v5072 = vpack.c.b16 %v3640, %v3632
        %v5073 = vpack.c.b16 %v3641, %v3633
        %v5074 = vpack.c.b16 %v3642, %v3634
        %v5075 = vpack.c.b16 %v3643, %v3635
        %v5076 = vpack.c.b16 %v3644, %v3636
        %v5077 = vpack.c.b16 %v3645, %v3637
        %v5078 = vpack.c.b16 %v3646, %v3638
        %v5079 = vpack.c.b16 %v3655, %v3647
        %v5080 = vpack.c.b16 %v3656, %v3648
        %v5081 = vpack.c.b16 %v3657, %v3649
        %v5082 = vpack.c.b16 %v3658, %v3650
        %v5083 = vpack.c.b16 %v3659, %v3651
        %v5084 = vpack.c.b16 %v3660, %v3652
        %v5085 = vpack.c.b16 %v3661, %v3653
        %v5086 = vpack.c.b16 %v3662, %v3654
        %v5087 = vpack.c.b16 %v3671, %v3663
        %v5088 = vpack.c.b16 %v3672, %v3664
        %v5089 = vpack.c.b16 %v3673, %v3665
        %v5090 = vpack.c.b16 %v3674, %v3666
        %v5091 = vpack.c.b16 %v3675, %v3667
        %v5092 = vpack.c.b16 %v3676, %v3668
        %v5093 = vpack.c.b16 %v3677, %v3669
        %v5094 = vpack.c.b16 %v3678, %v3670
        %v5095 = vpack.c.b16 %v3687, %v3679
        %v5096 = vpack.c.b16 %v3688, %v3680
        %v5097 = vpack.c.b16 %v3689, %v3681
        %v5098 = vpack.c.b16 %v3690, %v3682
        %v5099 = vpack.c.b16 %v3691, %v3683
        %v5100 = vpack.c.b16 %v3692, %v3684
        %v5101 = vpack.c.b16 %v3693, %v3685
        %v5102 = vpack.c.b16 %v3694, %v3686
        %v5103 = vpack.c.b16 %v3703, %v3695
        %v5104 = vpack.c.b16 %v3704, %v3696
        %v5105 = vpack.c.b16 %v3705, %v3697
        %v5106 = vpack.c.b16 %v3706, %v3698
        %v5107 = vpack.c.b16 %v3707, %v3699
        %v5108 = vpack.c.b16 %v3708, %v3700
        %v5109 = vpack.c.b16 %v3709, %v3701
        %v5110 = vpack.c.b16 %v3710, %v3702
        %v5111 = vpack.c.b16 %v3719, %v3711
        %v5112 = vpack.c.b16 %v3720, %v3712
        %v5113 = vpack.c.b16 %v3721, %v3713
        %v5114 = vpack.c.b16 %v3722, %v3714
        %v5115 = vpack.c.b16 %v3723, %v3715
        %v5116 = vpack.c.b16 %v3724, %v3716
        %v5117 = vpack.c.b16 %v3725, %v3717
        %v5118 = vpack.c.b16 %v3726, %v3718
        %v5119 = vpack.c.b16 %v3735, %v3727
        %v5120 = vpack.c.b16 %v3736, %v3728
        %v5121 = vpack.c.b16 %v3737, %v3729
        %v5122 = vpack.c.b16 %v3738, %v3730
        %v5123 = vpack.c.b16 %v3739, %v3731
        %v5124 = vpack.c.b16 %v3740, %v3732
        %v5125 = vpack.c.b16 %v3741, %v3733
        %v5126 = vpack.c.b16 %v3742, %v3734
        %v5127 = vpack.c.b16 %v3751, %v3743
        %v5128 = vpack.c.b16 %v3752, %v3744
        %v5129 = vpack.c.b16 %v3753, %v3745
        %v5130 = vpack.c.b16 %v3754, %v3746
        %v5131 = vpack.c.b16 %v3755, %v3747
        %v5132 = vpack.c.b16 %v3756, %v3748
        %v5133 = vpack.c.b16 %v3757, %v3749
        %v5134 = vpack.c.b16 %v3758, %v3750
        %v5135 = vpack.c.b16 %v3767, %v3759
        %v5136 = vpack.c.b16 %v3768, %v3760
        %v5137 = vpack.c.b16 %v3769, %v3761
        %v5138 = vpack.c.b16 %v3770, %v3762
        %v5139 = vpack.c.b16 %v3771, %v3763
        %v5140 = vpack.c.b16 %v3772, %v3764
        %v5141 = vpack.c.b16 %v3773, %v3765
        %v5142 = vpack.c.b16 %v3774, %v3766
        %v5143 = vpack.c.b16 %v3783, %v3775
        %v5144 = vpack.c.b16 %v3784, %v3776
        %v5145 = vpack.c.b16 %v3785, %v3777
        %v5146 = vpack.c.b16 %v3786, %v3778
        %v5147 = vpack.c.b16 %v3787, %v3779
        %v5148 = vpack.c.b16 %v3788, %v3780
        %v5149 = vpack.c.b16 %v3789, %v3781
        %v5150 = vpack.c.b16 %v3790, %v3782
        %v5151 = vpack.c.b16 %v3799, %v3791
        %v5152 = vpack.c.b16 %v3800, %v3792
        %v5153 = vpack.c.b16 %v3801, %v3793
        %v5154 = vpack.c.b16 %v3802, %v3794
        %v5155 = vpack.c.b16 %v3803, %v3795
        %v5156 = vpack.c.b16 %v3804, %v3796
        %v5157 = vpack.c.b16 %v3805, %v3797
        %v5158 = vpack.c.b16 %v3806, %v3798
        %v5159 = vpack.c.b16 %v3815, %v3807
        %v5160 = vpack.c.b16 %v3816, %v3808
        %v5161 = vpack.c.b16 %v3817, %v3809
        %v5162 = vpack.c.b16 %v3818, %v3810
        %v5163 = vpack.c.b16 %v3819, %v3811
        %v5164 = vpack.c.b16 %v3820, %v3812
        %v5165 = vpack.c.b16 %v3821, %v3813
        %v5166 = vpack.c.b16 %v3822, %v3814
        %v5167 = vpack.c.b16 %v3831, %v3823
        %v5168 = vpack.c.b16 %v3832, %v3824
        %v5169 = vpack.c.b16 %v3833, %v3825
        %v5170 = vpack.c.b16 %v3834, %v3826
        %v5171 = vpack.c.b16 %v3835, %v3827
        %v5172 = vpack.c.b16 %v3836, %v3828
        %v5173 = vpack.c.b16 %v3837, %v3829
        %v5174 = vpack.c.b16 %v3838, %v3830
        %v5175 = vpack.c.b16 %v3847, %v3839
        %v5176 = vpack.c.b16 %v3848, %v3840
        %v5177 = vpack.c.b16 %v3849, %v3841
        %v5178 = vpack.c.b16 %v3850, %v3842
        %v5179 = vpack.c.b16 %v3851, %v3843
        %v5180 = vpack.c.b16 %v3852, %v3844
        %v5181 = vpack.c.b16 %v3853, %v3845
        %v5182 = vpack.c.b16 %v3854, %v3846
        %v5183 = vpack.c.b16 %v3863, %v3855
        %v5184 = vpack.c.b16 %v3864, %v3856
        %v5185 = vpack.c.b16 %v3865, %v3857
        %v5186 = vpack.c.b16 %v3866, %v3858
        %v5187 = vpack.c.b16 %v3867, %v3859
        %v5188 = vpack.c.b16 %v3868, %v3860
        %v5189 = vpack.c.b16 %v3869, %v3861
        %v5190 = vpack.c.b16 %v3870, %v3862
        %v5191 = vpack.c.b16 %v3879, %v3871
        %v5192 = vpack.c.b16 %v3880, %v3872
        %v5193 = vpack.c.b16 %v3881, %v3873
        %v5194 = vpack.c.b16 %v3882, %v3874
        %v5195 = vpack.c.b16 %v3883, %v3875
        %v5196 = vpack.c.b16 %v3884, %v3876
        %v5197 = vpack.c.b16 %v3885, %v3877
        %v5198 = vpack.c.b16 %v3886, %v3878
        %v5199 = vpack.c.b16 %v3895, %v3887
        %v5200 = vpack.c.b16 %v3896, %v3888
        %v5201 = vpack.c.b16 %v3897, %v3889
        %v5202 = vpack.c.b16 %v3898, %v3890
        %v5203 = vpack.c.b16 %v3899, %v3891
        %v5204 = vpack.c.b16 %v3900, %v3892
        %v5205 = vpack.c.b16 %v3901, %v3893
        %v5206 = vpack.c.b16 %v3902, %v3894
        %v5207 = vpack.c.b16 %v3911, %v3903
        %v5208 = vpack.c.b16 %v3912, %v3904
        %v5209 = vpack.c.b16 %v3913, %v3905
        %v5210 = vpack.c.b16 %v3914, %v3906
        %v5211 = vpack.c.b16 %v3915, %v3907
        %v5212 = vpack.c.b16 %v3916, %v3908
        %v5213 = vpack.c.b16 %v3917, %v3909
        %v5214 = vpack.c.b16 %v3918, %v3910
        %v5215 = vpack.c.b16 %v3927, %v3919
        %v5216 = vpack.c.b16 %v3928, %v3920
        %v5217 = vpack.c.b16 %v3929, %v3921
        %v5218 = vpack.c.b16 %v3930, %v3922
        %v5219 = vpack.c.b16 %v3931, %v3923
        %v5220 = vpack.c.b16 %v3932, %v3924
        %v5221 = vpack.c.b16 %v3933, %v3925
        %v5222 = vpack.c.b16 %v3934, %v3926
        %v5223 = vpack.c.b16 %v3943, %v3935
        %v5224 = vpack.c.b16 %v3944, %v3936
        %v5225 = vpack.c.b16 %v3945, %v3937
        %v5226 = vpack.c.b16 %v3946, %v3938
        %v5227 = vpack.c.b16 %v3947, %v3939
        %v5228 = vpack.c.b16 %v3948, %v3940
        %v5229 = vpack.c.b16 %v3949, %v3941
        %v5230 = vpack.c.b16 %v3950, %v3942
        %v5231 = vpack.c.b16 %v3959, %v3951
        %v5232 = vpack.c.b16 %v3960, %v3952
        %v5233 = vpack.c.b16 %v3961, %v3953
        %v5234 = vpack.c.b16 %v3962, %v3954
        %v5235 = vpack.c.b16 %v3963, %v3955
        %v5236 = vpack.c.b16 %v3964, %v3956
        %v5237 = vpack.c.b16 %v3965, %v3957
        %v5238 = vpack.c.b16 %v3966, %v3958
        %v5239 = vpack.c.b16 %v3975, %v3967
        %v5240 = vpack.c.b16 %v3976, %v3968
        %v5241 = vpack.c.b16 %v3977, %v3969
        %v5242 = vpack.c.b16 %v3978, %v3970
        %v5243 = vpack.c.b16 %v3979, %v3971
        %v5244 = vpack.c.b16 %v3980, %v3972
        %v5245 = vpack.c.b16 %v3981, %v3973
        %v5246 = vpack.c.b16 %v3982, %v3974
        %v5247 = vpack.c.b16 %v3991, %v3983
        %v5248 = vpack.c.b16 %v3992, %v3984
        %v5249 = vpack.c.b16 %v3993, %v3985
        %v5250 = vpack.c.b16 %v3994, %v3986
        %v5251 = vpack.c.b16 %v3995, %v3987
        %v5252 = vpack.c.b16 %v3996, %v3988
        %v5253 = vpack.c.b16 %v3997, %v3989
        %v5254 = vpack.c.b16 %v3998, %v3990
        %v5255 = vpack.c.b16 %v4007, %v3999
        %v5256 = vpack.c.b16 %v4008, %v4000
        %v5257 = vpack.c.b16 %v4009, %v4001
        %v5258 = vpack.c.b16 %v4010, %v4002
        %v5259 = vpack.c.b16 %v4011, %v4003
        %v5260 = vpack.c.b16 %v4012, %v4004
        %v5261 = vpack.c.b16 %v4013, %v4005
        %v5262 = vpack.c.b16 %v4014, %v4006
        %v5263 = vpack.c.b16 %v4023, %v4015
        %v5264 = vpack.c.b16 %v4024, %v4016
        %v5265 = vpack.c.b16 %v4025, %v4017
        %v5266 = vpack.c.b16 %v4026, %v4018
        %v5267 = vpack.c.b16 %v4027, %v4019
        %v5268 = vpack.c.b16 %v4028, %v4020
        %v5269 = vpack.c.b16 %v4029, %v4021
        %v5270 = vpack.c.b16 %v4030, %v4022
        %v5271 = vpack.c.b16 %v4039, %v4031
        %v5272 = vpack.c.b16 %v4040, %v4032
        %v5273 = vpack.c.b16 %v4041, %v4033
        %v5274 = vpack.c.b16 %v4042, %v4034
        %v5275 = vpack.c.b16 %v4043, %v4035
        %v5276 = vpack.c.b16 %v4044, %v4036
        %v5277 = vpack.c.b16 %v4045, %v4037
        %v5278 = vpack.c.b16 %v4046, %v4038
        %v5279 = vpack.c.b16 %v4055, %v4047
        %v5280 = vpack.c.b16 %v4056, %v4048
        %v5281 = vpack.c.b16 %v4057, %v4049
        %v5282 = vpack.c.b16 %v4058, %v4050
        %v5283 = vpack.c.b16 %v4059, %v4051
        %v5284 = vpack.c.b16 %v4060, %v4052
        %v5285 = vpack.c.b16 %v4061, %v4053
        %v5286 = vpack.c.b16 %v4062, %v4054
        %v5287 = vpack.c.b16 %v4071, %v4063
        %v5288 = vpack.c.b16 %v4072, %v4064
        %v5289 = vpack.c.b16 %v4073, %v4065
        %v5290 = vpack.c.b16 %v4074, %v4066
        %v5291 = vpack.c.b16 %v4075, %v4067
        %v5292 = vpack.c.b16 %v4076, %v4068
        %v5293 = vpack.c.b16 %v4077, %v4069
        %v5294 = vpack.c.b16 %v4078, %v4070
        %v5295 = vpack.c.b16 %v4087, %v4079
        %v5296 = vpack.c.b16 %v4088, %v4080
        %v5297 = vpack.c.b16 %v4089, %v4081
        %v5298 = vpack.c.b16 %v4090, %v4082
        %v5299 = vpack.c.b16 %v4091, %v4083
        %v5300 = vpack.c.b16 %v4092, %v4084
        %v5301 = vpack.c.b16 %v4093, %v4085
        %v5302 = vpack.c.b16 %v4094, %v4086
        %v5303 = vpack.c.b16 %v4103, %v4095
        %v5304 = vpack.c.b16 %v4104, %v4096
        %v5305 = vpack.c.b16 %v4105, %v4097
        %v5306 = vpack.c.b16 %v4106, %v4098
        %v5307 = vpack.c.b16 %v4107, %v4099
        %v5308 = vpack.c.b16 %v4108, %v4100
        %v5309 = vpack.c.b16 %v4109, %v4101
        %v5310 = vpack.c.b16 %v4110, %v4102
        %v5311 = vpack.c.b16 %v4119, %v4111
        %v5312 = vpack.c.b16 %v4120, %v4112
        %v5313 = vpack.c.b16 %v4121, %v4113
        %v5314 = vpack.c.b16 %v4122, %v4114
        %v5315 = vpack.c.b16 %v4123, %v4115
        %v5316 = vpack.c.b16 %v4124, %v4116
        %v5317 = vpack.c.b16 %v4125, %v4117
        %v5318 = vpack.c.b16 %v4126, %v4118
        %v5319 = vpack.c.b16 %v4135, %v4127
        %v5320 = vpack.c.b16 %v4136, %v4128
        %v5321 = vpack.c.b16 %v4137, %v4129
        %v5322 = vpack.c.b16 %v4138, %v4130
        %v5323 = vpack.c.b16 %v4139, %v4131
        %v5324 = vpack.c.b16 %v4140, %v4132
        %v5325 = vpack.c.b16 %v4141, %v4133
        %v5326 = vpack.c.b16 %v4142, %v4134
        %v5327 = vpack.c.b16 %v4151, %v4143
        %v5328 = vpack.c.b16 %v4152, %v4144
        %v5329 = vpack.c.b16 %v4153, %v4145
        %v5330 = vpack.c.b16 %v4154, %v4146
        %v5331 = vpack.c.b16 %v4155, %v4147
        %v5332 = vpack.c.b16 %v4156, %v4148
        %v5333 = vpack.c.b16 %v4157, %v4149
        %v5334 = vpack.c.b16 %v4158, %v4150
        %v5335 = vpack.c.b16 %v4167, %v4159
        %v5336 = vpack.c.b16 %v4168, %v4160
        %v5337 = vpack.c.b16 %v4169, %v4161
        %v5338 = vpack.c.b16 %v4170, %v4162
        %v5339 = vpack.c.b16 %v4171, %v4163
        %v5340 = vpack.c.b16 %v4172, %v4164
        %v5341 = vpack.c.b16 %v4173, %v4165
        %v5342 = vpack.c.b16 %v4174, %v4166
        %v5343 = vpack.c.b16 %v4183, %v4175
        %v5344 = vpack.c.b16 %v4184, %v4176
        %v5345 = vpack.c.b16 %v4185, %v4177
        %v5346 = vpack.c.b16 %v4186, %v4178
        %v5347 = vpack.c.b16 %v4187, %v4179
        %v5348 = vpack.c.b16 %v4188, %v4180
        %v5349 = vpack.c.b16 %v4189, %v4181
        %v5350 = vpack.c.b16 %v4190, %v4182
        %v5351 = vpack.c.b16 %v4199, %v4191
        %v5352 = vpack.c.b16 %v4200, %v4192
        %v5353 = vpack.c.b16 %v4201, %v4193
        %v5354 = vpack.c.b16 %v4202, %v4194
        %v5355 = vpack.c.b16 %v4203, %v4195
        %v5356 = vpack.c.b16 %v4204, %v4196
        %v5357 = vpack.c.b16 %v4205, %v4197
        %v5358 = vpack.c.b16 %v4206, %v4198
        %v5359 = vpack.c.b16 %v4215, %v4207
        %v5360 = vpack.c.b16 %v4216, %v4208
        %v5361 = vpack.c.b16 %v4217, %v4209
        %v5362 = vpack.c.b16 %v4218, %v4210
        %v5363 = vpack.c.b16 %v4219, %v4211
        %v5364 = vpack.c.b16 %v4220, %v4212
        %v5365 = vpack.c.b16 %v4221, %v4213
        %v5366 = vpack.c.b16 %v4222, %v4214
        %v5367 = vpack.c.b16 %v4231, %v4223
        %v5368 = vpack.c.b16 %v4232, %v4224
        %v5369 = vpack.c.b16 %v4233, %v4225
        %v5370 = vpack.c.b16 %v4234, %v4226
        %v5371 = vpack.c.b16 %v4235, %v4227
        %v5372 = vpack.c.b16 %v4236, %v4228
        %v5373 = vpack.c.b16 %v4237, %v4229
        %v5374 = vpack.c.b16 %v4238, %v4230
        %v5375 = vpack.c.b16 %v4247, %v4239
        %v5376 = vpack.c.b16 %v4248, %v4240
        %v5377 = vpack.c.b16 %v4249, %v4241
        %v5378 = vpack.c.b16 %v4250, %v4242
        %v5379 = vpack.c.b16 %v4251, %v4243
        %v5380 = vpack.c.b16 %v4252, %v4244
        %v5381 = vpack.c.b16 %v4253, %v4245
        %v5382 = vpack.c.b16 %v4254, %v4246
        %v5383 = vpack.c.b16 %v4263, %v4255
        %v5384 = vpack.c.b16 %v4264, %v4256
        %v5385 = vpack.c.b16 %v4265, %v4257
        %v5386 = vpack.c.b16 %v4266, %v4258
        %v5387 = vpack.c.b16 %v4267, %v4259
        %v5388 = vpack.c.b16 %v4268, %v4260
        %v5389 = vpack.c.b16 %v4269, %v4261
        %v5390 = vpack.c.b16 %v4270, %v4262
        %v5391 = vpack.c.b16 %v4279, %v4271
        %v5392 = vpack.c.b16 %v4280, %v4272
        %v5393 = vpack.c.b16 %v4281, %v4273
        %v5394 = vpack.c.b16 %v4282, %v4274
        %v5395 = vpack.c.b16 %v4283, %v4275
        %v5396 = vpack.c.b16 %v4284, %v4276
        %v5397 = vpack.c.b16 %v4285, %v4277
        %v5398 = vpack.c.b16 %v4286, %v4278
        %v5399 = vpack.c.b16 %v4295, %v4287
        %v5400 = vpack.c.b16 %v4296, %v4288
        %v5401 = vpack.c.b16 %v4297, %v4289
        %v5402 = vpack.c.b16 %v4298, %v4290
        %v5403 = vpack.c.b16 %v4299, %v4291
        %v5404 = vpack.c.b16 %v4300, %v4292
        %v5405 = vpack.c.b16 %v4301, %v4293
        %v5406 = vpack.c.b16 %v4302, %v4294
        %v5407 = vpack.c.b16 %v4311, %v4303
        %v5408 = vpack.c.b16 %v4312, %v4304
        %v5409 = vpack.c.b16 %v4313, %v4305
        %v5410 = vpack.c.b16 %v4314, %v4306
        %v5411 = vpack.c.b16 %v4315, %v4307
        %v5412 = vpack.c.b16 %v4316, %v4308
        %v5413 = vpack.c.b16 %v4317, %v4309
        %v5414 = vpack.c.b16 %v4318, %v4310
        %v5415 = vpack.c.b16 %v4327, %v4319
        %v5416 = vpack.c.b16 %v4328, %v4320
        %v5417 = vpack.c.b16 %v4329, %v4321
        %v5418 = vpack.c.b16 %v4330, %v4322
        %v5419 = vpack.c.b16 %v4331, %v4323
        %v5420 = vpack.c.b16 %v4332, %v4324
        %v5421 = vpack.c.b16 %v4333, %v4325
        %v5422 = vpack.c.b16 %v4334, %v4326
        %v5423 = vpack.c.b16 %v4343, %v4335
        %v5424 = vpack.c.b16 %v4344, %v4336
        %v5425 = vpack.c.b16 %v4345, %v4337
        %v5426 = vpack.c.b16 %v4346, %v4338
        %v5427 = vpack.c.b16 %v4347, %v4339
        %v5428 = vpack.c.b16 %v4348, %v4340
        %v5429 = vpack.c.b16 %v4349, %v4341
        %v5430 = vpack.c.b16 %v4350, %v4342
        %v5431 = vpack.c.b16 %v4359, %v4351
        %v5432 = vpack.c.b16 %v4360, %v4352
        %v5433 = vpack.c.b16 %v4361, %v4353
        %v5434 = vpack.c.b16 %v4362, %v4354
        %v5435 = vpack.c.b16 %v4363, %v4355
        %v5436 = vpack.c.b16 %v4364, %v4356
        %v5437 = vpack.c.b16 %v4365, %v4357
        %v5438 = vpack.c.b16 %v4366, %v4358
        %v5439 = vpack.c.b16 %v4375, %v4367
        %v5440 = vpack.c.b16 %v4376, %v4368
        %v5441 = vpack.c.b16 %v4377, %v4369
        %v5442 = vpack.c.b16 %v4378, %v4370
        %v5443 = vpack.c.b16 %v4379, %v4371
        %v5444 = vpack.c.b16 %v4380, %v4372
        %v5445 = vpack.c.b16 %v4381, %v4373
        %v5446 = vpack.c.b16 %v4382, %v4374
        %v5447 = vpack.c.b16 %v4391, %v4383
        %v5448 = vpack.c.b16 %v4392, %v4384
        %v5449 = vpack.c.b16 %v4393, %v4385
        %v5450 = vpack.c.b16 %v4394, %v4386
        %v5451 = vpack.c.b16 %v4395, %v4387
        %v5452 = vpack.c.b16 %v4396, %v4388
        %v5453 = vpack.c.b16 %v4397, %v4389
        %v5454 = vpack.c.b16 %v4398, %v4390
        %v5455 = vpack.c.b16 %v4407, %v4399
        %v5456 = vpack.c.b16 %v4408, %v4400
        %v5457 = vpack.c.b16 %v4409, %v4401
        %v5458 = vpack.c.b16 %v4410, %v4402
        %v5459 = vpack.c.b16 %v4411, %v4403
        %v5460 = vpack.c.b16 %v4412, %v4404
        %v5461 = vpack.c.b16 %v4413, %v4405
        %v5462 = vpack.c.b16 %v4414, %v4406
        %v5463 = vpack.c.b16 %v4423, %v4415
        %v5464 = vpack.c.b16 %v4424, %v4416
        %v5465 = vpack.c.b16 %v4425, %v4417
        %v5466 = vpack.c.b16 %v4426, %v4418
        %v5467 = vpack.c.b16 %v4427, %v4419
        %v5468 = vpack.c.b16 %v4428, %v4420
        %v5469 = vpack.c.b16 %v4429, %v4421
        %v5470 = vpack.c.b16 %v4430, %v4422
        %v5471 = vpack.c.b16 %v4439, %v4431
        %v5472 = vpack.c.b16 %v4440, %v4432
        %v5473 = vpack.c.b16 %v4441, %v4433
        %v5474 = vpack.c.b16 %v4442, %v4434
        %v5475 = vpack.c.b16 %v4443, %v4435
        %v5476 = vpack.c.b16 %v4444, %v4436
        %v5477 = vpack.c.b16 %v4445, %v4437
        %v5478 = vpack.c.b16 %v4446, %v4438
        %v5479 = vpack.c.b16 %v4455, %v4447
        %v5480 = vpack.c.b16 %v4456, %v4448
        %v5481 = vpack.c.b16 %v4457, %v4449
        %v5482 = vpack.c.b16 %v4458, %v4450
        %v5483 = vpack.c.b16 %v4459, %v4451
        %v5484 = vpack.c.b16 %v4460, %v4452
        %v5485 = vpack.c.b16 %v4461, %v4453
        %v5486 = vpack.c.b16 %v4462, %v4454
        %6511 = vmatprep.subr.bf16.mxu0 %v4464
        %6512 = vmatpush1.bf16.msra.mxu0 %v4463
        %6513 = vmatprep.subr.bf16.mxu0 %v4472
        %6514 = vmatpush1.bf16.msra.mxu0 %v4471
        %6515 = vmatprep.subr.bf16.mxu0 %v4480
        %6516 = vmatpush1.bf16.msra.mxu0 %v4479
        %6517 = vmatprep.subr.bf16.mxu0 %v4488
        %6518 = vmatpush1.bf16.msra.mxu0 %v4487
        %6519 = vmatprep.subr.bf16.mxu0 %v4496
        %6520 = vmatpush1.bf16.msra.mxu0 %v4495
        %6521 = vmatprep.subr.bf16.mxu0 %v4504
        %6522 = vmatpush1.bf16.msra.mxu0 %v4503
        %6523 = vmatprep.subr.bf16.mxu0 %v4512
        %6524 = vmatpush1.bf16.msra.mxu0 %v4511
        %6525 = vmatprep.subr.bf16.mxu0 %v4520
        %6526 = vmatpush1.bf16.msra.mxu0 %v4519
        %6527 = vmatprep.subr.bf16.mxu0 %v4528
        %6528 = vmatpush1.bf16.msra.mxu0 %v4527
        %6529 = vmatprep.subr.bf16.mxu0 %v4536
        %6530 = vmatpush1.bf16.msra.mxu0 %v4535
        %6531 = vmatprep.subr.bf16.mxu0 %v4544
        %6532 = vmatpush1.bf16.msra.mxu0 %v4543
        %6533 = vmatprep.subr.bf16.mxu0 %v4552
        %6534 = vmatpush1.bf16.msra.mxu0 %v4551
        %6535 = vmatprep.subr.bf16.mxu0 %v4560
        %6536 = vmatpush1.bf16.msra.mxu0 %v4559
        %6537 = vmatprep.subr.bf16.mxu0 %v4568
        %6538 = vmatpush1.bf16.msra.mxu0 %v4567
        %6539 = vmatprep.subr.bf16.mxu0 %v4576
        %6540 = vmatpush1.bf16.msra.mxu0 %v4575
        %6541 = vmatprep.subr.bf16.mxu0 %v4584
        %6542 = vmatpush1.bf16.msra.mxu0 %v4583
        %6543 = vmatprep.mubr.bf16.mxu0 %v1360
        %6544 = vmatmul.mubr.bf16.gmra.mrb[0].mxu0 %v1359
        %v6545 = vpop.f32.mrb[0].mxu0
        %v6546 = vadd.f32 0.0, %v6545
        %v6547 = vpop.f32.mrb[0].mxu0
        %v6548 = vadd.f32 0.0, %v6547
        %v6549 = vpop.f32.mrb[0].mxu0
        %v6550 = vadd.f32 0.0, %v6549
        %v6551 = vpop.f32.mrb[0].mxu0
        %v6552 = vadd.f32 0.0, %v6551
        %6553 = vdwg.mxu0
        %6554 = vmatprep.subr.bf16.mxu0 %v4592
        %6555 = vmatpush1.bf16.msra.mxu0 %v4591
        %6556 = vmatprep.subr.bf16.mxu0 %v4600
        %6557 = vmatpush1.bf16.msra.mxu0 %v4599
        %6558 = vmatprep.subr.bf16.mxu0 %v4608
        %6559 = vmatpush1.bf16.msra.mxu0 %v4607
        %6560 = vmatprep.subr.bf16.mxu0 %v4616
        %6561 = vmatpush1.bf16.msra.mxu0 %v4615
        %6562 = vmatprep.subr.bf16.mxu0 %v4624
        %6563 = vmatpush1.bf16.msra.mxu0 %v4623
        %6564 = vmatprep.subr.bf16.mxu0 %v4632
        %6565 = vmatpush1.bf16.msra.mxu0 %v4631
        %6566 = vmatprep.subr.bf16.mxu0 %v4640
        %6567 = vmatpush1.bf16.msra.mxu0 %v4639
        %6568 = vmatprep.subr.bf16.mxu0 %v4648
        %6569 = vmatpush1.bf16.msra.mxu0 %v4647
        %6570 = vmatprep.subr.bf16.mxu0 %v4656
        %6571 = vmatpush1.bf16.msra.mxu0 %v4655
        %6572 = vmatprep.subr.bf16.mxu0 %v4664
        %6573 = vmatpush1.bf16.msra.mxu0 %v4663
        %6574 = vmatprep.subr.bf16.mxu0 %v4672
        %6575 = vmatpush1.bf16.msra.mxu0 %v4671
        %6576 = vmatprep.subr.bf16.mxu0 %v4680
        %6577 = vmatpush1.bf16.msra.mxu0 %v4679
        %6578 = vmatprep.subr.bf16.mxu0 %v4688
        %6579 = vmatpush1.bf16.msra.mxu0 %v4687
        %6580 = vmatprep.subr.bf16.mxu0 %v4696
        %6581 = vmatpush1.bf16.msra.mxu0 %v4695
        %6582 = vmatprep.subr.bf16.mxu0 %v4704
        %6583 = vmatpush1.bf16.msra.mxu0 %v4703
        %6584 = vmatprep.subr.bf16.mxu0 %v4712
        %6585 = vmatpush1.bf16.msra.mxu0 %v4711
        %6586 = vmatprep.mubr.bf16.mxu0 %v1362
        %6587 = vmatmul.mubr.bf16.gmra.mrb[0].mxu0 %v1361
        %v6588 = vpop.f32.mrb[0].mxu0
        %v6589 = vadd.f32 %v6546, %v6588
        %v6590 = vpop.f32.mrb[0].mxu0
        %v6591 = vadd.f32 %v6548, %v6590
        %v6592 = vpop.f32.mrb[0].mxu0
        %v6593 = vadd.f32 %v6550, %v6592
        %v6594 = vpop.f32.mrb[0].mxu0
        %v6595 = vadd.f32 %v6552, %v6594
        %6596 = vdwg.mxu0
        %6597 = vmatprep.subr.bf16.mxu0 %v4720
        %6598 = vmatpush1.bf16.msra.mxu0 %v4719
        %6599 = vmatprep.subr.bf16.mxu0 %v4728
        %6600 = vmatpush1.bf16.msra.mxu0 %v4727
        %6601 = vmatprep.subr.bf16.mxu0 %v4736
        %6602 = vmatpush1.bf16.msra.mxu0 %v4735
        %6603 = vmatprep.subr.bf16.mxu0 %v4744
        %6604 = vmatpush1.bf16.msra.mxu0 %v4743
        %6605 = vmatprep.subr.bf16.mxu0 %v4752
        %6606 = vmatpush1.bf16.msra.mxu0 %v4751
        %6607 = vmatprep.subr.bf16.mxu0 %v4760
        %6608 = vmatpush1.bf16.msra.mxu0 %v4759
        %6609 = vmatprep.subr.bf16.mxu0 %v4768
        %6610 = vmatpush1.bf16.msra.mxu0 %v4767
        %6611 = vmatprep.subr.bf16.mxu0 %v4776
        %6612 = vmatpush1.bf16.msra.mxu0 %v4775
        %6613 = vmatprep.subr.bf16.mxu0 %v4784
        %6614 = vmatpush1.bf16.msra.mxu0 %v4783
        %6615 = vmatprep.subr.bf16.mxu0 %v4792
        %6616 = vmatpush1.bf16.msra.mxu0 %v4791
        %6617 = vmatprep.subr.bf16.mxu0 %v4800
        %6618 = vmatpush1.bf16.msra.mxu0 %v4799
        %6619 = vmatprep.subr.bf16.mxu0 %v4808
        %6620 = vmatpush1.bf16.msra.mxu0 %v4807
        %6621 = vmatprep.subr.bf16.mxu0 %v4816
        %6622 = vmatpush1.bf16.msra.mxu0 %v4815
        %6623 = vmatprep.subr.bf16.mxu0 %v4824
        %6624 = vmatpush1.bf16.msra.mxu0 %v4823
        %6625 = vmatprep.subr.bf16.mxu0 %v4832
        %6626 = vmatpush1.bf16.msra.mxu0 %v4831
        %6627 = vmatprep.subr.bf16.mxu0 %v4840
        %6628 = vmatpush1.bf16.msra.mxu0 %v4839
        %6629 = vmatprep.mubr.bf16.mxu0 %v1364
        %6630 = vmatmul.mubr.bf16.gmra.mrb[0].mxu0 %v1363
        %v6631 = vpop.f32.mrb[0].mxu0
        %v6632 = vadd.f32 %v6589, %v6631
        %v6633 = vpop.f32.mrb[0].mxu0
        %v6634 = vadd.f32 %v6591, %v6633
        %v6635 = vpop.f32.mrb[0].mxu0
        %v6636 = vadd.f32 %v6593, %v6635
        %v6637 = vpop.f32.mrb[0].mxu0
        %v6638 = vadd.f32 %v6595, %v6637
        %6639 = vdwg.mxu0
        %6640 = vmatprep.subr.bf16.mxu0 %v4848
        %6641 = vmatpush1.bf16.msra.mxu0 %v4847
        %6642 = vmatprep.subr.bf16.mxu0 %v4856
        %6643 = vmatpush1.bf16.msra.mxu0 %v4855
        %6644 = vmatprep.subr.bf16.mxu0 %v4864
        %6645 = vmatpush1.bf16.msra.mxu0 %v4863
        %6646 = vmatprep.subr.bf16.mxu0 %v4872
        %6647 = vmatpush1.bf16.msra.mxu0 %v4871
        %6648 = vmatprep.subr.bf16.mxu0 %v4880
        %6649 = vmatpush1.bf16.msra.mxu0 %v4879
        %6650 = vmatprep.subr.bf16.mxu0 %v4888
        %6651 = vmatpush1.bf16.msra.mxu0 %v4887
        %6652 = vmatprep.subr.bf16.mxu0 %v4896
        %6653 = vmatpush1.bf16.msra.mxu0 %v4895
        %6654 = vmatprep.subr.bf16.mxu0 %v4904
        %6655 = vmatpush1.bf16.msra.mxu0 %v4903
        %6656 = vmatprep.subr.bf16.mxu0 %v4912
        %6657 = vmatpush1.bf16.msra.mxu0 %v4911
        %6658 = vmatprep.subr.bf16.mxu0 %v4920
        %6659 = vmatpush1.bf16.msra.mxu0 %v4919
        %6660 = vmatprep.subr.bf16.mxu0 %v4928
        %6661 = vmatpush1.bf16.msra.mxu0 %v4927
        %6662 = vmatprep.subr.bf16.mxu0 %v4936
        %6663 = vmatpush1.bf16.msra.mxu0 %v4935
        %6664 = vmatprep.subr.bf16.mxu0 %v4944
        %6665 = vmatpush1.bf16.msra.mxu0 %v4943
        %6666 = vmatprep.subr.bf16.mxu0 %v4952
        %6667 = vmatpush1.bf16.msra.mxu0 %v4951
        %6668 = vmatprep.subr.bf16.mxu0 %v4960
        %6669 = vmatpush1.bf16.msra.mxu0 %v4959
        %6670 = vmatprep.subr.bf16.mxu0 %v4968
        %6671 = vmatpush1.bf16.msra.mxu0 %v4967
        %6672 = vmatprep.mubr.bf16.mxu0 %v1366
        %6673 = vmatmul.mubr.bf16.gmra.mrb[0].mxu0 %v1365
        %v6674 = vpop.f32.mrb[0].mxu0
        %v6675 = vadd.f32 %v6632, %v6674
        %v6676 = vpop.f32.mrb[0].mxu0
        %v6677 = vadd.f32 %v6634, %v6676
        %v6678 = vpop.f32.mrb[0].mxu0
        %v6679 = vadd.f32 %v6636, %v6678
        %v6680 = vpop.f32.mrb[0].mxu0
        %v6681 = vadd.f32 %v6638, %v6680
        %6682 = vdwg.mxu0
        %6683 = vmatprep.subr.bf16.mxu0 %v4976
        %6684 = vmatpush1.bf16.msra.mxu0 %v4975
        %6685 = vmatprep.subr.bf16.mxu0 %v4984
        %6686 = vmatpush1.bf16.msra.mxu0 %v4983
        %6687 = vmatprep.subr.bf16.mxu0 %v4992
        %6688 = vmatpush1.bf16.msra.mxu0 %v4991
        %6689 = vmatprep.subr.bf16.mxu0 %v5000
        %6690 = vmatpush1.bf16.msra.mxu0 %v4999
        %6691 = vmatprep.subr.bf16.mxu0 %v5008
        %6692 = vmatpush1.bf16.msra.mxu0 %v5007
        %6693 = vmatprep.subr.bf16.mxu0 %v5016
        %6694 = vmatpush1.bf16.msra.mxu0 %v5015
        %6695 = vmatprep.subr.bf16.mxu0 %v5024
        %6696 = vmatpush1.bf16.msra.mxu0 %v5023
        %6697 = vmatprep.subr.bf16.mxu0 %v5032
        %6698 = vmatpush1.bf16.msra.mxu0 %v5031
        %6699 = vmatprep.subr.bf16.mxu0 %v5040
        %6700 = vmatpush1.bf16.msra.mxu0 %v5039
        %6701 = vmatprep.subr.bf16.mxu0 %v5048
        %6702 = vmatpush1.bf16.msra.mxu0 %v5047
        %6703 = vmatprep.subr.bf16.mxu0 %v5056
        %6704 = vmatpush1.bf16.msra.mxu0 %v5055
        %6705 = vmatprep.subr.bf16.mxu0 %v5064
        %6706 = vmatpush1.bf16.msra.mxu0 %v5063
        %6707 = vmatprep.subr.bf16.mxu0 %v5072
        %6708 = vmatpush1.bf16.msra.mxu0 %v5071
        %6709 = vmatprep.subr.bf16.mxu0 %v5080
        %6710 = vmatpush1.bf16.msra.mxu0 %v5079
        %6711 = vmatprep.subr.bf16.mxu0 %v5088
        %6712 = vmatpush1.bf16.msra.mxu0 %v5087
        %6713 = vmatprep.subr.bf16.mxu0 %v5096
        %6714 = vmatpush1.bf16.msra.mxu0 %v5095
        %6715 = vmatprep.mubr.bf16.mxu0 %v1368
        %6716 = vmatmul.mubr.bf16.gmra.mrb[0].mxu0 %v1367
        %v6717 = vpop.f32.mrb[0].mxu0
        %v6718 = vadd.f32 %v6675, %v6717
        %v6719 = vpop.f32.mrb[0].mxu0
        %v6720 = vadd.f32 %v6677, %v6719
        %v6721 = vpop.f32.mrb[0].mxu0
        %v6722 = vadd.f32 %v6679, %v6721
        %v6723 = vpop.f32.mrb[0].mxu0
        %v6724 = vadd.f32 %v6681, %v6723
        %6725 = vdwg.mxu0
        %6726 = vmatprep.subr.bf16.mxu0 %v5104
        %6727 = vmatpush1.bf16.msra.mxu0 %v5103
        %6728 = vmatprep.subr.bf16.mxu0 %v5112
        %6729 = vmatpush1.bf16.msra.mxu0 %v5111
        %6730 = vmatprep.subr.bf16.mxu0 %v5120
        %6731 = vmatpush1.bf16.msra.mxu0 %v5119
        %6732 = vmatprep.subr.bf16.mxu0 %v5128
        %6733 = vmatpush1.bf16.msra.mxu0 %v5127
        %6734 = vmatprep.subr.bf16.mxu0 %v5136
        %6735 = vmatpush1.bf16.msra.mxu0 %v5135
        %6736 = vmatprep.subr.bf16.mxu0 %v5144
        %6737 = vmatpush1.bf16.msra.mxu0 %v5143
        %6738 = vmatprep.subr.bf16.mxu0 %v5152
        %6739 = vmatpush1.bf16.msra.mxu0 %v5151
        %6740 = vmatprep.subr.bf16.mxu0 %v5160
        %6741 = vmatpush1.bf16.msra.mxu0 %v5159
        %6742 = vmatprep.subr.bf16.mxu0 %v5168
        %6743 = vmatpush1.bf16.msra.mxu0 %v5167
        %6744 = vmatprep.subr.bf16.mxu0 %v5176
        %6745 = vmatpush1.bf16.msra.mxu0 %v5175
        %6746 = vmatprep.subr.bf16.mxu0 %v5184
        %6747 = vmatpush1.bf16.msra.mxu0 %v5183
        %6748 = vmatprep.subr.bf16.mxu0 %v5192
        %6749 = vmatpush1.bf16.msra.mxu0 %v5191
        %6750 = vmatprep.subr.bf16.mxu0 %v5200
        %6751 = vmatpush1.bf16.msra.mxu0 %v5199
        %6752 = vmatprep.subr.bf16.mxu0 %v5208
        %6753 = vmatpush1.bf16.msra.mxu0 %v5207
        %6754 = vmatprep.subr.bf16.mxu0 %v5216
        %6755 = vmatpush1.bf16.msra.mxu0 %v5215
        %6756 = vmatprep.subr.bf16.mxu0 %v5224
        %6757 = vmatpush1.bf16.msra.mxu0 %v5223
        %6758 = vmatprep.mubr.bf16.mxu0 %v1370
        %6759 = vmatmul.mubr.bf16.gmra.mrb[0].mxu0 %v1369
        %v6760 = vpop.f32.mrb[0].mxu0
        %v6761 = vadd.f32 %v6718, %v6760
        %v6762 = vpop.f32.mrb[0].mxu0
        %v6763 = vadd.f32 %v6720, %v6762
        %v6764 = vpop.f32.mrb[0].mxu0
        %v6765 = vadd.f32 %v6722, %v6764
        %v6766 = vpop.f32.mrb[0].mxu0
        %v6767 = vadd.f32 %v6724, %v6766
        %6768 = vdwg.mxu0
        %6769 = vmatprep.subr.bf16.mxu0 %v5232
        %6770 = vmatpush1.bf16.msra.mxu0 %v5231
        %6771 = vmatprep.subr.bf16.mxu0 %v5240
        %6772 = vmatpush1.bf16.msra.mxu0 %v5239
        %6773 = vmatprep.subr.bf16.mxu0 %v5248
        %6774 = vmatpush1.bf16.msra.mxu0 %v5247
        %6775 = vmatprep.subr.bf16.mxu0 %v5256
        %6776 = vmatpush1.bf16.msra.mxu0 %v5255
        %6777 = vmatprep.subr.bf16.mxu0 %v5264
        %6778 = vmatpush1.bf16.msra.mxu0 %v5263
        %6779 = vmatprep.subr.bf16.mxu0 %v5272
        %6780 = vmatpush1.bf16.msra.mxu0 %v5271
        %6781 = vmatprep.subr.bf16.mxu0 %v5280
        %6782 = vmatpush1.bf16.msra.mxu0 %v5279
        %6783 = vmatprep.subr.bf16.mxu0 %v5288
        %6784 = vmatpush1.bf16.msra.mxu0 %v5287
        %6785 = vmatprep.subr.bf16.mxu0 %v5296
        %6786 = vmatpush1.bf16.msra.mxu0 %v5295
        %6787 = vmatprep.subr.bf16.mxu0 %v5304
        %6788 = vmatpush1.bf16.msra.mxu0 %v5303
        %6789 = vmatprep.subr.bf16.mxu0 %v5312
        %6790 = vmatpush1.bf16.msra.mxu0 %v5311
        %6791 = vmatprep.subr.bf16.mxu0 %v5320
        %6792 = vmatpush1.bf16.msra.mxu0 %v5319
        %6793 = vmatprep.subr.bf16.mxu0 %v5328
        %6794 = vmatpush1.bf16.msra.mxu0 %v5327
        %6795 = vmatprep.subr.bf16.mxu0 %v5336
        %6796 = vmatpush1.bf16.msra.mxu0 %v5335
        %6797 = vmatprep.subr.bf16.mxu0 %v5344
        %6798 = vmatpush1.bf16.msra.mxu0 %v5343
        %6799 = vmatprep.subr.bf16.mxu0 %v5352
        %6800 = vmatpush1.bf16.msra.mxu0 %v5351
        %6801 = vmatprep.mubr.bf16.mxu0 %v1372
        %6802 = vmatmul.mubr.bf16.gmra.mrb[0].mxu0 %v1371
        %v6803 = vpop.f32.mrb[0].mxu0
        %v6804 = vadd.f32 %v6761, %v6803
        %v6805 = vpop.f32.mrb[0].mxu0
        %v6806 = vadd.f32 %v6763, %v6805
        %v6807 = vpop.f32.mrb[0].mxu0
        %v6808 = vadd.f32 %v6765, %v6807
        %v6809 = vpop.f32.mrb[0].mxu0
        %v6810 = vadd.f32 %v6767, %v6809
        %6811 = vdwg.mxu0
        %6812 = vmatprep.subr.bf16.mxu0 %v5360
        %6813 = vmatpush1.bf16.msra.mxu0 %v5359
        %6814 = vmatprep.subr.bf16.mxu0 %v5368
        %6815 = vmatpush1.bf16.msra.mxu0 %v5367
        %6816 = vmatprep.subr.bf16.mxu0 %v5376
        %6817 = vmatpush1.bf16.msra.mxu0 %v5375
        %6818 = vmatprep.subr.bf16.mxu0 %v5384
        %6819 = vmatpush1.bf16.msra.mxu0 %v5383
        %6820 = vmatprep.subr.bf16.mxu0 %v5392
        %6821 = vmatpush1.bf16.msra.mxu0 %v5391
        %6822 = vmatprep.subr.bf16.mxu0 %v5400
        %6823 = vmatpush1.bf16.msra.mxu0 %v5399
        %6824 = vmatprep.subr.bf16.mxu0 %v5408
        %6825 = vmatpush1.bf16.msra.mxu0 %v5407
        %6826 = vmatprep.subr.bf16.mxu0 %v5416
        %6827 = vmatpush1.bf16.msra.mxu0 %v5415
        %6828 = vmatprep.subr.bf16.mxu0 %v5424
        %6829 = vmatpush1.bf16.msra.mxu0 %v5423
        %6830 = vmatprep.subr.bf16.mxu0 %v5432
        %6831 = vmatpush1.bf16.msra.mxu0 %v5431
        %6832 = vmatprep.subr.bf16.mxu0 %v5440
        %6833 = vmatpush1.bf16.msra.mxu0 %v5439
        %6834 = vmatprep.subr.bf16.mxu0 %v5448
        %6835 = vmatpush1.bf16.msra.mxu0 %v5447
        %6836 = vmatprep.subr.bf16.mxu0 %v5456
        %6837 = vmatpush1.bf16.msra.mxu0 %v5455
        %6838 = vmatprep.subr.bf16.mxu0 %v5464
        %6839 = vmatpush1.bf16.msra.mxu0 %v5463
        %6840 = vmatprep.subr.bf16.mxu0 %v5472
        %6841 = vmatpush1.bf16.msra.mxu0 %v5471
        %6842 = vmatprep.subr.bf16.mxu0 %v5480
        %6843 = vmatpush1.bf16.msra.mxu0 %v5479
        %6844 = vmatprep.mubr.bf16.mxu0 %v1374
        %6845 = vmatmul.mubr.bf16.gmra.mrb[0].mxu0 %v1373
        %v6846 = vpop.f32.mrb[0].mxu0
        %v6847 = vadd.f32 %v6804, %v6846
        %v6848 = vpop.f32.mrb[0].mxu0
        %v6849 = vadd.f32 %v6806, %v6848
        %v6850 = vpop.f32.mrb[0].mxu0
        %v6851 = vadd.f32 %v6808, %v6850
        %v6852 = vpop.f32.mrb[0].mxu0
        %v6853 = vadd.f32 %v6810, %v6852
        %6854 = vdwg.mxu0
        %6855 = vmatprep.subr.bf16.mxu0 %v4466
        %6856 = vmatpush1.bf16.msra.mxu0 %v4465
        %6857 = vmatprep.subr.bf16.mxu0 %v4474
        %6858 = vmatpush1.bf16.msra.mxu0 %v4473
        %6859 = vmatprep.subr.bf16.mxu0 %v4482
        %6860 = vmatpush1.bf16.msra.mxu0 %v4481
        %6861 = vmatprep.subr.bf16.mxu0 %v4490
        %6862 = vmatpush1.bf16.msra.mxu0 %v4489
        %6863 = vmatprep.subr.bf16.mxu0 %v4498
        %6864 = vmatpush1.bf16.msra.mxu0 %v4497
        %6865 = vmatprep.subr.bf16.mxu0 %v4506
        %6866 = vmatpush1.bf16.msra.mxu0 %v4505
        %6867 = vmatprep.subr.bf16.mxu0 %v4514
        %6868 = vmatpush1.bf16.msra.mxu0 %v4513
        %6869 = vmatprep.subr.bf16.mxu0 %v4522
        %6870 = vmatpush1.bf16.msra.mxu0 %v4521
        %6871 = vmatprep.subr.bf16.mxu0 %v4530
        %6872 = vmatpush1.bf16.msra.mxu0 %v4529
        %6873 = vmatprep.subr.bf16.mxu0 %v4538
        %6874 = vmatpush1.bf16.msra.mxu0 %v4537
        %6875 = vmatprep.subr.bf16.mxu0 %v4546
        %6876 = vmatpush1.bf16.msra.mxu0 %v4545
        %6877 = vmatprep.subr.bf16.mxu0 %v4554
        %6878 = vmatpush1.bf16.msra.mxu0 %v4553
        %6879 = vmatprep.subr.bf16.mxu0 %v4562
        %6880 = vmatpush1.bf16.msra.mxu0 %v4561
        %6881 = vmatprep.subr.bf16.mxu0 %v4570
        %6882 = vmatpush1.bf16.msra.mxu0 %v4569
        %6883 = vmatprep.subr.bf16.mxu0 %v4578
        %6884 = vmatpush1.bf16.msra.mxu0 %v4577
        %6885 = vmatprep.subr.bf16.mxu0 %v4586
        %6886 = vmatpush1.bf16.msra.mxu0 %v4585
        %6887 = vmatprep.mubr.bf16.mxu0 %v1360
        %6888 = vmatmul.mubr.bf16.gmra.mrb[0].mxu0 %v1359
        %v6889 = vpop.f32.mrb[0].mxu0
        %v6890 = vadd.f32 0.0, %v6889
        %v6891 = vpop.f32.mrb[0].mxu0
        %v6892 = vadd.f32 0.0, %v6891
        %v6893 = vpop.f32.mrb[0].mxu0
        %v6894 = vadd.f32 0.0, %v6893
        %v6895 = vpop.f32.mrb[0].mxu0
        %v6896 = vadd.f32 0.0, %v6895
        %6897 = vdwg.mxu0
        %6898 = vmatprep.subr.bf16.mxu0 %v4594
        %6899 = vmatpush1.bf16.msra.mxu0 %v4593
        %6900 = vmatprep.subr.bf16.mxu0 %v4602
        %6901 = vmatpush1.bf16.msra.mxu0 %v4601
        %6902 = vmatprep.subr.bf16.mxu0 %v4610
        %6903 = vmatpush1.bf16.msra.mxu0 %v4609
        %6904 = vmatprep.subr.bf16.mxu0 %v4618
        %6905 = vmatpush1.bf16.msra.mxu0 %v4617
        %6906 = vmatprep.subr.bf16.mxu0 %v4626
        %6907 = vmatpush1.bf16.msra.mxu0 %v4625
        %6908 = vmatprep.subr.bf16.mxu0 %v4634
        %6909 = vmatpush1.bf16.msra.mxu0 %v4633
        %6910 = vmatprep.subr.bf16.mxu0 %v4642
        %6911 = vmatpush1.bf16.msra.mxu0 %v4641
        %6912 = vmatprep.subr.bf16.mxu0 %v4650
        %6913 = vmatpush1.bf16.msra.mxu0 %v4649
        %6914 = vmatprep.subr.bf16.mxu0 %v4658
        %6915 = vmatpush1.bf16.msra.mxu0 %v4657
        %6916 = vmatprep.subr.bf16.mxu0 %v4666
        %6917 = vmatpush1.bf16.msra.mxu0 %v4665
        %6918 = vmatprep.subr.bf16.mxu0 %v4674
        %6919 = vmatpush1.bf16.msra.mxu0 %v4673
        %6920 = vmatprep.subr.bf16.mxu0 %v4682
        %6921 = vmatpush1.bf16.msra.mxu0 %v4681
        %6922 = vmatprep.subr.bf16.mxu0 %v4690
        %6923 = vmatpush1.bf16.msra.mxu0 %v4689
        %6924 = vmatprep.subr.bf16.mxu0 %v4698
        %6925 = vmatpush1.bf16.msra.mxu0 %v4697
        %6926 = vmatprep.subr.bf16.mxu0 %v4706
        %6927 = vmatpush1.bf16.msra.mxu0 %v4705
        %6928 = vmatprep.subr.bf16.mxu0 %v4714
        %6929 = vmatpush1.bf16.msra.mxu0 %v4713
        %6930 = vmatprep.mubr.bf16.mxu0 %v1362
        %6931 = vmatmul.mubr.bf16.gmra.mrb[0].mxu0 %v1361
        %v6932 = vpop.f32.mrb[0].mxu0
        %v6933 = vadd.f32 %v6890, %v6932
        %v6934 = vpop.f32.mrb[0].mxu0
        %v6935 = vadd.f32 %v6892, %v6934
        %v6936 = vpop.f32.mrb[0].mxu0
        %v6937 = vadd.f32 %v6894, %v6936
        %v6938 = vpop.f32.mrb[0].mxu0
        %v6939 = vadd.f32 %v6896, %v6938
        %6940 = vdwg.mxu0
        %6941 = vmatprep.subr.bf16.mxu0 %v4722
        %6942 = vmatpush1.bf16.msra.mxu0 %v4721
        %6943 = vmatprep.subr.bf16.mxu0 %v4730
        %6944 = vmatpush1.bf16.msra.mxu0 %v4729
        %6945 = vmatprep.subr.bf16.mxu0 %v4738
        %6946 = vmatpush1.bf16.msra.mxu0 %v4737
        %6947 = vmatprep.subr.bf16.mxu0 %v4746
        %6948 = vmatpush1.bf16.msra.mxu0 %v4745
        %6949 = vmatprep.subr.bf16.mxu0 %v4754
        %6950 = vmatpush1.bf16.msra.mxu0 %v4753
        %6951 = vmatprep.subr.bf16.mxu0 %v4762
        %6952 = vmatpush1.bf16.msra.mxu0 %v4761
        %6953 = vmatprep.subr.bf16.mxu0 %v4770
        %6954 = vmatpush1.bf16.msra.mxu0 %v4769
        %6955 = vmatprep.subr.bf16.mxu0 %v4778
        %6956 = vmatpush1.bf16.msra.mxu0 %v4777
        %6957 = vmatprep.subr.bf16.mxu0 %v4786
        %6958 = vmatpush1.bf16.msra.mxu0 %v4785
        %6959 = vmatprep.subr.bf16.mxu0 %v4794
        %6960 = vmatpush1.bf16.msra.mxu0 %v4793
        %6961 = vmatprep.subr.bf16.mxu0 %v4802
        %6962 = vmatpush1.bf16.msra.mxu0 %v4801
        %6963 = vmatprep.subr.bf16.mxu0 %v4810
        %6964 = vmatpush1.bf16.msra.mxu0 %v4809
        %6965 = vmatprep.subr.bf16.mxu0 %v4818
        %6966 = vmatpush1.bf16.msra.mxu0 %v4817
        %6967 = vmatprep.subr.bf16.mxu0 %v4826
        %6968 = vmatpush1.bf16.msra.mxu0 %v4825
        %6969 = vmatprep.subr.bf16.mxu0 %v4834
        %6970 = vmatpush1.bf16.msra.mxu0 %v4833
        %6971 = vmatprep.subr.bf16.mxu0 %v4842
        %6972 = vmatpush1.bf16.msra.mxu0 %v4841
        %6973 = vmatprep.mubr.bf16.mxu0 %v1364
        %6974 = vmatmul.mubr.bf16.gmra.mrb[0].mxu0 %v1363
        %v6975 = vpop.f32.mrb[0].mxu0
        %v6976 = vadd.f32 %v6933, %v6975
        %v6977 = vpop.f32.mrb[0].mxu0
        %v6978 = vadd.f32 %v6935, %v6977
        %v6979 = vpop.f32.mrb[0].mxu0
        %v6980 = vadd.f32 %v6937, %v6979
        %v6981 = vpop.f32.mrb[0].mxu0
        %v6982 = vadd.f32 %v6939, %v6981
        %6983 = vdwg.mxu0
        %6984 = vmatprep.subr.bf16.mxu0 %v4850
        %6985 = vmatpush1.bf16.msra.mxu0 %v4849
        %6986 = vmatprep.subr.bf16.mxu0 %v4858
        %6987 = vmatpush1.bf16.msra.mxu0 %v4857
        %6988 = vmatprep.subr.bf16.mxu0 %v4866
        %6989 = vmatpush1.bf16.msra.mxu0 %v4865
        %6990 = vmatprep.subr.bf16.mxu0 %v4874
        %6991 = vmatpush1.bf16.msra.mxu0 %v4873
        %6992 = vmatprep.subr.bf16.mxu0 %v4882
        %6993 = vmatpush1.bf16.msra.mxu0 %v4881
        %6994 = vmatprep.subr.bf16.mxu0 %v4890
        %6995 = vmatpush1.bf16.msra.mxu0 %v4889
        %6996 = vmatprep.subr.bf16.mxu0 %v4898
        %6997 = vmatpush1.bf16.msra.mxu0 %v4897
        %6998 = vmatprep.subr.bf16.mxu0 %v4906
        %6999 = vmatpush1.bf16.msra.mxu0 %v4905
        %7000 = vmatprep.subr.bf16.mxu0 %v4914
        %7001 = vmatpush1.bf16.msra.mxu0 %v4913
        %7002 = vmatprep.subr.bf16.mxu0 %v4922
        %7003 = vmatpush1.bf16.msra.mxu0 %v4921
        %7004 = vmatprep.subr.bf16.mxu0 %v4930
        %7005 = vmatpush1.bf16.msra.mxu0 %v4929
        %7006 = vmatprep.subr.bf16.mxu0 %v4938
        %7007 = vmatpush1.bf16.msra.mxu0 %v4937
        %7008 = vmatprep.subr.bf16.mxu0 %v4946
        %7009 = vmatpush1.bf16.msra.mxu0 %v4945
        %7010 = vmatprep.subr.bf16.mxu0 %v4954
        %7011 = vmatpush1.bf16.msra.mxu0 %v4953
        %7012 = vmatprep.subr.bf16.mxu0 %v4962
        %7013 = vmatpush1.bf16.msra.mxu0 %v4961
        %7014 = vmatprep.subr.bf16.mxu0 %v4970
        %7015 = vmatpush1.bf16.msra.mxu0 %v4969
        %7016 = vmatprep.mubr.bf16.mxu0 %v1366
        %7017 = vmatmul.mubr.bf16.gmra.mrb[0].mxu0 %v1365
        %v7018 = vpop.f32.mrb[0].mxu0
        %v7019 = vadd.f32 %v6976, %v7018
        %v7020 = vpop.f32.mrb[0].mxu0
        %v7021 = vadd.f32 %v6978, %v7020
        %v7022 = vpop.f32.mrb[0].mxu0
        %v7023 = vadd.f32 %v6980, %v7022
        %v7024 = vpop.f32.mrb[0].mxu0
        %v7025 = vadd.f32 %v6982, %v7024
        %7026 = vdwg.mxu0
        %7027 = vmatprep.subr.bf16.mxu0 %v4978
        %7028 = vmatpush1.bf16.msra.mxu0 %v4977
        %7029 = vmatprep.subr.bf16.mxu0 %v4986
        %7030 = vmatpush1.bf16.msra.mxu0 %v4985
        %7031 = vmatprep.subr.bf16.mxu0 %v4994
        %7032 = vmatpush1.bf16.msra.mxu0 %v4993
        %7033 = vmatprep.subr.bf16.mxu0 %v5002
        %7034 = vmatpush1.bf16.msra.mxu0 %v5001
        %7035 = vmatprep.subr.bf16.mxu0 %v5010
        %7036 = vmatpush1.bf16.msra.mxu0 %v5009
        %7037 = vmatprep.subr.bf16.mxu0 %v5018
        %7038 = vmatpush1.bf16.msra.mxu0 %v5017
        %7039 = vmatprep.subr.bf16.mxu0 %v5026
        %7040 = vmatpush1.bf16.msra.mxu0 %v5025
        %7041 = vmatprep.subr.bf16.mxu0 %v5034
        %7042 = vmatpush1.bf16.msra.mxu0 %v5033
        %7043 = vmatprep.subr.bf16.mxu0 %v5042
        %7044 = vmatpush1.bf16.msra.mxu0 %v5041
        %7045 = vmatprep.subr.bf16.mxu0 %v5050
        %7046 = vmatpush1.bf16.msra.mxu0 %v5049
        %7047 = vmatprep.subr.bf16.mxu0 %v5058
        %7048 = vmatpush1.bf16.msra.mxu0 %v5057
        %7049 = vmatprep.subr.bf16.mxu0 %v5066
        %7050 = vmatpush1.bf16.msra.mxu0 %v5065
        %7051 = vmatprep.subr.bf16.mxu0 %v5074
        %7052 = vmatpush1.bf16.msra.mxu0 %v5073
        %7053 = vmatprep.subr.bf16.mxu0 %v5082
        %7054 = vmatpush1.bf16.msra.mxu0 %v5081
        %7055 = vmatprep.subr.bf16.mxu0 %v5090
        %7056 = vmatpush1.bf16.msra.mxu0 %v5089
        %7057 = vmatprep.subr.bf16.mxu0 %v5098
        %7058 = vmatpush1.bf16.msra.mxu0 %v5097
        %7059 = vmatprep.mubr.bf16.mxu0 %v1368
        %7060 = vmatmul.mubr.bf16.gmra.mrb[0].mxu0 %v1367
        %v7061 = vpop.f32.mrb[0].mxu0
        %v7062 = vadd.f32 %v7019, %v7061
        %v7063 = vpop.f32.mrb[0].mxu0
        %v7064 = vadd.f32 %v7021, %v7063
        %v7065 = vpop.f32.mrb[0].mxu0
        %v7066 = vadd.f32 %v7023, %v7065
        %v7067 = vpop.f32.mrb[0].mxu0
        %v7068 = vadd.f32 %v7025, %v7067
        %7069 = vdwg.mxu0
        %7070 = vmatprep.subr.bf16.mxu0 %v5106
        %7071 = vmatpush1.bf16.msra.mxu0 %v5105
        %7072 = vmatprep.subr.bf16.mxu0 %v5114
        %7073 = vmatpush1.bf16.msra.mxu0 %v5113
        %7074 = vmatprep.subr.bf16.mxu0 %v5122
        %7075 = vmatpush1.bf16.msra.mxu0 %v5121
        %7076 = vmatprep.subr.bf16.mxu0 %v5130
        %7077 = vmatpush1.bf16.msra.mxu0 %v5129
        %7078 = vmatprep.subr.bf16.mxu0 %v5138
        %7079 = vmatpush1.bf16.msra.mxu0 %v5137
        %7080 = vmatprep.subr.bf16.mxu0 %v5146
        %7081 = vmatpush1.bf16.msra.mxu0 %v5145
        %7082 = vmatprep.subr.bf16.mxu0 %v5154
        %7083 = vmatpush1.bf16.msra.mxu0 %v5153
        %7084 = vmatprep.subr.bf16.mxu0 %v5162
        %7085 = vmatpush1.bf16.msra.mxu0 %v5161
        %7086 = vmatprep.subr.bf16.mxu0 %v5170
        %7087 = vmatpush1.bf16.msra.mxu0 %v5169
        %7088 = vmatprep.subr.bf16.mxu0 %v5178
        %7089 = vmatpush1.bf16.msra.mxu0 %v5177
        %7090 = vmatprep.subr.bf16.mxu0 %v5186
        %7091 = vmatpush1.bf16.msra.mxu0 %v5185
        %7092 = vmatprep.subr.bf16.mxu0 %v5194
        %7093 = vmatpush1.bf16.msra.mxu0 %v5193
        %7094 = vmatprep.subr.bf16.mxu0 %v5202
        %7095 = vmatpush1.bf16.msra.mxu0 %v5201
        %7096 = vmatprep.subr.bf16.mxu0 %v5210
        %7097 = vmatpush1.bf16.msra.mxu0 %v5209
        %7098 = vmatprep.subr.bf16.mxu0 %v5218
        %7099 = vmatpush1.bf16.msra.mxu0 %v5217
        %7100 = vmatprep.subr.bf16.mxu0 %v5226
        %7101 = vmatpush1.bf16.msra.mxu0 %v5225
        %7102 = vmatprep.mubr.bf16.mxu0 %v1370
        %7103 = vmatmul.mubr.bf16.gmra.mrb[0].mxu0 %v1369
        %v7104 = vpop.f32.mrb[0].mxu0
        %v7105 = vadd.f32 %v7062, %v7104
        %v7106 = vpop.f32.mrb[0].mxu0
        %v7107 = vadd.f32 %v7064, %v7106
        %v7108 = vpop.f32.mrb[0].mxu0
        %v7109 = vadd.f32 %v7066, %v7108
        %v7110 = vpop.f32.mrb[0].mxu0
        %v7111 = vadd.f32 %v7068, %v7110
        %7112 = vdwg.mxu0
        %7113 = vmatprep.subr.bf16.mxu0 %v5234
        %7114 = vmatpush1.bf16.msra.mxu0 %v5233
        %7115 = vmatprep.subr.bf16.mxu0 %v5242
        %7116 = vmatpush1.bf16.msra.mxu0 %v5241
        %7117 = vmatprep.subr.bf16.mxu0 %v5250
        %7118 = vmatpush1.bf16.msra.mxu0 %v5249
        %7119 = vmatprep.subr.bf16.mxu0 %v5258
        %7120 = vmatpush1.bf16.msra.mxu0 %v5257
        %7121 = vmatprep.subr.bf16.mxu0 %v5266
        %7122 = vmatpush1.bf16.msra.mxu0 %v5265
        %7123 = vmatprep.subr.bf16.mxu0 %v5274
        %7124 = vmatpush1.bf16.msra.mxu0 %v5273
        %7125 = vmatprep.subr.bf16.mxu0 %v5282
        %7126 = vmatpush1.bf16.msra.mxu0 %v5281
        %7127 = vmatprep.subr.bf16.mxu0 %v5290
        %7128 = vmatpush1.bf16.msra.mxu0 %v5289
        %7129 = vmatprep.subr.bf16.mxu0 %v5298
        %7130 = vmatpush1.bf16.msra.mxu0 %v5297
        %7131 = vmatprep.subr.bf16.mxu0 %v5306
        %7132 = vmatpush1.bf16.msra.mxu0 %v5305
        %7133 = vmatprep.subr.bf16.mxu0 %v5314
        %7134 = vmatpush1.bf16.msra.mxu0 %v5313
        %7135 = vmatprep.subr.bf16.mxu0 %v5322
        %7136 = vmatpush1.bf16.msra.mxu0 %v5321
        %7137 = vmatprep.subr.bf16.mxu0 %v5330
        %7138 = vmatpush1.bf16.msra.mxu0 %v5329
        %7139 = vmatprep.subr.bf16.mxu0 %v5338
        %7140 = vmatpush1.bf16.msra.mxu0 %v5337
        %7141 = vmatprep.subr.bf16.mxu0 %v5346
        %7142 = vmatpush1.bf16.msra.mxu0 %v5345
        %7143 = vmatprep.subr.bf16.mxu0 %v5354
        %7144 = vmatpush1.bf16.msra.mxu0 %v5353
        %7145 = vmatprep.mubr.bf16.mxu0 %v1372
        %7146 = vmatmul.mubr.bf16.gmra.mrb[0].mxu0 %v1371
        %v7147 = vpop.f32.mrb[0].mxu0
        %v7148 = vadd.f32 %v7105, %v7147
        %v7149 = vpop.f32.mrb[0].mxu0
        %v7150 = vadd.f32 %v7107, %v7149
        %v7151 = vpop.f32.mrb[0].mxu0
        %v7152 = vadd.f32 %v7109, %v7151
        %v7153 = vpop.f32.mrb[0].mxu0
        %v7154 = vadd.f32 %v7111, %v7153
        %7155 = vdwg.mxu0
        %7156 = vmatprep.subr.bf16.mxu0 %v5362
        %7157 = vmatpush1.bf16.msra.mxu0 %v5361
        %7158 = vmatprep.subr.bf16.mxu0 %v5370
        %7159 = vmatpush1.bf16.msra.mxu0 %v5369
        %7160 = vmatprep.subr.bf16.mxu0 %v5378
        %7161 = vmatpush1.bf16.msra.mxu0 %v5377
        %7162 = vmatprep.subr.bf16.mxu0 %v5386
        %7163 = vmatpush1.bf16.msra.mxu0 %v5385
        %7164 = vmatprep.subr.bf16.mxu0 %v5394
        %7165 = vmatpush1.bf16.msra.mxu0 %v5393
        %7166 = vmatprep.subr.bf16.mxu0 %v5402
        %7167 = vmatpush1.bf16.msra.mxu0 %v5401
        %7168 = vmatprep.subr.bf16.mxu0 %v5410
        %7169 = vmatpush1.bf16.msra.mxu0 %v5409
        %7170 = vmatprep.subr.bf16.mxu0 %v5418
        %7171 = vmatpush1.bf16.msra.mxu0 %v5417
        %7172 = vmatprep.subr.bf16.mxu0 %v5426
        %7173 = vmatpush1.bf16.msra.mxu0 %v5425
        %7174 = vmatprep.subr.bf16.mxu0 %v5434
        %7175 = vmatpush1.bf16.msra.mxu0 %v5433
        %7176 = vmatprep.subr.bf16.mxu0 %v5442
        %7177 = vmatpush1.bf16.msra.mxu0 %v5441
        %7178 = vmatprep.subr.bf16.mxu0 %v5450
        %7179 = vmatpush1.bf16.msra.mxu0 %v5449
        %7180 = vmatprep.subr.bf16.mxu0 %v5458
        %7181 = vmatpush1.bf16.msra.mxu0 %v5457
        %7182 = vmatprep.subr.bf16.mxu0 %v5466
        %7183 = vmatpush1.bf16.msra.mxu0 %v5465
        %7184 = vmatprep.subr.bf16.mxu0 %v5474
        %7185 = vmatpush1.bf16.msra.mxu0 %v5473
        %7186 = vmatprep.subr.bf16.mxu0 %v5482
        %7187 = vmatpush1.bf16.msra.mxu0 %v5481
        %7188 = vmatprep.mubr.bf16.mxu0 %v1374
        %7189 = vmatmul.mubr.bf16.gmra.mrb[0].mxu0 %v1373
        %v7190 = vpop.f32.mrb[0].mxu0
        %v7191 = vadd.f32 %v7148, %v7190
        %v7192 = vpop.f32.mrb[0].mxu0
        %v7193 = vadd.f32 %v7150, %v7192
        %v7194 = vpop.f32.mrb[0].mxu0
        %v7195 = vadd.f32 %v7152, %v7194
        %v7196 = vpop.f32.mrb[0].mxu0
        %v7197 = vadd.f32 %v7154, %v7196
        %7198 = vdwg.mxu0
        %7199 = vmatprep.subr.bf16.mxu0 %v4468
        %7200 = vmatpush1.bf16.msra.mxu0 %v4467
        %7201 = vmatprep.subr.bf16.mxu0 %v4476
        %7202 = vmatpush1.bf16.msra.mxu0 %v4475
        %7203 = vmatprep.subr.bf16.mxu0 %v4484
        %7204 = vmatpush1.bf16.msra.mxu0 %v4483
        %7205 = vmatprep.subr.bf16.mxu0 %v4492
        %7206 = vmatpush1.bf16.msra.mxu0 %v4491
        %7207 = vmatprep.subr.bf16.mxu0 %v4500
        %7208 = vmatpush1.bf16.msra.mxu0 %v4499
        %7209 = vmatprep.subr.bf16.mxu0 %v4508
        %7210 = vmatpush1.bf16.msra.mxu0 %v4507
        %7211 = vmatprep.subr.bf16.mxu0 %v4516
        %7212 = vmatpush1.bf16.msra.mxu0 %v4515
        %7213 = vmatprep.subr.bf16.mxu0 %v4524
        %7214 = vmatpush1.bf16.msra.mxu0 %v4523
        %7215 = vmatprep.subr.bf16.mxu0 %v4532
        %7216 = vmatpush1.bf16.msra.mxu0 %v4531
        %7217 = vmatprep.subr.bf16.mxu0 %v4540
        %7218 = vmatpush1.bf16.msra.mxu0 %v4539
        %7219 = vmatprep.subr.bf16.mxu0 %v4548
        %7220 = vmatpush1.bf16.msra.mxu0 %v4547
        %7221 = vmatprep.subr.bf16.mxu0 %v4556
        %7222 = vmatpush1.bf16.msra.mxu0 %v4555
        %7223 = vmatprep.subr.bf16.mxu0 %v4564
        %7224 = vmatpush1.bf16.msra.mxu0 %v4563
        %7225 = vmatprep.subr.bf16.mxu0 %v4572
        %7226 = vmatpush1.bf16.msra.mxu0 %v4571
        %7227 = vmatprep.subr.bf16.mxu0 %v4580
        %7228 = vmatpush1.bf16.msra.mxu0 %v4579
        %7229 = vmatprep.subr.bf16.mxu0 %v4588
        %7230 = vmatpush1.bf16.msra.mxu0 %v4587
        %7231 = vmatprep.mubr.bf16.mxu0 %v1360
        %7232 = vmatmul.mubr.bf16.gmra.mrb[0].mxu0 %v1359
        %v7233 = vpop.f32.mrb[0].mxu0
        %v7234 = vadd.f32 0.0, %v7233
        %v7235 = vpop.f32.mrb[0].mxu0
        %v7236 = vadd.f32 0.0, %v7235
        %v7237 = vpop.f32.mrb[0].mxu0
        %v7238 = vadd.f32 0.0, %v7237
        %v7239 = vpop.f32.mrb[0].mxu0
        %v7240 = vadd.f32 0.0, %v7239
        %7241 = vdwg.mxu0
        %7242 = vmatprep.subr.bf16.mxu0 %v4596
        %7243 = vmatpush1.bf16.msra.mxu0 %v4595
        %7244 = vmatprep.subr.bf16.mxu0 %v4604
        %7245 = vmatpush1.bf16.msra.mxu0 %v4603
        %7246 = vmatprep.subr.bf16.mxu0 %v4612
        %7247 = vmatpush1.bf16.msra.mxu0 %v4611
        %7248 = vmatprep.subr.bf16.mxu0 %v4620
        %7249 = vmatpush1.bf16.msra.mxu0 %v4619
        %7250 = vmatprep.subr.bf16.mxu0 %v4628
        %7251 = vmatpush1.bf16.msra.mxu0 %v4627
        %7252 = vmatprep.subr.bf16.mxu0 %v4636
        %7253 = vmatpush1.bf16.msra.mxu0 %v4635
        %7254 = vmatprep.subr.bf16.mxu0 %v4644
        %7255 = vmatpush1.bf16.msra.mxu0 %v4643
        %7256 = vmatprep.subr.bf16.mxu0 %v4652
        %7257 = vmatpush1.bf16.msra.mxu0 %v4651
        %7258 = vmatprep.subr.bf16.mxu0 %v4660
        %7259 = vmatpush1.bf16.msra.mxu0 %v4659
        %7260 = vmatprep.subr.bf16.mxu0 %v4668
        %7261 = vmatpush1.bf16.msra.mxu0 %v4667
        %7262 = vmatprep.subr.bf16.mxu0 %v4676
        %7263 = vmatpush1.bf16.msra.mxu0 %v4675
        %7264 = vmatprep.subr.bf16.mxu0 %v4684
        %7265 = vmatpush1.bf16.msra.mxu0 %v4683
        %7266 = vmatprep.subr.bf16.mxu0 %v4692
        %7267 = vmatpush1.bf16.msra.mxu0 %v4691
        %7268 = vmatprep.subr.bf16.mxu0 %v4700
        %7269 = vmatpush1.bf16.msra.mxu0 %v4699
        %7270 = vmatprep.subr.bf16.mxu0 %v4708
        %7271 = vmatpush1.bf16.msra.mxu0 %v4707
        %7272 = vmatprep.subr.bf16.mxu0 %v4716
        %7273 = vmatpush1.bf16.msra.mxu0 %v4715
        %7274 = vmatprep.mubr.bf16.mxu0 %v1362
        %7275 = vmatmul.mubr.bf16.gmra.mrb[0].mxu0 %v1361
        %v7276 = vpop.f32.mrb[0].mxu0
        %v7277 = vadd.f32 %v7234, %v7276
        %v7278 = vpop.f32.mrb[0].mxu0
        %v7279 = vadd.f32 %v7236, %v7278
        %v7280 = vpop.f32.mrb[0].mxu0
        %v7281 = vadd.f32 %v7238, %v7280
        %v7282 = vpop.f32.mrb[0].mxu0
        %v7283 = vadd.f32 %v7240, %v7282
        %7284 = vdwg.mxu0
        %7285 = vmatprep.subr.bf16.mxu0 %v4724
        %7286 = vmatpush1.bf16.msra.mxu0 %v4723
        %7287 = vmatprep.subr.bf16.mxu0 %v4732
        %7288 = vmatpush1.bf16.msra.mxu0 %v4731
        %7289 = vmatprep.subr.bf16.mxu0 %v4740
        %7290 = vmatpush1.bf16.msra.mxu0 %v4739
        %7291 = vmatprep.subr.bf16.mxu0 %v4748
        %7292 = vmatpush1.bf16.msra.mxu0 %v4747
        %7293 = vmatprep.subr.bf16.mxu0 %v4756
        %7294 = vmatpush1.bf16.msra.mxu0 %v4755
        %7295 = vmatprep.subr.bf16.mxu0 %v4764
        %7296 = vmatpush1.bf16.msra.mxu0 %v4763
        %7297 = vmatprep.subr.bf16.mxu0 %v4772
        %7298 = vmatpush1.bf16.msra.mxu0 %v4771
        %7299 = vmatprep.subr.bf16.mxu0 %v4780
        %7300 = vmatpush1.bf16.msra.mxu0 %v4779
        %7301 = vmatprep.subr.bf16.mxu0 %v4788
        %7302 = vmatpush1.bf16.msra.mxu0 %v4787
        %7303 = vmatprep.subr.bf16.mxu0 %v4796
        %7304 = vmatpush1.bf16.msra.mxu0 %v4795
        %7305 = vmatprep.subr.bf16.mxu0 %v4804
        %7306 = vmatpush1.bf16.msra.mxu0 %v4803
        %7307 = vmatprep.subr.bf16.mxu0 %v4812
        %7308 = vmatpush1.bf16.msra.mxu0 %v4811
        %7309 = vmatprep.subr.bf16.mxu0 %v4820
        %7310 = vmatpush1.bf16.msra.mxu0 %v4819
        %7311 = vmatprep.subr.bf16.mxu0 %v4828
        %7312 = vmatpush1.bf16.msra.mxu0 %v4827
        %7313 = vmatprep.subr.bf16.mxu0 %v4836
        %7314 = vmatpush1.bf16.msra.mxu0 %v4835
        %7315 = vmatprep.subr.bf16.mxu0 %v4844
        %7316 = vmatpush1.bf16.msra.mxu0 %v4843
        %7317 = vmatprep.mubr.bf16.mxu0 %v1364
        %7318 = vmatmul.mubr.bf16.gmra.mrb[0].mxu0 %v1363
        %v7319 = vpop.f32.mrb[0].mxu0
        %v7320 = vadd.f32 %v7277, %v7319
        %v7321 = vpop.f32.mrb[0].mxu0
        %v7322 = vadd.f32 %v7279, %v7321
        %v7323 = vpop.f32.mrb[0].mxu0
        %v7324 = vadd.f32 %v7281, %v7323
        %v7325 = vpop.f32.mrb[0].mxu0
        %v7326 = vadd.f32 %v7283, %v7325
        %7327 = vdwg.mxu0
        %7328 = vmatprep.subr.bf16.mxu0 %v4852
        %7329 = vmatpush1.bf16.msra.mxu0 %v4851
        %7330 = vmatprep.subr.bf16.mxu0 %v4860
        %7331 = vmatpush1.bf16.msra.mxu0 %v4859
        %7332 = vmatprep.subr.bf16.mxu0 %v4868
        %7333 = vmatpush1.bf16.msra.mxu0 %v4867
        %7334 = vmatprep.subr.bf16.mxu0 %v4876
        %7335 = vmatpush1.bf16.msra.mxu0 %v4875
        %7336 = vmatprep.subr.bf16.mxu0 %v4884
        %7337 = vmatpush1.bf16.msra.mxu0 %v4883
        %7338 = vmatprep.subr.bf16.mxu0 %v4892
        %7339 = vmatpush1.bf16.msra.mxu0 %v4891
        %7340 = vmatprep.subr.bf16.mxu0 %v4900
        %7341 = vmatpush1.bf16.msra.mxu0 %v4899
        %7342 = vmatprep.subr.bf16.mxu0 %v4908
        %7343 = vmatpush1.bf16.msra.mxu0 %v4907
        %7344 = vmatprep.subr.bf16.mxu0 %v4916
        %7345 = vmatpush1.bf16.msra.mxu0 %v4915
        %7346 = vmatprep.subr.bf16.mxu0 %v4924
        %7347 = vmatpush1.bf16.msra.mxu0 %v4923
        %7348 = vmatprep.subr.bf16.mxu0 %v4932
        %7349 = vmatpush1.bf16.msra.mxu0 %v4931
        %7350 = vmatprep.subr.bf16.mxu0 %v4940
        %7351 = vmatpush1.bf16.msra.mxu0 %v4939
        %7352 = vmatprep.subr.bf16.mxu0 %v4948
        %7353 = vmatpush1.bf16.msra.mxu0 %v4947
        %7354 = vmatprep.subr.bf16.mxu0 %v4956
        %7355 = vmatpush1.bf16.msra.mxu0 %v4955
        %7356 = vmatprep.subr.bf16.mxu0 %v4964
        %7357 = vmatpush1.bf16.msra.mxu0 %v4963
        %7358 = vmatprep.subr.bf16.mxu0 %v4972
        %7359 = vmatpush1.bf16.msra.mxu0 %v4971
        %7360 = vmatprep.mubr.bf16.mxu0 %v1366
        %7361 = vmatmul.mubr.bf16.gmra.mrb[0].mxu0 %v1365
        %v7362 = vpop.f32.mrb[0].mxu0
        %v7363 = vadd.f32 %v7320, %v7362
        %v7364 = vpop.f32.mrb[0].mxu0
        %v7365 = vadd.f32 %v7322, %v7364
        %v7366 = vpop.f32.mrb[0].mxu0
        %v7367 = vadd.f32 %v7324, %v7366
        %v7368 = vpop.f32.mrb[0].mxu0
        %v7369 = vadd.f32 %v7326, %v7368
        %7370 = vdwg.mxu0
        %7371 = vmatprep.subr.bf16.mxu0 %v4980
        %7372 = vmatpush1.bf16.msra.mxu0 %v4979
        %7373 = vmatprep.subr.bf16.mxu0 %v4988
        %7374 = vmatpush1.bf16.msra.mxu0 %v4987
        %7375 = vmatprep.subr.bf16.mxu0 %v4996
        %7376 = vmatpush1.bf16.msra.mxu0 %v4995
        %7377 = vmatprep.subr.bf16.mxu0 %v5004
        %7378 = vmatpush1.bf16.msra.mxu0 %v5003
        %7379 = vmatprep.subr.bf16.mxu0 %v5012
        %7380 = vmatpush1.bf16.msra.mxu0 %v5011
        %7381 = vmatprep.subr.bf16.mxu0 %v5020
        %7382 = vmatpush1.bf16.msra.mxu0 %v5019
        %7383 = vmatprep.subr.bf16.mxu0 %v5028
        %7384 = vmatpush1.bf16.msra.mxu0 %v5027
        %7385 = vmatprep.subr.bf16.mxu0 %v5036
        %7386 = vmatpush1.bf16.msra.mxu0 %v5035
        %7387 = vmatprep.subr.bf16.mxu0 %v5044
        %7388 = vmatpush1.bf16.msra.mxu0 %v5043
        %7389 = vmatprep.subr.bf16.mxu0 %v5052
        %7390 = vmatpush1.bf16.msra.mxu0 %v5051
        %7391 = vmatprep.subr.bf16.mxu0 %v5060
        %7392 = vmatpush1.bf16.msra.mxu0 %v5059
        %7393 = vmatprep.subr.bf16.mxu0 %v5068
        %7394 = vmatpush1.bf16.msra.mxu0 %v5067
        %7395 = vmatprep.subr.bf16.mxu0 %v5076
        %7396 = vmatpush1.bf16.msra.mxu0 %v5075
        %7397 = vmatprep.subr.bf16.mxu0 %v5084
        %7398 = vmatpush1.bf16.msra.mxu0 %v5083
        %7399 = vmatprep.subr.bf16.mxu0 %v5092
        %7400 = vmatpush1.bf16.msra.mxu0 %v5091
        %7401 = vmatprep.subr.bf16.mxu0 %v5100
        %7402 = vmatpush1.bf16.msra.mxu0 %v5099
        %7403 = vmatprep.mubr.bf16.mxu0 %v1368
        %7404 = vmatmul.mubr.bf16.gmra.mrb[0].mxu0 %v1367
        %v7405 = vpop.f32.mrb[0].mxu0
        %v7406 = vadd.f32 %v7363, %v7405
        %v7407 = vpop.f32.mrb[0].mxu0
        %v7408 = vadd.f32 %v7365, %v7407
        %v7409 = vpop.f32.mrb[0].mxu0
        %v7410 = vadd.f32 %v7367, %v7409
        %v7411 = vpop.f32.mrb[0].mxu0
        %v7412 = vadd.f32 %v7369, %v7411
        %7413 = vdwg.mxu0
        %7414 = vmatprep.subr.bf16.mxu0 %v5108
        %7415 = vmatpush1.bf16.msra.mxu0 %v5107
        %7416 = vmatprep.subr.bf16.mxu0 %v5116
        %7417 = vmatpush1.bf16.msra.mxu0 %v5115
        %7418 = vmatprep.subr.bf16.mxu0 %v5124
        %7419 = vmatpush1.bf16.msra.mxu0 %v5123
        %7420 = vmatprep.subr.bf16.mxu0 %v5132
        %7421 = vmatpush1.bf16.msra.mxu0 %v5131
        %7422 = vmatprep.subr.bf16.mxu0 %v5140
        %7423 = vmatpush1.bf16.msra.mxu0 %v5139
        %7424 = vmatprep.subr.bf16.mxu0 %v5148
        %7425 = vmatpush1.bf16.msra.mxu0 %v5147
        %7426 = vmatprep.subr.bf16.mxu0 %v5156
        %7427 = vmatpush1.bf16.msra.mxu0 %v5155
        %7428 = vmatprep.subr.bf16.mxu0 %v5164
        %7429 = vmatpush1.bf16.msra.mxu0 %v5163
        %7430 = vmatprep.subr.bf16.mxu0 %v5172
        %7431 = vmatpush1.bf16.msra.mxu0 %v5171
        %7432 = vmatprep.subr.bf16.mxu0 %v5180
        %7433 = vmatpush1.bf16.msra.mxu0 %v5179
        %7434 = vmatprep.subr.bf16.mxu0 %v5188
        %7435 = vmatpush1.bf16.msra.mxu0 %v5187
        %7436 = vmatprep.subr.bf16.mxu0 %v5196
        %7437 = vmatpush1.bf16.msra.mxu0 %v5195
        %7438 = vmatprep.subr.bf16.mxu0 %v5204
        %7439 = vmatpush1.bf16.msra.mxu0 %v5203
        %7440 = vmatprep.subr.bf16.mxu0 %v5212
        %7441 = vmatpush1.bf16.msra.mxu0 %v5211
        %7442 = vmatprep.subr.bf16.mxu0 %v5220
        %7443 = vmatpush1.bf16.msra.mxu0 %v5219
        %7444 = vmatprep.subr.bf16.mxu0 %v5228
        %7445 = vmatpush1.bf16.msra.mxu0 %v5227
        %7446 = vmatprep.mubr.bf16.mxu0 %v1370
        %7447 = vmatmul.mubr.bf16.gmra.mrb[0].mxu0 %v1369
        %v7448 = vpop.f32.mrb[0].mxu0
        %v7449 = vadd.f32 %v7406, %v7448
        %v7450 = vpop.f32.mrb[0].mxu0
        %v7451 = vadd.f32 %v7408, %v7450
        %v7452 = vpop.f32.mrb[0].mxu0
        %v7453 = vadd.f32 %v7410, %v7452
        %v7454 = vpop.f32.mrb[0].mxu0
        %v7455 = vadd.f32 %v7412, %v7454
        %7456 = vdwg.mxu0
        %7457 = vmatprep.subr.bf16.mxu0 %v5236
        %7458 = vmatpush1.bf16.msra.mxu0 %v5235
        %7459 = vmatprep.subr.bf16.mxu0 %v5244
        %7460 = vmatpush1.bf16.msra.mxu0 %v5243
        %7461 = vmatprep.subr.bf16.mxu0 %v5252
        %7462 = vmatpush1.bf16.msra.mxu0 %v5251
        %7463 = vmatprep.subr.bf16.mxu0 %v5260
        %7464 = vmatpush1.bf16.msra.mxu0 %v5259
        %7465 = vmatprep.subr.bf16.mxu0 %v5268
        %7466 = vmatpush1.bf16.msra.mxu0 %v5267
        %7467 = vmatprep.subr.bf16.mxu0 %v5276
        %7468 = vmatpush1.bf16.msra.mxu0 %v5275
        %7469 = vmatprep.subr.bf16.mxu0 %v5284
        %7470 = vmatpush1.bf16.msra.mxu0 %v5283
        %7471 = vmatprep.subr.bf16.mxu0 %v5292
        %7472 = vmatpush1.bf16.msra.mxu0 %v5291
        %7473 = vmatprep.subr.bf16.mxu0 %v5300
        %7474 = vmatpush1.bf16.msra.mxu0 %v5299
        %7475 = vmatprep.subr.bf16.mxu0 %v5308
        %7476 = vmatpush1.bf16.msra.mxu0 %v5307
        %7477 = vmatprep.subr.bf16.mxu0 %v5316
        %7478 = vmatpush1.bf16.msra.mxu0 %v5315
        %7479 = vmatprep.subr.bf16.mxu0 %v5324
        %7480 = vmatpush1.bf16.msra.mxu0 %v5323
        %7481 = vmatprep.subr.bf16.mxu0 %v5332
        %7482 = vmatpush1.bf16.msra.mxu0 %v5331
        %7483 = vmatprep.subr.bf16.mxu0 %v5340
        %7484 = vmatpush1.bf16.msra.mxu0 %v5339
        %7485 = vmatprep.subr.bf16.mxu0 %v5348
        %7486 = vmatpush1.bf16.msra.mxu0 %v5347
        %7487 = vmatprep.subr.bf16.mxu0 %v5356
        %7488 = vmatpush1.bf16.msra.mxu0 %v5355
        %7489 = vmatprep.mubr.bf16.mxu0 %v1372
        %7490 = vmatmul.mubr.bf16.gmra.mrb[0].mxu0 %v1371
        %v7491 = vpop.f32.mrb[0].mxu0
        %v7492 = vadd.f32 %v7449, %v7491
        %v7493 = vpop.f32.mrb[0].mxu0
        %v7494 = vadd.f32 %v7451, %v7493
        %v7495 = vpop.f32.mrb[0].mxu0
        %v7496 = vadd.f32 %v7453, %v7495
        %v7497 = vpop.f32.mrb[0].mxu0
        %v7498 = vadd.f32 %v7455, %v7497
        %7499 = vdwg.mxu0
        %7500 = vmatprep.subr.bf16.mxu0 %v5364
        %7501 = vmatpush1.bf16.msra.mxu0 %v5363
        %7502 = vmatprep.subr.bf16.mxu0 %v5372
        %7503 = vmatpush1.bf16.msra.mxu0 %v5371
        %7504 = vmatprep.subr.bf16.mxu0 %v5380
        %7505 = vmatpush1.bf16.msra.mxu0 %v5379
        %7506 = vmatprep.subr.bf16.mxu0 %v5388
        %7507 = vmatpush1.bf16.msra.mxu0 %v5387
        %7508 = vmatprep.subr.bf16.mxu0 %v5396
        %7509 = vmatpush1.bf16.msra.mxu0 %v5395
        %7510 = vmatprep.subr.bf16.mxu0 %v5404
        %7511 = vmatpush1.bf16.msra.mxu0 %v5403
        %7512 = vmatprep.subr.bf16.mxu0 %v5412
        %7513 = vmatpush1.bf16.msra.mxu0 %v5411
        %7514 = vmatprep.subr.bf16.mxu0 %v5420
        %7515 = vmatpush1.bf16.msra.mxu0 %v5419
        %7516 = vmatprep.subr.bf16.mxu0 %v5428
        %7517 = vmatpush1.bf16.msra.mxu0 %v5427
        %7518 = vmatprep.subr.bf16.mxu0 %v5436
        %7519 = vmatpush1.bf16.msra.mxu0 %v5435
        %7520 = vmatprep.subr.bf16.mxu0 %v5444
        %7521 = vmatpush1.bf16.msra.mxu0 %v5443
        %7522 = vmatprep.subr.bf16.mxu0 %v5452
        %7523 = vmatpush1.bf16.msra.mxu0 %v5451
        %7524 = vmatprep.subr.bf16.mxu0 %v5460
        %7525 = vmatpush1.bf16.msra.mxu0 %v5459
        %7526 = vmatprep.subr.bf16.mxu0 %v5468
        %7527 = vmatpush1.bf16.msra.mxu0 %v5467
        %7528 = vmatprep.subr.bf16.mxu0 %v5476
        %7529 = vmatpush1.bf16.msra.mxu0 %v5475
        %7530 = vmatprep.subr.bf16.mxu0 %v5484
        %7531 = vmatpush1.bf16.msra.mxu0 %v5483
        %7532 = vmatprep.mubr.bf16.mxu0 %v1374
        %7533 = vmatmul.mubr.bf16.gmra.mrb[0].mxu0 %v1373
        %v7534 = vpop.f32.mrb[0].mxu0
        %v7535 = vadd.f32 %v7492, %v7534
        %v7536 = vpop.f32.mrb[0].mxu0
        %v7537 = vadd.f32 %v7494, %v7536
        %v7538 = vpop.f32.mrb[0].mxu0
        %v7539 = vadd.f32 %v7496, %v7538
        %v7540 = vpop.f32.mrb[0].mxu0
        %v7541 = vadd.f32 %v7498, %v7540
        %7542 = vdwg.mxu0
        %7543 = vmatprep.subr.bf16.mxu0 %v4470
        %7544 = vmatpush1.bf16.msra.mxu0 %v4469
        %7545 = vmatprep.subr.bf16.mxu0 %v4478
        %7546 = vmatpush1.bf16.msra.mxu0 %v4477
        %7547 = vmatprep.subr.bf16.mxu0 %v4486
        %7548 = vmatpush1.bf16.msra.mxu0 %v4485
        %7549 = vmatprep.subr.bf16.mxu0 %v4494
        %7550 = vmatpush1.bf16.msra.mxu0 %v4493
        %7551 = vmatprep.subr.bf16.mxu0 %v4502
        %7552 = vmatpush1.bf16.msra.mxu0 %v4501
        %7553 = vmatprep.subr.bf16.mxu0 %v4510
        %7554 = vmatpush1.bf16.msra.mxu0 %v4509
        %7555 = vmatprep.subr.bf16.mxu0 %v4518
        %7556 = vmatpush1.bf16.msra.mxu0 %v4517
        %7557 = vmatprep.subr.bf16.mxu0 %v4526
        %7558 = vmatpush1.bf16.msra.mxu0 %v4525
        %7559 = vmatprep.subr.bf16.mxu0 %v4534
        %7560 = vmatpush1.bf16.msra.mxu0 %v4533
        %7561 = vmatprep.subr.bf16.mxu0 %v4542
        %7562 = vmatpush1.bf16.msra.mxu0 %v4541
        %7563 = vmatprep.subr.bf16.mxu0 %v4550
        %7564 = vmatpush1.bf16.msra.mxu0 %v4549
        %7565 = vmatprep.subr.bf16.mxu0 %v4558
        %7566 = vmatpush1.bf16.msra.mxu0 %v4557
        %7567 = vmatprep.subr.bf16.mxu0 %v4566
        %7568 = vmatpush1.bf16.msra.mxu0 %v4565
        %7569 = vmatprep.subr.bf16.mxu0 %v4574
        %7570 = vmatpush1.bf16.msra.mxu0 %v4573
        %7571 = vmatprep.subr.bf16.mxu0 %v4582
        %7572 = vmatpush1.bf16.msra.mxu0 %v4581
        %7573 = vmatprep.subr.bf16.mxu0 %v4590
        %7574 = vmatpush1.bf16.msra.mxu0 %v4589
        %7575 = vmatprep.mubr.bf16.mxu0 %v1360
        %7576 = vmatmul.mubr.bf16.gmra.mrb[0].mxu0 %v1359
        %v7577 = vpop.f32.mrb[0].mxu0
        %v7578 = vadd.f32 0.0, %v7577
        %v7579 = vpop.f32.mrb[0].mxu0
        %v7580 = vadd.f32 0.0, %v7579
        %v7581 = vpop.f32.mrb[0].mxu0
        %v7582 = vadd.f32 0.0, %v7581
        %v7583 = vpop.f32.mrb[0].mxu0
        %v7584 = vadd.f32 0.0, %v7583
        %7585 = vdwg.mxu0
        %7586 = vmatprep.subr.bf16.mxu0 %v4598
        %7587 = vmatpush1.bf16.msra.mxu0 %v4597
        %7588 = vmatprep.subr.bf16.mxu0 %v4606
        %7589 = vmatpush1.bf16.msra.mxu0 %v4605
        %7590 = vmatprep.subr.bf16.mxu0 %v4614
        %7591 = vmatpush1.bf16.msra.mxu0 %v4613
        %7592 = vmatprep.subr.bf16.mxu0 %v4622
        %7593 = vmatpush1.bf16.msra.mxu0 %v4621
        %7594 = vmatprep.subr.bf16.mxu0 %v4630
        %7595 = vmatpush1.bf16.msra.mxu0 %v4629
        %7596 = vmatprep.subr.bf16.mxu0 %v4638
        %7597 = vmatpush1.bf16.msra.mxu0 %v4637
        %7598 = vmatprep.subr.bf16.mxu0 %v4646
        %7599 = vmatpush1.bf16.msra.mxu0 %v4645
        %7600 = vmatprep.subr.bf16.mxu0 %v4654
        %7601 = vmatpush1.bf16.msra.mxu0 %v4653
        %7602 = vmatprep.subr.bf16.mxu0 %v4662
        %7603 = vmatpush1.bf16.msra.mxu0 %v4661
        %7604 = vmatprep.subr.bf16.mxu0 %v4670
        %7605 = vmatpush1.bf16.msra.mxu0 %v4669
        %7606 = vmatprep.subr.bf16.mxu0 %v4678
        %7607 = vmatpush1.bf16.msra.mxu0 %v4677
        %7608 = vmatprep.subr.bf16.mxu0 %v4686
        %7609 = vmatpush1.bf16.msra.mxu0 %v4685
        %7610 = vmatprep.subr.bf16.mxu0 %v4694
        %7611 = vmatpush1.bf16.msra.mxu0 %v4693
        %7612 = vmatprep.subr.bf16.mxu0 %v4702
        %7613 = vmatpush1.bf16.msra.mxu0 %v4701
        %7614 = vmatprep.subr.bf16.mxu0 %v4710
        %7615 = vmatpush1.bf16.msra.mxu0 %v4709
        %7616 = vmatprep.subr.bf16.mxu0 %v4718
        %7617 = vmatpush1.bf16.msra.mxu0 %v4717
        %7618 = vmatprep.mubr.bf16.mxu0 %v1362
        %7619 = vmatmul.mubr.bf16.gmra.mrb[0].mxu0 %v1361
        %v7620 = vpop.f32.mrb[0].mxu0
        %v7621 = vadd.f32 %v7578, %v7620
        %v7622 = vpop.f32.mrb[0].mxu0
        %v7623 = vadd.f32 %v7580, %v7622
        %v7624 = vpop.f32.mrb[0].mxu0
        %v7625 = vadd.f32 %v7582, %v7624
        %v7626 = vpop.f32.mrb[0].mxu0
        %v7627 = vadd.f32 %v7584, %v7626
        %7628 = vdwg.mxu0
        %7629 = vmatprep.subr.bf16.mxu0 %v4726
        %7630 = vmatpush1.bf16.msra.mxu0 %v4725
        %7631 = vmatprep.subr.bf16.mxu0 %v4734
        %7632 = vmatpush1.bf16.msra.mxu0 %v4733
        %7633 = vmatprep.subr.bf16.mxu0 %v4742
        %7634 = vmatpush1.bf16.msra.mxu0 %v4741
        %7635 = vmatprep.subr.bf16.mxu0 %v4750
        %7636 = vmatpush1.bf16.msra.mxu0 %v4749
        %7637 = vmatprep.subr.bf16.mxu0 %v4758
        %7638 = vmatpush1.bf16.msra.mxu0 %v4757
        %7639 = vmatprep.subr.bf16.mxu0 %v4766
        %7640 = vmatpush1.bf16.msra.mxu0 %v4765
        %7641 = vmatprep.subr.bf16.mxu0 %v4774
        %7642 = vmatpush1.bf16.msra.mxu0 %v4773
        %7643 = vmatprep.subr.bf16.mxu0 %v4782
        %7644 = vmatpush1.bf16.msra.mxu0 %v4781
        %7645 = vmatprep.subr.bf16.mxu0 %v4790
        %7646 = vmatpush1.bf16.msra.mxu0 %v4789
        %7647 = vmatprep.subr.bf16.mxu0 %v4798
        %7648 = vmatpush1.bf16.msra.mxu0 %v4797
        %7649 = vmatprep.subr.bf16.mxu0 %v4806
        %7650 = vmatpush1.bf16.msra.mxu0 %v4805
        %7651 = vmatprep.subr.bf16.mxu0 %v4814
        %7652 = vmatpush1.bf16.msra.mxu0 %v4813
        %7653 = vmatprep.subr.bf16.mxu0 %v4822
        %7654 = vmatpush1.bf16.msra.mxu0 %v4821
        %7655 = vmatprep.subr.bf16.mxu0 %v4830
        %7656 = vmatpush1.bf16.msra.mxu0 %v4829
        %7657 = vmatprep.subr.bf16.mxu0 %v4838
        %7658 = vmatpush1.bf16.msra.mxu0 %v4837
        %7659 = vmatprep.subr.bf16.mxu0 %v4846
        %7660 = vmatpush1.bf16.msra.mxu0 %v4845
        %7661 = vmatprep.mubr.bf16.mxu0 %v1364
        %7662 = vmatmul.mubr.bf16.gmra.mrb[0].mxu0 %v1363
        %v7663 = vpop.f32.mrb[0].mxu0
        %v7664 = vadd.f32 %v7621, %v7663
        %v7665 = vpop.f32.mrb[0].mxu0
        %v7666 = vadd.f32 %v7623, %v7665
        %v7667 = vpop.f32.mrb[0].mxu0
        %v7668 = vadd.f32 %v7625, %v7667
        %v7669 = vpop.f32.mrb[0].mxu0
        %v7670 = vadd.f32 %v7627, %v7669
        %7671 = vdwg.mxu0
        %7672 = vmatprep.subr.bf16.mxu0 %v4854
        %7673 = vmatpush1.bf16.msra.mxu0 %v4853
        %7674 = vmatprep.subr.bf16.mxu0 %v4862
        %7675 = vmatpush1.bf16.msra.mxu0 %v4861
        %7676 = vmatprep.subr.bf16.mxu0 %v4870
        %7677 = vmatpush1.bf16.msra.mxu0 %v4869
        %7678 = vmatprep.subr.bf16.mxu0 %v4878
        %7679 = vmatpush1.bf16.msra.mxu0 %v4877
        %7680 = vmatprep.subr.bf16.mxu0 %v4886
        %7681 = vmatpush1.bf16.msra.mxu0 %v4885
        %7682 = vmatprep.subr.bf16.mxu0 %v4894
        %7683 = vmatpush1.bf16.msra.mxu0 %v4893
        %7684 = vmatprep.subr.bf16.mxu0 %v4902
        %7685 = vmatpush1.bf16.msra.mxu0 %v4901
        %7686 = vmatprep.subr.bf16.mxu0 %v4910
        %7687 = vmatpush1.bf16.msra.mxu0 %v4909
        %7688 = vmatprep.subr.bf16.mxu0 %v4918
        %7689 = vmatpush1.bf16.msra.mxu0 %v4917
        %7690 = vmatprep.subr.bf16.mxu0 %v4926
        %7691 = vmatpush1.bf16.msra.mxu0 %v4925
        %7692 = vmatprep.subr.bf16.mxu0 %v4934
        %7693 = vmatpush1.bf16.msra.mxu0 %v4933
        %7694 = vmatprep.subr.bf16.mxu0 %v4942
        %7695 = vmatpush1.bf16.msra.mxu0 %v4941
        %7696 = vmatprep.subr.bf16.mxu0 %v4950
        %7697 = vmatpush1.bf16.msra.mxu0 %v4949
        %7698 = vmatprep.subr.bf16.mxu0 %v4958
        %7699 = vmatpush1.bf16.msra.mxu0 %v4957
        %7700 = vmatprep.subr.bf16.mxu0 %v4966
        %7701 = vmatpush1.bf16.msra.mxu0 %v4965
        %7702 = vmatprep.subr.bf16.mxu0 %v4974
        %7703 = vmatpush1.bf16.msra.mxu0 %v4973
        %7704 = vmatprep.mubr.bf16.mxu0 %v1366
        %7705 = vmatmul.mubr.bf16.gmra.mrb[0].mxu0 %v1365
        %v7706 = vpop.f32.mrb[0].mxu0
        %v7707 = vadd.f32 %v7664, %v7706
        %v7708 = vpop.f32.mrb[0].mxu0
        %v7709 = vadd.f32 %v7666, %v7708
        %v7710 = vpop.f32.mrb[0].mxu0
        %v7711 = vadd.f32 %v7668, %v7710
        %v7712 = vpop.f32.mrb[0].mxu0
        %v7713 = vadd.f32 %v7670, %v7712
        %7714 = vdwg.mxu0
        %7715 = vmatprep.subr.bf16.mxu0 %v4982
        %7716 = vmatpush1.bf16.msra.mxu0 %v4981
        %7717 = vmatprep.subr.bf16.mxu0 %v4990
        %7718 = vmatpush1.bf16.msra.mxu0 %v4989
        %7719 = vmatprep.subr.bf16.mxu0 %v4998
        %7720 = vmatpush1.bf16.msra.mxu0 %v4997
        %7721 = vmatprep.subr.bf16.mxu0 %v5006
        %7722 = vmatpush1.bf16.msra.mxu0 %v5005
        %7723 = vmatprep.subr.bf16.mxu0 %v5014
        %7724 = vmatpush1.bf16.msra.mxu0 %v5013
        %7725 = vmatprep.subr.bf16.mxu0 %v5022
        %7726 = vmatpush1.bf16.msra.mxu0 %v5021
        %7727 = vmatprep.subr.bf16.mxu0 %v5030
        %7728 = vmatpush1.bf16.msra.mxu0 %v5029
        %7729 = vmatprep.subr.bf16.mxu0 %v5038
        %7730 = vmatpush1.bf16.msra.mxu0 %v5037
        %7731 = vmatprep.subr.bf16.mxu0 %v5046
        %7732 = vmatpush1.bf16.msra.mxu0 %v5045
        %7733 = vmatprep.subr.bf16.mxu0 %v5054
        %7734 = vmatpush1.bf16.msra.mxu0 %v5053
        %7735 = vmatprep.subr.bf16.mxu0 %v5062
        %7736 = vmatpush1.bf16.msra.mxu0 %v5061
        %7737 = vmatprep.subr.bf16.mxu0 %v5070
        %7738 = vmatpush1.bf16.msra.mxu0 %v5069
        %7739 = vmatprep.subr.bf16.mxu0 %v5078
        %7740 = vmatpush1.bf16.msra.mxu0 %v5077
        %7741 = vmatprep.subr.bf16.mxu0 %v5086
        %7742 = vmatpush1.bf16.msra.mxu0 %v5085
        %7743 = vmatprep.subr.bf16.mxu0 %v5094
        %7744 = vmatpush1.bf16.msra.mxu0 %v5093
        %7745 = vmatprep.subr.bf16.mxu0 %v5102
        %7746 = vmatpush1.bf16.msra.mxu0 %v5101
        %7747 = vmatprep.mubr.bf16.mxu0 %v1368
        %7748 = vmatmul.mubr.bf16.gmra.mrb[0].mxu0 %v1367
        %v7749 = vpop.f32.mrb[0].mxu0
        %v7750 = vadd.f32 %v7707, %v7749
        %v7751 = vpop.f32.mrb[0].mxu0
        %v7752 = vadd.f32 %v7709, %v7751
        %v7753 = vpop.f32.mrb[0].mxu0
        %v7754 = vadd.f32 %v7711, %v7753
        %v7755 = vpop.f32.mrb[0].mxu0
        %v7756 = vadd.f32 %v7713, %v7755
        %7757 = vdwg.mxu0
        %7758 = vmatprep.subr.bf16.mxu0 %v5110
        %7759 = vmatpush1.bf16.msra.mxu0 %v5109
        %7760 = vmatprep.subr.bf16.mxu0 %v5118
        %7761 = vmatpush1.bf16.msra.mxu0 %v5117
        %7762 = vmatprep.subr.bf16.mxu0 %v5126
        %7763 = vmatpush1.bf16.msra.mxu0 %v5125
        %7764 = vmatprep.subr.bf16.mxu0 %v5134
        %7765 = vmatpush1.bf16.msra.mxu0 %v5133
        %7766 = vmatprep.subr.bf16.mxu0 %v5142
        %7767 = vmatpush1.bf16.msra.mxu0 %v5141
        %7768 = vmatprep.subr.bf16.mxu0 %v5150
        %7769 = vmatpush1.bf16.msra.mxu0 %v5149
        %7770 = vmatprep.subr.bf16.mxu0 %v5158
        %7771 = vmatpush1.bf16.msra.mxu0 %v5157
        %7772 = vmatprep.subr.bf16.mxu0 %v5166
        %7773 = vmatpush1.bf16.msra.mxu0 %v5165
        %7774 = vmatprep.subr.bf16.mxu0 %v5174
        %7775 = vmatpush1.bf16.msra.mxu0 %v5173
        %7776 = vmatprep.subr.bf16.mxu0 %v5182
        %7777 = vmatpush1.bf16.msra.mxu0 %v5181
        %7778 = vmatprep.subr.bf16.mxu0 %v5190
        %7779 = vmatpush1.bf16.msra.mxu0 %v5189
        %7780 = vmatprep.subr.bf16.mxu0 %v5198
        %7781 = vmatpush1.bf16.msra.mxu0 %v5197
        %7782 = vmatprep.subr.bf16.mxu0 %v5206
        %7783 = vmatpush1.bf16.msra.mxu0 %v5205
        %7784 = vmatprep.subr.bf16.mxu0 %v5214
        %7785 = vmatpush1.bf16.msra.mxu0 %v5213
        %7786 = vmatprep.subr.bf16.mxu0 %v5222
        %7787 = vmatpush1.bf16.msra.mxu0 %v5221
        %7788 = vmatprep.subr.bf16.mxu0 %v5230
        %7789 = vmatpush1.bf16.msra.mxu0 %v5229
        %7790 = vmatprep.mubr.bf16.mxu0 %v1370
        %7791 = vmatmul.mubr.bf16.gmra.mrb[0].mxu0 %v1369
        %v7792 = vpop.f32.mrb[0].mxu0
        %v7793 = vadd.f32 %v7750, %v7792
        %v7794 = vpop.f32.mrb[0].mxu0
        %v7795 = vadd.f32 %v7752, %v7794
        %v7796 = vpop.f32.mrb[0].mxu0
        %v7797 = vadd.f32 %v7754, %v7796
        %v7798 = vpop.f32.mrb[0].mxu0
        %v7799 = vadd.f32 %v7756, %v7798
        %7800 = vdwg.mxu0
        %7801 = vmatprep.subr.bf16.mxu0 %v5238
        %7802 = vmatpush1.bf16.msra.mxu0 %v5237
        %7803 = vmatprep.subr.bf16.mxu0 %v5246
        %7804 = vmatpush1.bf16.msra.mxu0 %v5245
        %7805 = vmatprep.subr.bf16.mxu0 %v5254
        %7806 = vmatpush1.bf16.msra.mxu0 %v5253
        %7807 = vmatprep.subr.bf16.mxu0 %v5262
        %7808 = vmatpush1.bf16.msra.mxu0 %v5261
        %7809 = vmatprep.subr.bf16.mxu0 %v5270
        %7810 = vmatpush1.bf16.msra.mxu0 %v5269
        %7811 = vmatprep.subr.bf16.mxu0 %v5278
        %7812 = vmatpush1.bf16.msra.mxu0 %v5277
        %7813 = vmatprep.subr.bf16.mxu0 %v5286
        %7814 = vmatpush1.bf16.msra.mxu0 %v5285
        %7815 = vmatprep.subr.bf16.mxu0 %v5294
        %7816 = vmatpush1.bf16.msra.mxu0 %v5293
        %7817 = vmatprep.subr.bf16.mxu0 %v5302
        %7818 = vmatpush1.bf16.msra.mxu0 %v5301
        %7819 = vmatprep.subr.bf16.mxu0 %v5310
        %7820 = vmatpush1.bf16.msra.mxu0 %v5309
        %7821 = vmatprep.subr.bf16.mxu0 %v5318
        %7822 = vmatpush1.bf16.msra.mxu0 %v5317
        %7823 = vmatprep.subr.bf16.mxu0 %v5326
        %7824 = vmatpush1.bf16.msra.mxu0 %v5325
        %7825 = vmatprep.subr.bf16.mxu0 %v5334
        %7826 = vmatpush1.bf16.msra.mxu0 %v5333
        %7827 = vmatprep.subr.bf16.mxu0 %v5342
        %7828 = vmatpush1.bf16.msra.mxu0 %v5341
        %7829 = vmatprep.subr.bf16.mxu0 %v5350
        %7830 = vmatpush1.bf16.msra.mxu0 %v5349
        %7831 = vmatprep.subr.bf16.mxu0 %v5358
        %7832 = vmatpush1.bf16.msra.mxu0 %v5357
        %7833 = vmatprep.mubr.bf16.mxu0 %v1372
        %7834 = vmatmul.mubr.bf16.gmra.mrb[0].mxu0 %v1371
        %v7835 = vpop.f32.mrb[0].mxu0
        %v7836 = vadd.f32 %v7793, %v7835
        %v7837 = vpop.f32.mrb[0].mxu0
        %v7838 = vadd.f32 %v7795, %v7837
        %v7839 = vpop.f32.mrb[0].mxu0
        %v7840 = vadd.f32 %v7797, %v7839
        %v7841 = vpop.f32.mrb[0].mxu0
        %v7842 = vadd.f32 %v7799, %v7841
        %7843 = vdwg.mxu0
        %7844 = vmatprep.subr.bf16.mxu0 %v5366
        %7845 = vmatpush1.bf16.msra.mxu0 %v5365
        %7846 = vmatprep.subr.bf16.mxu0 %v5374
        %7847 = vmatpush1.bf16.msra.mxu0 %v5373
        %7848 = vmatprep.subr.bf16.mxu0 %v5382
        %7849 = vmatpush1.bf16.msra.mxu0 %v5381
        %7850 = vmatprep.subr.bf16.mxu0 %v5390
        %7851 = vmatpush1.bf16.msra.mxu0 %v5389
        %7852 = vmatprep.subr.bf16.mxu0 %v5398
        %7853 = vmatpush1.bf16.msra.mxu0 %v5397
        %7854 = vmatprep.subr.bf16.mxu0 %v5406
        %7855 = vmatpush1.bf16.msra.mxu0 %v5405
        %7856 = vmatprep.subr.bf16.mxu0 %v5414
        %7857 = vmatpush1.bf16.msra.mxu0 %v5413
        %7858 = vmatprep.subr.bf16.mxu0 %v5422
        %7859 = vmatpush1.bf16.msra.mxu0 %v5421
        %7860 = vmatprep.subr.bf16.mxu0 %v5430
        %7861 = vmatpush1.bf16.msra.mxu0 %v5429
        %7862 = vmatprep.subr.bf16.mxu0 %v5438
        %7863 = vmatpush1.bf16.msra.mxu0 %v5437
        %7864 = vmatprep.subr.bf16.mxu0 %v5446
        %7865 = vmatpush1.bf16.msra.mxu0 %v5445
        %7866 = vmatprep.subr.bf16.mxu0 %v5454
        %7867 = vmatpush1.bf16.msra.mxu0 %v5453
        %7868 = vmatprep.subr.bf16.mxu0 %v5462
        %7869 = vmatpush1.bf16.msra.mxu0 %v5461
        %7870 = vmatprep.subr.bf16.mxu0 %v5470
        %7871 = vmatpush1.bf16.msra.mxu0 %v5469
        %7872 = vmatprep.subr.bf16.mxu0 %v5478
        %7873 = vmatpush1.bf16.msra.mxu0 %v5477
        %7874 = vmatprep.subr.bf16.mxu0 %v5486
        %7875 = vmatpush1.bf16.msra.mxu0 %v5485
        %7876 = vmatprep.mubr.bf16.mxu0 %v1374
        %7877 = vmatmul.mubr.bf16.gmra.mrb[0].mxu0 %v1373
        %v7878 = vpop.f32.mrb[0].mxu0
        %v7879 = vadd.f32 %v7836, %v7878
        %v7880 = vpop.f32.mrb[0].mxu0
        %v7881 = vadd.f32 %v7838, %v7880
        %v7882 = vpop.f32.mrb[0].mxu0
        %v7883 = vadd.f32 %v7840, %v7882
        %v7884 = vpop.f32.mrb[0].mxu0
        %v7885 = vadd.f32 %v7842, %v7884
        %7886 = vdwg.mxu0
        %v7887 = vadd.f32 %v255, %v6847
        %v7888 = vadd.f32 %v256, %v6849
        %v7889 = vadd.f32 %v257, %v7191
        %v7890 = vadd.f32 %v258, %v7193
        %v7891 = vadd.f32 %v259, %v7535
        %v7892 = vadd.f32 %v260, %v7537
        %v7893 = vadd.f32 %v261, %v7879
        %v7894 = vadd.f32 %v262, %v7881
        %v7895 = vadd.f32 %v263, %v6851
        %v7896 = vadd.f32 %v264, %v6853
        %v7897 = vadd.f32 %v265, %v7195
        %v7898 = vadd.f32 %v266, %v7197
        %v7899 = vadd.f32 %v267, %v7539
        %v7900 = vadd.f32 %v268, %v7541
        %v7901 = vadd.f32 %v269, %v7883
        %v7902 = vadd.f32 %v270, %v7885
        %7903 = vst [vmem:[#allocation2] sm:$0xff] %v7887
        %7904 = vst [vmem:[#allocation2 + $0x8] sm:$0xff] %v7888
        %7905 = vst [vmem:[#allocation2 + $0x10] sm:$0xff] %v7889
        %7906 = vst [vmem:[#allocation2 + $0x18] sm:$0xff] %v7890
        %7907 = vst [vmem:[#allocation2 + $0x20] sm:$0xff] %v7891
        %7908 = vst [vmem:[#allocation2 + $0x28] sm:$0xff] %v7892
        %7909 = vst [vmem:[#allocation2 + $0x30] sm:$0xff] %v7893
        %7910 = vst [vmem:[#allocation2 + $0x38] sm:$0xff] %v7894
        %7911 = vst [vmem:[#allocation2 + $0x40] sm:$0xff] %v7895
        %7912 = vst [vmem:[#allocation2 + $0x48] sm:$0xff] %v7896
        %7913 = vst [vmem:[#allocation2 + $0x50] sm:$0xff] %v7897
        %7914 = vst [vmem:[#allocation2 + $0x58] sm:$0xff] %v7898
        %7915 = vst [vmem:[#allocation2 + $0x60] sm:$0xff] %v7899
        %7916 = vst [vmem:[#allocation2 + $0x68] sm:$0xff] %v7900
        %7917 = vst [vmem:[#allocation2 + $0x70] sm:$0xff] %v7901
        %7918 = vst [vmem:[#allocation2 + $0x78] sm:$0xff] %v7902
        %p7919 = scmp.eq.s32.totalorder %s26, 1
        // Predicated region
        $region41: #{qkv_proj.1} parent=27 // pred_check
          %p7920 = pneg %p7919
        $region42: #{qkv_proj.1} parent=27 // pred_check_branch
          %7922 = sbr.rel (%p7920) target = $region44
        $region43: #{qkv_proj.1} parent=27 // pred_region
          %v7923 = vld [vmem:[#allocation2] sm:$0xff]
          %v7924 = vld [vmem:[#allocation2 + $0x8] sm:$0xff]
          %v7925 = vld [vmem:[#allocation2 + $0x10] sm:$0xff]
          %v7926 = vld [vmem:[#allocation2 + $0x18] sm:$0xff]
          %v7927 = vld [vmem:[#allocation2 + $0x20] sm:$0xff]
          %v7928 = vld [vmem:[#allocation2 + $0x28] sm:$0xff]
          %v7929 = vld [vmem:[#allocation2 + $0x30] sm:$0xff]
          %v7930 = vld [vmem:[#allocation2 + $0x38] sm:$0xff]
          %v7931 = vld [vmem:[#allocation2 + $0x40] sm:$0xff]
          %v7932 = vld [vmem:[#allocation2 + $0x48] sm:$0xff]
          %v7933 = vld [vmem:[#allocation2 + $0x50] sm:$0xff]
          %v7934 = vld [vmem:[#allocation2 + $0x58] sm:$0xff]
          %v7935 = vld [vmem:[#allocation2 + $0x60] sm:$0xff]
          %v7936 = vld [vmem:[#allocation2 + $0x68] sm:$0xff]
          %v7937 = vld [vmem:[#allocation2 + $0x70] sm:$0xff]
          %v7938 = vld [vmem:[#allocation2 + $0x78] sm:$0xff]
          %v7939 = vpack.c.bf16 %v7931, %v7923
          %v7940 = vpack.c.bf16 %v7932, %v7924
          %v7941 = vpack.c.bf16 %v7933, %v7925
          %v7942 = vpack.c.bf16 %v7934, %v7926
          %v7943 = vpack.c.bf16 %v7935, %v7927
          %v7944 = vpack.c.bf16 %v7936, %v7928
          %v7945 = vpack.c.bf16 %v7937, %v7929
          %v7946 = vpack.c.bf16 %v7938, %v7930
          %v7955 = vunpack.c.l.b16 %v7939
          %v7956 = vunpack.c.l.b16 %v7940
          %v7957 = vunpack.c.l.b16 %v7941
          %v7958 = vunpack.c.l.b16 %v7942
          %v7959 = vunpack.c.l.b16 %v7943
          %v7960 = vunpack.c.l.b16 %v7944
          %v7961 = vunpack.c.l.b16 %v7945
          %v7962 = vunpack.c.l.b16 %v7946
          %v7963 = vunpack.c.h.b16 %v7939
          %v7964 = vunpack.c.h.b16 %v7940
          %v7965 = vunpack.c.h.b16 %v7941
          %v7966 = vunpack.c.h.b16 %v7942
          %v7967 = vunpack.c.h.b16 %v7943
          %v7968 = vunpack.c.h.b16 %v7944
          %v7969 = vunpack.c.h.b16 %v7945
          %v7970 = vunpack.c.h.b16 %v7946
          %v7971 = vpack.c.b16 %v7956, %v7955
          %v7972 = vpack.c.b16 %v7958, %v7957
          %v7973 = vpack.c.b16 %v7960, %v7959
          %v7974 = vpack.c.b16 %v7962, %v7961
          %v7975 = vpack.c.b16 %v7964, %v7963
          %v7976 = vpack.c.b16 %v7966, %v7965
          %v7977 = vpack.c.b16 %v7968, %v7967
          %v7978 = vpack.c.b16 %v7970, %v7969
          %7987 = vst [vmem:[%s228] sm:$0xff] %v7971
          %7988 = vst [vmem:[%s228 + $0x8] sm:$0xff] %v7972
          %7989 = vst [vmem:[%s228 + $0x10] sm:$0xff] %v7973
          %7990 = vst [vmem:[%s228 + $0x18] sm:$0xff] %v7974
          %7991 = vst [vmem:[%s228 + $0x20] sm:$0xff] %v7975
          %7992 = vst [vmem:[%s228 + $0x28] sm:$0xff] %v7976
          %7993 = vst [vmem:[%s228 + $0x30] sm:$0xff] %v7977
          %7994 = vst [vmem:[%s228 + $0x38] sm:$0xff] %v7978
        $region44: #{qkv_proj.1} parent=27 // pred_fallthru
          _
        %s7995 = sand.u32 %s104, 1
        %s7996 = sand.u32 %s104, 1
        %s7997 = smul.addr %s7996, 64
        %s7998 = scalar_lea.vmem [#allocation7], %s7997
        // Predicated region
        $region45: #{qkv_proj.1} parent=27 // pred_check
          %p7999 = pneg %p114
        $region46: #{qkv_proj.1} parent=27 // pred_check_branch
          %8001 = sbr.rel (%p7999) target = $region48
        $region47: #{qkv_proj.1} parent=27 // pred_region
          %s8002 = smul.u32 2, %s25
          %s8003 = smul.u32 8, %s24
          %s8004 = smul.addr %s8002, 96
          %s8005 = sadd.s32 %s8003, %s8004
          %s8006 = smul.addr %s8005, 4
          %s8007 = scalar_lea.vmem %s2, %s8006
          // Predicated region
          $region49: #{qkv_proj.1} parent=47 // pred_check
            _
          $region50: #{qkv_proj.1} parent=47 // pred_check_branch
            %8009 = sbr.rel (0) target = $region52
          $region51: #{qkv_proj.1} parent=47 // pred_region
            // Predicated region
            $region53: #{qkv_proj.1} parent=51 // pred_check
              _
            $region54: #{qkv_proj.1} parent=51 // pred_check_branch
              %8011 = sbr.rel (0) target = $region56
            $region55: #{qkv_proj.1} parent=51 // pred_region
              loop: start=0, step=1, limit=1
              $region57: #{qkv_proj.1} parent=55 // loop_pre_header
                _
              $region58: #{qkv_proj.1} parent=55 // loop_header
                %s8013 = sphi 0, %s8017
                %p8014 = scmp.ge.s32.totalorder %s8013, 1
                %s8018 = sphi %s7998, %s7998
                %s8019 = sphi %s8007, %s8007
              $region59: #{qkv_proj.1} parent=55 // loop_header_branch
                %8016 = sbr.rel (%p8014) target = $region63
              $region60: #{qkv_proj.1} parent=55 // loop_body
                %v8020 = vld [vmem:[%s8018] sm:$0xff]
                %8021 = vst [vmem:[%s8019] sm:$0xff] %v8020
                %v8022 = vld [vmem:[%s8018 + $0x8] sm:$0xff]
                %8023 = vst [vmem:[%s8019 + $0x8] sm:$0xff] %v8022
                %v8024 = vld [vmem:[%s8018 + $0x10] sm:$0xff]
                %8025 = vst [vmem:[%s8019 + $0x10] sm:$0xff] %v8024
                %v8026 = vld [vmem:[%s8018 + $0x18] sm:$0xff]
                %8027 = vst [vmem:[%s8019 + $0x18] sm:$0xff] %v8026
                %v8028 = vld [vmem:[%s8018 + $0x20] sm:$0xff]
                %8029 = vst [vmem:[%s8019 + $0x180] sm:$0xff] %v8028
                %v8030 = vld [vmem:[%s8018 + $0x28] sm:$0xff]
                %8031 = vst [vmem:[%s8019 + $0x188] sm:$0xff] %v8030
                %v8032 = vld [vmem:[%s8018 + $0x30] sm:$0xff]
                %8033 = vst [vmem:[%s8019 + $0x190] sm:$0xff] %v8032
                %v8034 = vld [vmem:[%s8018 + $0x38] sm:$0xff]
                %8035 = vst [vmem:[%s8019 + $0x198] sm:$0xff] %v8034
              $region61: #{qkv_proj.1} parent=55 // loop_footer
                %s8017 = sadd.s32 1, %s8013
              $region62: #{qkv_proj.1} parent=55 // loop_footer_branch
                %8012 = sbr.rel target = $region58
              $region63: #{qkv_proj.1} parent=55 // loop_exit
                _
            $region56: #{qkv_proj.1} parent=51 // pred_fallthru
              _
            // Predicated region
            $region64: #{qkv_proj.1} parent=51 // pred_check
              _
            $region65: #{qkv_proj.1} parent=51 // pred_check_branch
              %8037 = sbr.rel target = $region67
            $region66: #{qkv_proj.1} parent=51 // pred_region
              _
            $region67: #{qkv_proj.1} parent=51 // pred_fallthru
              _
          $region52: #{qkv_proj.1} parent=47 // pred_fallthru
            _
          %8038 = vnop
        $region48: #{qkv_proj.1} parent=27 // pred_fallthru
          _
      $region28: #{qkv_proj.1} parent=5 // pred_fallthru
        _
      %p8039 = scmp.le.s32.totalorder 2, %s14
      // Predicated region
      $region68: #{qkv_proj.1} parent=5 // pred_check
        %p8040 = pneg %p8039
      $region69: #{qkv_proj.1} parent=5 // pred_check_branch
        %8042 = sbr.rel (%p8040) target = $region71
      $region70: #{qkv_proj.1} parent=5 // pred_region
        %s8043 = ssub.s32 %s14, 2
        // Predicated region
        $region72: #{qkv_proj.1} parent=70 // pred_check
          %p8044 = pneg %p120
        $region73: #{qkv_proj.1} parent=70 // pred_check_branch
          %8046 = sbr.rel (%p8044) target = $region75
        $region74: #{qkv_proj.1} parent=70 // pred_region
          %s8047 = sand.u32 %s105, 1
          %s8048 = sand.u32 %s105, 1
          %s8049 = smul.addr %s8048, 64
          %s8050 = scalar_lea.vmem [#allocation7], %s8049
        $region75: #{qkv_proj.1} parent=70 // pred_fallthru
          _
      $region71: #{qkv_proj.1} parent=5 // pred_fallthru
        _
    $region6: #{qkv_proj.1} parent=1 // loop_footer
      %s18 = sadd.s32 1, %s14
    $region7: #{qkv_proj.1} parent=1 // loop_footer_branch
      %13 = sbr.rel target = $region3
    $region8: #{qkv_proj.1} parent=1 // loop_exit
      _
    %8051 = vsyncpa [#allocation4], 1
    %s8052 = scalar_lea.sflag [#allocation4], 1
    %8053 = vsyncpa %s8052, 1
    %8054 = vsyncpa [#allocation6], 1
    %s8055 = scalar_lea.sflag [#allocation6], 1
    %8056 = vsyncpa %s8055, 1

</llo_original>
